<compile_context>
chip_gen: v6e
topology: v6e:2x2x1
jax: 0.10.0
libtpu: 0.0.40
codegen_flags: <defaults>
</compile_context>

<pallas_src>
import jax
import jax.numpy as jnp
import numpy as np
from jax import lax
from jax.experimental import pallas as pl
from jax.experimental.pallas import tpu as pltpu

LANE = 128


def _round_up(x, m):
    return (x + m - 1) // m * m


# --------------------------------------------------------------------------
# Fused kernel: conv1+bn1+relu -> conv2+bn2+residual+relu, one image per step.
#   x_ref      : (H, W, Cp)          input tile (also residual identity), f32
#   w1/w2_ref  : (3, 3*Cp, Cp)       bf16 HWIO weights, BN scale folded, the
#                                    3 kw taps packed along K (kw-major)
#   sh1/sh2_ref: (1, Cp)             folded BN shift, f32
#   out_ref    : (H, W, Cp)          f32
#   xcat_ref   : (H+2, W, 3*Cp) bf16 staging buffer: segment kw holds the
#                                    column-shifted padded activation
#                                    xcat[h', w, kw*Cp:(kw+1)*Cp] = pad(a)[h', w+kw]
# --------------------------------------------------------------------------
def _fused_basic_block_kernel(x_ref, w1_ref, sh1_ref, w2_ref, sh2_ref,
                              out_ref, xcat_ref):
    H, W, Cp = out_ref.shape
    f32 = jnp.float32
    cdt = xcat_ref.dtype

    # ---- zero ONLY the halo border (cheap; megacore-safe every step) ------
    xcat_ref[0:1, :, :] = jnp.zeros((1, W, 3 * Cp), cdt)             # top row
    xcat_ref[H + 1:H + 2, :, :] = jnp.zeros((1, W, 3 * Cp), cdt)     # bottom
    xcat_ref[:, 0:1, 0:Cp] = jnp.zeros((H + 2, 1, Cp), cdt)          # left col (kw=0)
    xcat_ref[:, W - 1:W, 2 * Cp:3 * Cp] = jnp.zeros((H + 2, 1, Cp), cdt)  # right col (kw=2)

    def stage(a_hwc):
        """Stage an (H, W, Cp) activation into the 3 column-shifted K segments."""
        v = a_hwc.astype(cdt)
        # kw = 1 (center): columns align exactly with the activation.
        xcat_ref[1:H + 1, :, Cp:2 * Cp] = v
        # kw = 0: xcat[h', w] = pad(a)[h', w]   -> activation shifted right by 1.
        xcat_ref[1:H + 1, 1:W, 0:Cp] = v[:, 0:W - 1, :]
        # kw = 2: xcat[h', w] = pad(a)[h', w+2] -> activation shifted left by 1.
        xcat_ref[1:H + 1, 0:W - 1, 2 * Cp:3 * Cp] = v[:, 1:W, :]

    def conv(wk_ref):
        # out[h, w] = sum_kh  xcat[h+kh, w, :] @ wk[kh]      (K = 3*Cp)
        acc = jnp.zeros((H * W, Cp), f32)
        for kh in range(3):
            patch = xcat_ref[kh:kh + H].reshape(H * W, 3 * Cp)   # contiguous
            acc = acc + jnp.dot(patch, wk_ref[kh],
                                preferred_element_type=f32)
        return acc

    # ---- conv1 (scale folded) + shift + ReLU ------------------------------
    xv = x_ref[...].astype(f32)                         # resident; reused below
    stage(xv)
    mid = jnp.maximum(conv(w1_ref) + sh1_ref[...], 0.0)  # (H*W, Cp) f32

    # ---- conv2 (scale folded) + shift + residual + ReLU -------------------
    stage(mid.reshape(H, W, Cp))                        # reuse the same scratch
    out = conv(w2_ref) + sh2_ref[...]
    out = jnp.maximum(out + xv.reshape(H * W, Cp), 0.0)
    out_ref[...] = out.reshape(H, W, Cp).astype(out_ref.dtype)


def _fold_bn(gamma, beta, mean, var, eps=1e-5):
    scale = gamma / jnp.sqrt(var + eps)
    shift = beta - mean * scale
    return scale, shift


def basic_block_forward(x_nchw, params):
    """x_nchw: (N, C, H, W) float32, same layout as the PyTorch module."""
    N, C, H, W = x_nchw.shape
    Cp = _round_up(max(C, 1), LANE)                    # lane-dense channels

    x = jnp.transpose(x_nchw, (0, 2, 3, 1))            # NHWC
    x = jnp.pad(x, ((0, 0), (0, 0), (0, 0), (0, Cp - C)))

    def prep(w_oihw, gamma, beta, mean, var):
        cout, cin = w_oihw.shape[0], w_oihw.shape[1]
        scale, shift = _fold_bn(gamma, beta, mean, var)
        w = jnp.transpose(w_oihw, (2, 3, 1, 0))        # OIHW -> HWIO
        w = w * scale[None, None, None, :]             # fold BN scale
        w = jnp.pad(w, ((0, 0), (0, 0), (0, Cp - cin), (0, Cp - cout)))
        # Pack the 3 kw taps along K (kw-major, then cin) -> (3, 3*Cp, Cp).
        w = w.reshape(3, 3 * Cp, Cp).astype(jnp.bfloat16)
        shift = jnp.pad(shift, (0, Cp - cout)).reshape(1, Cp).astype(jnp.float32)
        return w, shift

    w1, sh1 = prep(params["w1"], params["g1"], params["b1"],
                   params["m1"], params["v1"])
    w2, sh2 = prep(params["w2"], params["g2"], params["b2"],
                   params["m2"], params["v2"])

    # Rough per-step VMEM footprint (double-buffered weights + x/out blocks +
    # staging scratch); clamp to a safe scoped limit on all generations.
    w_bytes = 2 * (3 * 3 * Cp * Cp * 2) * 2            # two weights, 2 buffers
    io_bytes = 2 * (H * W * Cp * 4) * 2                # x + out blocks, 2 buffers
    scratch_bytes = (H + 2) * W * 3 * Cp * 2
    est = w_bytes + io_bytes + scratch_bytes
    vmem_limit = int(min(64 * 1024 * 1024, max(32 * 1024 * 1024, 2 * est)))

    out = pl.pallas_call(
        _fused_basic_block_kernel,
        out_shape=jax.ShapeDtypeStruct((N, H, W, Cp), jnp.float32),
        grid=(N,),
        in_specs=[
            pl.BlockSpec((None, H, W, Cp), lambda n: (n, 0, 0, 0)),    # x
            pl.BlockSpec((3, 3 * Cp, Cp), lambda n: (0, 0, 0)),        # w1 packed
            pl.BlockSpec((1, Cp), lambda n: (0, 0)),                   # shift1
            pl.BlockSpec((3, 3 * Cp, Cp), lambda n: (0, 0, 0)),        # w2 packed
            pl.BlockSpec((1, Cp), lambda n: (0, 0)),                   # shift2
        ],
        out_specs=pl.BlockSpec((None, H, W, Cp), lambda n: (n, 0, 0, 0)),
        scratch_shapes=[
            pltpu.VMEM((H + 2, W, 3 * Cp), jnp.bfloat16),   # column-shifted staging
        ],
        compiler_params=pltpu.CompilerParams(
            dimension_semantics=("parallel",),
            vmem_limit_bytes=vmem_limit),
    )(x, w1, sh1, w2, sh2)

    out = out[..., :C]                                  # drop channel padding
    return jnp.transpose(out, (0, 3, 1, 2))             # back to NCHW


def basic_block_reference(x_nchw, params):
    """Pure-JAX f32 reference (eval-mode BN), for validation."""
    x = jnp.transpose(x_nchw, (0, 2, 3, 1))
    w1 = jnp.transpose(params["w1"], (2, 3, 1, 0))
    w2 = jnp.transpose(params["w2"], (2, 3, 1, 0))
    s1, b1 = _fold_bn(params["g1"], params["b1"], params["m1"], params["v1"])
    s2, b2 = _fold_bn(params["g2"], params["b2"], params["m2"], params["v2"])
    dn = ("NHWC", "HWIO", "NHWC")
    out = lax.conv_general_dilated(x, w1, (1, 1), "SAME", dimension_numbers=dn)
    out = jnp.maximum(out * s1.reshape(1, 1, 1, -1) + b1.reshape(1, 1, 1, -1), 0.0)
    out = lax.conv_general_dilated(out, w2, (1, 1), "SAME", dimension_numbers=dn)
    out = out * s2.reshape(1, 1, 1, -1) + b2.reshape(1, 1, 1, -1)
    out = jnp.maximum(out + x, 0.0)
    return jnp.transpose(out, (0, 3, 1, 2))


def init_params(key, inplanes, planes):
    ks = jax.random.split(key, 10)
    return {
        # conv weights in PyTorch OIHW layout
        "w1": jax.random.normal(ks[0], (planes, inplanes, 3, 3), jnp.float32) * 0.1,
        "w2": jax.random.normal(ks[1], (planes, planes, 3, 3), jnp.float32) * 0.1,
        # bn1
        "g1": jax.random.uniform(ks[2], (planes,), jnp.float32, 0.5, 1.5),
        "b1": jax.random.normal(ks[3], (planes,), jnp.float32) * 0.1,
        "m1": jax.random.normal(ks[4], (planes,), jnp.float32) * 0.1,
        "v1": jax.random.uniform(ks[5], (planes,), jnp.float32, 0.5, 1.5),
        # bn2
        "g2": jax.random.uniform(ks[6], (planes,), jnp.float32, 0.5, 1.5),
        "b2": jax.random.normal(ks[7], (planes,), jnp.float32) * 0.1,
        "m2": jax.random.normal(ks[8], (planes,), jnp.float32) * 0.1,
        "v2": jax.random.uniform(ks[9], (planes,), jnp.float32, 0.5, 1.5),
    }


if __name__ == "__main__":
    key = jax.random.PRNGKey(0)
    k_x, k_p = jax.random.split(key)

    N, C, H, W = 2, 4, 16, 16          # inplanes = planes = 4, stride = 1
    x = jax.random.normal(k_x, (N, C, H, W), jnp.float32)
    params = init_params(k_p, inplanes=C, planes=C)

    fwd = jax.jit(basic_block_forward)
    out = jax.block_until_ready(fwd(x, params))
    ref = jax.block_until_ready(basic_block_reference(x, params))

    assert out.shape == (N, C, H, W)
    # bf16 MXU operands (f32 accumulation) -> loosened tolerance vs f32 ref.
    np.testing.assert_allclose(np.asarray(out), np.asarray(ref),
                               rtol=3e-2, atol=3e-2)
    print("KERNEL_OK")
</pallas_src>

<mosaic_0001>
module attributes {stable_mosaic.version = 11 : i64} {
  func.func @_fused_basic_block_kernel(%arg0: i32, %arg1: memref<1x16x16x128xf32, #tpu.memory_space<vmem>>, %arg2: memref<3x384x128xbf16, #tpu.memory_space<vmem>>, %arg3: memref<1x128xf32, #tpu.memory_space<vmem>>, %arg4: memref<3x384x128xbf16, #tpu.memory_space<vmem>>, %arg5: memref<1x128xf32, #tpu.memory_space<vmem>>, %arg6: memref<1x16x16x128xf32, #tpu.memory_space<vmem>>, %arg7: memref<18x16x384xbf16, #tpu.memory_space<vmem>>) attributes {dimension_semantics = [#tpu.dimension_semantics<parallel>], iteration_bounds = array<i64: 2>, scalar_prefetch = 0 : i64, scratch_operands = 1 : i64, tpu.core_type = #tpu.core_type<tc>, window_params = [{transform_indices = @transform_0, window_bounds = array<i64: 1, 16, 16, 128>}, {pipeline_mode = #tpu.pipeline_mode<synchronous>, transform_indices = @transform_1, window_bounds = array<i64: 3, 384, 128>}, {pipeline_mode = #tpu.pipeline_mode<synchronous>, transform_indices = @transform_2, window_bounds = array<i64: 1, 128>}, {pipeline_mode = #tpu.pipeline_mode<synchronous>, transform_indices = @transform_3, window_bounds = array<i64: 3, 384, 128>}, {pipeline_mode = #tpu.pipeline_mode<synchronous>, transform_indices = @transform_4, window_bounds = array<i64: 1, 128>}, {transform_indices = @transform_5, window_bounds = array<i64: 1, 16, 16, 128>}]} {
    %cst = arith.constant 0.000000e+00 : bf16
    %0 = vector.broadcast %cst : bf16 to vector<1x16x384xbf16>
    %c0 = arith.constant 0 : index
    %c0_0 = arith.constant 0 : index
    %c0_1 = arith.constant 0 : index
    %1 = vector.load %arg7[%c0, %c0_0, %c0_1] : memref<18x16x384xbf16, #tpu.memory_space<vmem>>, vector<1x16x384xbf16>
    tpu.vector_store %arg7[%c0, %c0_0, %c0_1], %0 {strides = array<i32>} : memref<18x16x384xbf16, #tpu.memory_space<vmem>>, vector<1x16x384xbf16>,
    %cst_2 = arith.constant 0.000000e+00 : bf16
    %2 = vector.broadcast %cst_2 : bf16 to vector<1x16x384xbf16>
    %c17 = arith.constant 17 : index
    %c0_3 = arith.constant 0 : index
    %c0_4 = arith.constant 0 : index
    %3 = vector.load %arg7[%c17, %c0_3, %c0_4] : memref<18x16x384xbf16, #tpu.memory_space<vmem>>, vector<1x16x384xbf16>
    tpu.vector_store %arg7[%c17, %c0_3, %c0_4], %2 {strides = array<i32>} : memref<18x16x384xbf16, #tpu.memory_space<vmem>>, vector<1x16x384xbf16>,
    %cst_5 = arith.constant 0.000000e+00 : bf16
    %4 = vector.broadcast %cst_5 : bf16 to vector<18x1x128xbf16>
    %c0_6 = arith.constant 0 : index
    %c0_7 = arith.constant 0 : index
    %c0_8 = arith.constant 0 : index
    %5 = vector.load %arg7[%c0_6, %c0_7, %c0_8] : memref<18x16x384xbf16, #tpu.memory_space<vmem>>, vector<18x1x128xbf16>
    tpu.vector_store %arg7[%c0_6, %c0_7, %c0_8], %4 {strides = array<i32>} : memref<18x16x384xbf16, #tpu.memory_space<vmem>>, vector<18x1x128xbf16>,
    %cst_9 = arith.constant 0.000000e+00 : bf16
    %6 = vector.broadcast %cst_9 : bf16 to vector<18x1x128xbf16>
    %c0_10 = arith.constant 0 : index
    %c15 = arith.constant 15 : index
    %c256 = arith.constant 256 : index
    %7 = vector.load %arg7[%c0_10, %c15, %c256] : memref<18x16x384xbf16, #tpu.memory_space<vmem>>, vector<18x1x128xbf16>
    tpu.vector_store %arg7[%c0_10, %c15, %c256], %6 {strides = array<i32>} : memref<18x16x384xbf16, #tpu.memory_space<vmem>>, vector<18x1x128xbf16>,
    %c0_11 = arith.constant 0 : index
    %c0_12 = arith.constant 0 : index
    %c0_13 = arith.constant 0 : index
    %c0_14 = arith.constant 0 : index
    %8 = vector.load %arg1[%c0_11, %c0_12, %c0_13, %c0_14] : memref<1x16x16x128xf32, #tpu.memory_space<vmem>>, vector<1x16x16x128xf32>
    %9 = vector.shape_cast %8 : vector<1x16x16x128xf32> to vector<16x16x128xf32>
    %10 = arith.truncf %9 : vector<16x16x128xf32> to vector<16x16x128xbf16>
    %c1 = arith.constant 1 : index
    %c0_15 = arith.constant 0 : index
    %c128 = arith.constant 128 : index
    %11 = vector.load %arg7[%c1, %c0_15, %c128] : memref<18x16x384xbf16, #tpu.memory_space<vmem>>, vector<16x16x128xbf16>
    tpu.vector_store %arg7[%c1, %c0_15, %c128], %10 {strides = array<i32>} : memref<18x16x384xbf16, #tpu.memory_space<vmem>>, vector<16x16x128xbf16>,
    %12 = vector.extract_strided_slice %10 {offsets = [0, 0, 0], sizes = [16, 15, 128], strides = [1, 1, 1]} : vector<16x16x128xbf16> to vector<16x15x128xbf16>
    %c1_16 = arith.constant 1 : index
    %c1_17 = arith.constant 1 : index
    %c0_18 = arith.constant 0 : index
    %13 = vector.load %arg7[%c1_16, %c1_17, %c0_18] : memref<18x16x384xbf16, #tpu.memory_space<vmem>>, vector<16x15x128xbf16>
    tpu.vector_store %arg7[%c1_16, %c1_17, %c0_18], %12 {strides = array<i32>} : memref<18x16x384xbf16, #tpu.memory_space<vmem>>, vector<16x15x128xbf16>,
    %14 = vector.extract_strided_slice %10 {offsets = [0, 1, 0], sizes = [16, 15, 128], strides = [1, 1, 1]} : vector<16x16x128xbf16> to vector<16x15x128xbf16>
    %c1_19 = arith.constant 1 : index
    %c0_20 = arith.constant 0 : index
    %c256_21 = arith.constant 256 : index
    %15 = vector.load %arg7[%c1_19, %c0_20, %c256_21] : memref<18x16x384xbf16, #tpu.memory_space<vmem>>, vector<16x15x128xbf16>
    tpu.vector_store %arg7[%c1_19, %c0_20, %c256_21], %14 {strides = array<i32>} : memref<18x16x384xbf16, #tpu.memory_space<vmem>>, vector<16x15x128xbf16>,
    %cst_22 = arith.constant 0.000000e+00 : f32
    %16 = vector.broadcast %cst_22 : f32 to vector<256x128xf32>
    %c0_23 = arith.constant 0 : index
    %c0_24 = arith.constant 0 : index
    %c0_25 = arith.constant 0 : index
    %17 = vector.load %arg7[%c0_23, %c0_24, %c0_25] : memref<18x16x384xbf16, #tpu.memory_space<vmem>>, vector<16x16x384xbf16>
    %18 = vector.shape_cast %17 : vector<16x16x384xbf16> to vector<256x384xbf16>
    %c0_26 = arith.constant 0 : index
    %c0_27 = arith.constant 0 : index
    %c0_28 = arith.constant 0 : index
    %19 = vector.load %arg2[%c0_26, %c0_27, %c0_28] : memref<3x384x128xbf16, #tpu.memory_space<vmem>>, vector<1x384x128xbf16>
    %20 = vector.shape_cast %19 : vector<1x384x128xbf16> to vector<384x128xbf16>
    %cst_29 = arith.constant dense<0.000000e+00> : vector<256x128xf32>
    %21 = tpu.matmul %18, %20, %cst_29 {dimension_numbers = #tpu.dot_dimension_numbers<[1], [0], [0], [1], [0, 0, 1, 1], [], []>} : vector<256x384xbf16>, vector<384x128xbf16>, vector<256x128xf32> -> vector<256x128xf32>
    %22 = arith.addf %16, %21 : vector<256x128xf32>
    %c1_30 = arith.constant 1 : index
    %c0_31 = arith.constant 0 : index
    %c0_32 = arith.constant 0 : index
    %23 = vector.load %arg7[%c1_30, %c0_31, %c0_32] : memref<18x16x384xbf16, #tpu.memory_space<vmem>>, vector<16x16x384xbf16>
    %24 = vector.shape_cast %23 : vector<16x16x384xbf16> to vector<256x384xbf16>
    %c1_33 = arith.constant 1 : index
    %c0_34 = arith.constant 0 : index
    %c0_35 = arith.constant 0 : index
    %25 = vector.load %arg2[%c1_33, %c0_34, %c0_35] : memref<3x384x128xbf16, #tpu.memory_space<vmem>>, vector<1x384x128xbf16>
    %26 = vector.shape_cast %25 : vector<1x384x128xbf16> to vector<384x128xbf16>
    %cst_36 = arith.constant dense<0.000000e+00> : vector<256x128xf32>
    %27 = tpu.matmul %24, %26, %cst_36 {dimension_numbers = #tpu.dot_dimension_numbers<[1], [0], [0], [1], [0, 0, 1, 1], [], []>} : vector<256x384xbf16>, vector<384x128xbf16>, vector<256x128xf32> -> vector<256x128xf32>
    %28 = arith.addf %22, %27 : vector<256x128xf32>
    %c2 = arith.constant 2 : index
    %c0_37 = arith.constant 0 : index
    %c0_38 = arith.constant 0 : index
    %29 = vector.load %arg7[%c2, %c0_37, %c0_38] : memref<18x16x384xbf16, #tpu.memory_space<vmem>>, vector<16x16x384xbf16>
    %30 = vector.shape_cast %29 : vector<16x16x384xbf16> to vector<256x384xbf16>
    %c2_39 = arith.constant 2 : index
    %c0_40 = arith.constant 0 : index
    %c0_41 = arith.constant 0 : index
    %31 = vector.load %arg2[%c2_39, %c0_40, %c0_41] : memref<3x384x128xbf16, #tpu.memory_space<vmem>>, vector<1x384x128xbf16>
    %32 = vector.shape_cast %31 : vector<1x384x128xbf16> to vector<384x128xbf16>
    %cst_42 = arith.constant dense<0.000000e+00> : vector<256x128xf32>
    %33 = tpu.matmul %30, %32, %cst_42 {dimension_numbers = #tpu.dot_dimension_numbers<[1], [0], [0], [1], [0, 0, 1, 1], [], []>} : vector<256x384xbf16>, vector<384x128xbf16>, vector<256x128xf32> -> vector<256x128xf32>
    %34 = arith.addf %28, %33 : vector<256x128xf32>
    %c0_43 = arith.constant 0 : index
    %c0_44 = arith.constant 0 : index
    %35 = vector.load %arg3[%c0_43, %c0_44] : memref<1x128xf32, #tpu.memory_space<vmem>>, vector<1x128xf32>
    %36 = vector.broadcast %35 : vector<1x128xf32> to vector<256x128xf32>
    %37 = arith.addf %34, %36 : vector<256x128xf32>
    %cst_45 = arith.constant 0.000000e+00 : f32
    %38 = vector.broadcast %cst_45 : f32 to vector<256x128xf32>
    %39 = arith.maximumf %37, %38 : vector<256x128xf32>
    %40 = vector.shape_cast %39 : vector<256x128xf32> to vector<16x16x128xf32>
    %41 = arith.truncf %40 : vector<16x16x128xf32> to vector<16x16x128xbf16>
    %c1_46 = arith.constant 1 : index
    %c0_47 = arith.constant 0 : index
    %c128_48 = arith.constant 128 : index
    %42 = vector.load %arg7[%c1_46, %c0_47, %c128_48] : memref<18x16x384xbf16, #tpu.memory_space<vmem>>, vector<16x16x128xbf16>
    tpu.vector_store %arg7[%c1_46, %c0_47, %c128_48], %41 {strides = array<i32>} : memref<18x16x384xbf16, #tpu.memory_space<vmem>>, vector<16x16x128xbf16>,
    %43 = vector.extract_strided_slice %41 {offsets = [0, 0, 0], sizes = [16, 15, 128], strides = [1, 1, 1]} : vector<16x16x128xbf16> to vector<16x15x128xbf16>
    %c1_49 = arith.constant 1 : index
    %c1_50 = arith.constant 1 : index
    %c0_51 = arith.constant 0 : index
    %44 = vector.load %arg7[%c1_49, %c1_50, %c0_51] : memref<18x16x384xbf16, #tpu.memory_space<vmem>>, vector<16x15x128xbf16>
    tpu.vector_store %arg7[%c1_49, %c1_50, %c0_51], %43 {strides = array<i32>} : memref<18x16x384xbf16, #tpu.memory_space<vmem>>, vector<16x15x128xbf16>,
    %45 = vector.extract_strided_slice %41 {offsets = [0, 1, 0], sizes = [16, 15, 128], strides = [1, 1, 1]} : vector<16x16x128xbf16> to vector<16x15x128xbf16>
    %c1_52 = arith.constant 1 : index
    %c0_53 = arith.constant 0 : index
    %c256_54 = arith.constant 256 : index
    %46 = vector.load %arg7[%c1_52, %c0_53, %c256_54] : memref<18x16x384xbf16, #tpu.memory_space<vmem>>, vector<16x15x128xbf16>
    tpu.vector_store %arg7[%c1_52, %c0_53, %c256_54], %45 {strides = array<i32>} : memref<18x16x384xbf16, #tpu.memory_space<vmem>>, vector<16x15x128xbf16>,
    %cst_55 = arith.constant 0.000000e+00 : f32
    %47 = vector.broadcast %cst_55 : f32 to vector<256x128xf32>
    %c0_56 = arith.constant 0 : index
    %c0_57 = arith.constant 0 : index
    %c0_58 = arith.constant 0 : index
    %48 = vector.load %arg7[%c0_56, %c0_57, %c0_58] : memref<18x16x384xbf16, #tpu.memory_space<vmem>>, vector<16x16x384xbf16>
    %49 = vector.shape_cast %48 : vector<16x16x384xbf16> to vector<256x384xbf16>
    %c0_59 = arith.constant 0 : index
    %c0_60 = arith.constant 0 : index
    %c0_61 = arith.constant 0 : index
    %50 = vector.load %arg4[%c0_59, %c0_60, %c0_61] : memref<3x384x128xbf16, #tpu.memory_space<vmem>>, vector<1x384x128xbf16>
    %51 = vector.shape_cast %50 : vector<1x384x128xbf16> to vector<384x128xbf16>
    %cst_62 = arith.constant dense<0.000000e+00> : vector<256x128xf32>
    %52 = tpu.matmul %49, %51, %cst_62 {dimension_numbers = #tpu.dot_dimension_numbers<[1], [0], [0], [1], [0, 0, 1, 1], [], []>} : vector<256x384xbf16>, vector<384x128xbf16>, vector<256x128xf32> -> vector<256x128xf32>
    %53 = arith.addf %47, %52 : vector<256x128xf32>
    %c1_63 = arith.constant 1 : index
    %c0_64 = arith.constant 0 : index
    %c0_65 = arith.constant 0 : index
    %54 = vector.load %arg7[%c1_63, %c0_64, %c0_65] : memref<18x16x384xbf16, #tpu.memory_space<vmem>>, vector<16x16x384xbf16>
    %55 = vector.shape_cast %54 : vector<16x16x384xbf16> to vector<256x384xbf16>
    %c1_66 = arith.constant 1 : index
    %c0_67 = arith.constant 0 : index
    %c0_68 = arith.constant 0 : index
    %56 = vector.load %arg4[%c1_66, %c0_67, %c0_68] : memref<3x384x128xbf16, #tpu.memory_space<vmem>>, vector<1x384x128xbf16>
    %57 = vector.shape_cast %56 : vector<1x384x128xbf16> to vector<384x128xbf16>
    %cst_69 = arith.constant dense<0.000000e+00> : vector<256x128xf32>
    %58 = tpu.matmul %55, %57, %cst_69 {dimension_numbers = #tpu.dot_dimension_numbers<[1], [0], [0], [1], [0, 0, 1, 1], [], []>} : vector<256x384xbf16>, vector<384x128xbf16>, vector<256x128xf32> -> vector<256x128xf32>
    %59 = arith.addf %53, %58 : vector<256x128xf32>
    %c2_70 = arith.constant 2 : index
    %c0_71 = arith.constant 0 : index
    %c0_72 = arith.constant 0 : index
    %60 = vector.load %arg7[%c2_70, %c0_71, %c0_72] : memref<18x16x384xbf16, #tpu.memory_space<vmem>>, vector<16x16x384xbf16>
    %61 = vector.shape_cast %60 : vector<16x16x384xbf16> to vector<256x384xbf16>
    %c2_73 = arith.constant 2 : index
    %c0_74 = arith.constant 0 : index
    %c0_75 = arith.constant 0 : index
    %62 = vector.load %arg4[%c2_73, %c0_74, %c0_75] : memref<3x384x128xbf16, #tpu.memory_space<vmem>>, vector<1x384x128xbf16>
    %63 = vector.shape_cast %62 : vector<1x384x128xbf16> to vector<384x128xbf16>
    %cst_76 = arith.constant dense<0.000000e+00> : vector<256x128xf32>
    %64 = tpu.matmul %61, %63, %cst_76 {dimension_numbers = #tpu.dot_dimension_numbers<[1], [0], [0], [1], [0, 0, 1, 1], [], []>} : vector<256x384xbf16>, vector<384x128xbf16>, vector<256x128xf32> -> vector<256x128xf32>
    %65 = arith.addf %59, %64 : vector<256x128xf32>
    %c0_77 = arith.constant 0 : index
    %c0_78 = arith.constant 0 : index
    %66 = vector.load %arg5[%c0_77, %c0_78] : memref<1x128xf32, #tpu.memory_space<vmem>>, vector<1x128xf32>
    %67 = vector.broadcast %66 : vector<1x128xf32> to vector<256x128xf32>
    %68 = arith.addf %65, %67 : vector<256x128xf32>
    %69 = vector.shape_cast %9 : vector<16x16x128xf32> to vector<256x128xf32>
    %70 = arith.addf %68, %69 : vector<256x128xf32>
    %cst_79 = arith.constant 0.000000e+00 : f32
    %71 = vector.broadcast %cst_79 : f32 to vector<256x128xf32>
    %72 = arith.maximumf %70, %71 : vector<256x128xf32>
    %73 = vector.shape_cast %72 : vector<256x128xf32> to vector<16x16x128xf32>
    %c0_80 = arith.constant 0 : index
    %c0_81 = arith.constant 0 : index
    %c0_82 = arith.constant 0 : index
    %c0_83 = arith.constant 0 : index
    %74 = vector.load %arg6[%c0_80, %c0_81, %c0_82, %c0_83] : memref<1x16x16x128xf32, #tpu.memory_space<vmem>>, vector<1x16x16x128xf32>
    %75 = vector.shape_cast %74 : vector<1x16x16x128xf32> to vector<16x16x128xf32>
    %76 = vector.shape_cast %73 : vector<16x16x128xf32> to vector<1x16x16x128xf32>
    tpu.vector_store %arg6[%c0_80, %c0_81, %c0_82, %c0_83], %76 {strides = array<i32>} : memref<1x16x16x128xf32, #tpu.memory_space<vmem>>, vector<1x16x16x128xf32>,
    return
  }
  func.func @transform_0(%arg0: i32) -> (i32, i32, i32, i32) {
    %c0_i32 = arith.constant 0 : i32
    %c0_i32_0 = arith.constant 0 : i32
    %c0_i32_1 = arith.constant 0 : i32
    %c0_i32_2 = arith.constant 0 : i32
    return %arg0, %c0_i32, %c0_i32_0, %c0_i32_1 : i32, i32, i32, i32
  }
  func.func @transform_1(%arg0: i32) -> (i32, i32, i32) {
    %c0_i32 = arith.constant 0 : i32
    %c0_i32_0 = arith.constant 0 : i32
    %c0_i32_1 = arith.constant 0 : i32
    %c0_i32_2 = arith.constant 0 : i32
    return %c0_i32, %c0_i32_0, %c0_i32_1 : i32, i32, i32
  }
  func.func @transform_2(%arg0: i32) -> (i32, i32) {
    %c0_i32 = arith.constant 0 : i32
    %c0_i32_0 = arith.constant 0 : i32
    %c0_i32_1 = arith.constant 0 : i32
    return %c0_i32, %c0_i32_0 : i32, i32
  }
  func.func @transform_3(%arg0: i32) -> (i32, i32, i32) {
    %c0_i32 = arith.constant 0 : i32
    %c0_i32_0 = arith.constant 0 : i32
    %c0_i32_1 = arith.constant 0 : i32
    %c0_i32_2 = arith.constant 0 : i32
    return %c0_i32, %c0_i32_0, %c0_i32_1 : i32, i32, i32
  }
  func.func @transform_4(%arg0: i32) -> (i32, i32) {
    %c0_i32 = arith.constant 0 : i32
    %c0_i32_0 = arith.constant 0 : i32
    %c0_i32_1 = arith.constant 0 : i32
    return %c0_i32, %c0_i32_0 : i32, i32
  }
  func.func @transform_5(%arg0: i32) -> (i32, i32, i32, i32) {
    %c0_i32 = arith.constant 0 : i32
    %c0_i32_0 = arith.constant 0 : i32
    %c0_i32_1 = arith.constant 0 : i32
    %c0_i32_2 = arith.constant 0 : i32
    return %arg0, %c0_i32, %c0_i32_0, %c0_i32_1 : i32, i32, i32, i32
  }
}

</mosaic_0001>

<llo_original>
// kernel: basic_block_forward.1
$region0: #{basic_block_forward.1}
  #allocation0 [shape = 'u32[]', space=smem, size = 0x4, offset = 0x4, fixed_abs, tag = 'smem constant byte address 0x4 - core index']
  #allocation1 [shape = 'u32[144,128]{1,0:T(1,128)}', space=vmem, size = 0x12000, scoped, tag = 'internal scratch']
  #allocation2 [shape = 'bf16[18,16,384]{2,1,0:T(8,128)(2,1)}', space=vmem, size = 0x36000, scoped, tag = 'scratch operand']
  %s0 = inlined_call_operand.vmem [shape: f32[2,16,16,128], index: 0, kind: input, shape index: {}]
  %s1 = inlined_call_operand.vmem [shape: bf16[3,384,128], index: 1, kind: input, shape index: {}]
  %s2 = inlined_call_operand.vmem [shape: f32[1,128], index: 2, kind: input, shape index: {}]
  %s3 = inlined_call_operand.vmem [shape: bf16[3,384,128], index: 3, kind: input, shape index: {}]
  %s4 = inlined_call_operand.vmem [shape: f32[1,128], index: 4, kind: input, shape index: {}]
  %s5 = inlined_call_operand.vmem [shape: f32[2,16,16,128], index: 5, kind: output, shape index: {}]
  %s6 = sld [smem:[#allocation0]]
  $region53: #{basic_block_forward.1} parent=0
    _
  %s8 = ssub.s32 1, %s6
  %s9 = scalar_select 0, %s8, %s6
  loop: start=0, step=1, limit=4
  $region2: #{basic_block_forward.1} parent=0 // loop_pre_header
    _
  $region3: #{basic_block_forward.1} parent=0 // loop_header
    %s11 = sphi 0, %s15
    %p12 = scmp.ge.s32.totalorder %s11, 4
    %s21 = sphi 0, %s23
    %s24 = sphi 0, %s21
    %s25 = sphi 0, %s24
    %s41 = sphi 0, %s25
    %s45 = sphi 0, %s45
    %s47 = sphi 0, %s45
    %s48 = sphi 0, %s47
    %s62 = sphi 0, %s48
    %s66 = sphi 0, %s66
    %s68 = sphi 0, %s66
    %s69 = sphi 0, %s68
    %s83 = sphi 0, %s69
    %s87 = sphi 0, %s87
    %s89 = sphi 0, %s87
    %s90 = sphi 0, %s89
    %s104 = sphi 0, %s90
    %s108 = sphi 0, %s108
    %s110 = sphi 0, %s108
    %s111 = sphi 0, %s110
    %s125 = sphi 0, %s111
    %s131 = sphi 0, %s133
    %s134 = sphi 0, %s131
    %s135 = sphi 0, %s134
    %s151 = sphi 0, %s135
  $region4: #{basic_block_forward.1} parent=0 // loop_header_branch
    %14 = sbr.rel (%p12) target = $region8
  $region5: #{basic_block_forward.1} parent=0 // loop_body
    %s16 = ssub.s32 %s11, 1
    %s17 = ssub.s32 %s11, 2
    %s18 = sadd.s32 %s11, 1
    %s19 = ssub.s32 %s11, %s18
    %p20 = scmp.eq.s32.totalorder %s19, 0
    %s22 = sadd.s32 %s21, 1
    %s23 = scalar_select %p20, %s21, %s22
    %p26 = pneg %p20
    %p27 = scmp.eq.s32.totalorder %s11, 1
    %p28 = por %p26, %p27
    %p29 = scmp.ne.s32.totalorder %s21, %s24
    %p30 = scmp.eq.s32.totalorder %s11, 0
    %p31 = por %p29, %p30
    %p32 = scmp.ne.s32.totalorder %s21, %s24
    %p33 = scmp.eq.s32.totalorder %s16, 1
    %p34 = por %p32, %p33
    %p35 = scmp.ne.s32.totalorder %s24, %s25
    %p36 = scmp.eq.s32.totalorder %s16, 0
    %p37 = por %p35, %p36
    %p38 = scmp.ne.s32.totalorder %s24, %s25
    %p39 = scmp.eq.s32.totalorder %s17, 1
    %p40 = por %p38, %p39
    %p42 = scmp.ne.s32.totalorder %s25, %s41
    %p43 = scmp.eq.s32.totalorder %s17, 0
    %p44 = por %p42, %p43
    %s46 = sadd.s32 %s45, 1
    %p49 = scmp.eq.s32.totalorder %s11, 1
    %p50 = scmp.ne.s32.totalorder %s45, %s47
    %p51 = scmp.eq.s32.totalorder %s11, 0
    %p52 = por %p50, %p51
    %p53 = scmp.ne.s32.totalorder %s45, %s47
    %p54 = scmp.eq.s32.totalorder %s16, 1
    %p55 = por %p53, %p54
    %p56 = scmp.ne.s32.totalorder %s47, %s48
    %p57 = scmp.eq.s32.totalorder %s16, 0
    %p58 = por %p56, %p57
    %p59 = scmp.ne.s32.totalorder %s47, %s48
    %p60 = scmp.eq.s32.totalorder %s17, 1
    %p61 = por %p59, %p60
    %p63 = scmp.ne.s32.totalorder %s48, %s62
    %p64 = scmp.eq.s32.totalorder %s17, 0
    %p65 = por %p63, %p64
    %s67 = sadd.s32 %s66, 1
    %p70 = scmp.eq.s32.totalorder %s11, 1
    %p71 = scmp.ne.s32.totalorder %s66, %s68
    %p72 = scmp.eq.s32.totalorder %s11, 0
    %p73 = por %p71, %p72
    %p74 = scmp.ne.s32.totalorder %s66, %s68
    %p75 = scmp.eq.s32.totalorder %s16, 1
    %p76 = por %p74, %p75
    %p77 = scmp.ne.s32.totalorder %s68, %s69
    %p78 = scmp.eq.s32.totalorder %s16, 0
    %p79 = por %p77, %p78
    %p80 = scmp.ne.s32.totalorder %s68, %s69
    %p81 = scmp.eq.s32.totalorder %s17, 1
    %p82 = por %p80, %p81
    %p84 = scmp.ne.s32.totalorder %s69, %s83
    %p85 = scmp.eq.s32.totalorder %s17, 0
    %p86 = por %p84, %p85
    %s88 = sadd.s32 %s87, 1
    %p91 = scmp.eq.s32.totalorder %s11, 1
    %p92 = scmp.ne.s32.totalorder %s87, %s89
    %p93 = scmp.eq.s32.totalorder %s11, 0
    %p94 = por %p92, %p93
    %p95 = scmp.ne.s32.totalorder %s87, %s89
    %p96 = scmp.eq.s32.totalorder %s16, 1
    %p97 = por %p95, %p96
    %p98 = scmp.ne.s32.totalorder %s89, %s90
    %p99 = scmp.eq.s32.totalorder %s16, 0
    %p100 = por %p98, %p99
    %p101 = scmp.ne.s32.totalorder %s89, %s90
    %p102 = scmp.eq.s32.totalorder %s17, 1
    %p103 = por %p101, %p102
    %p105 = scmp.ne.s32.totalorder %s90, %s104
    %p106 = scmp.eq.s32.totalorder %s17, 0
    %p107 = por %p105, %p106
    %s109 = sadd.s32 %s108, 1
    %p112 = scmp.eq.s32.totalorder %s11, 1
    %p113 = scmp.ne.s32.totalorder %s108, %s110
    %p114 = scmp.eq.s32.totalorder %s11, 0
    %p115 = por %p113, %p114
    %p116 = scmp.ne.s32.totalorder %s108, %s110
    %p117 = scmp.eq.s32.totalorder %s16, 1
    %p118 = por %p116, %p117
    %p119 = scmp.ne.s32.totalorder %s110, %s111
    %p120 = scmp.eq.s32.totalorder %s16, 0
    %p121 = por %p119, %p120
    %p122 = scmp.ne.s32.totalorder %s110, %s111
    %p123 = scmp.eq.s32.totalorder %s17, 1
    %p124 = por %p122, %p123
    %p126 = scmp.ne.s32.totalorder %s111, %s125
    %p127 = scmp.eq.s32.totalorder %s17, 0
    %p128 = por %p126, %p127
    %s129 = ssub.s32 %s11, %s18
    %p130 = scmp.eq.s32.totalorder %s129, 0
    %s132 = sadd.s32 %s131, 1
    %s133 = scalar_select %p130, %s131, %s132
    %p136 = pneg %p130
    %p137 = scmp.eq.s32.totalorder %s11, 1
    %p138 = por %p136, %p137
    %p139 = scmp.ne.s32.totalorder %s131, %s134
    %p140 = scmp.eq.s32.totalorder %s11, 0
    %p141 = por %p139, %p140
    %p142 = scmp.ne.s32.totalorder %s131, %s134
    %p143 = scmp.eq.s32.totalorder %s16, 1
    %p144 = por %p142, %p143
    %p145 = scmp.ne.s32.totalorder %s134, %s135
    %p146 = scmp.eq.s32.totalorder %s16, 0
    %p147 = por %p145, %p146
    %p148 = scmp.ne.s32.totalorder %s134, %s135
    %p149 = scmp.eq.s32.totalorder %s17, 1
    %p150 = por %p148, %p149
    %p152 = scmp.ne.s32.totalorder %s135, %s151
    %p153 = scmp.eq.s32.totalorder %s17, 0
    %p154 = por %p152, %p153
    %p155 = scmp.le.s32.totalorder 1, %s11
    %p156 = scmp.lt.s32.totalorder %s11, 3
    %p157 = pnand %p155, %p156
    %p158 = pneg %p157
    // Predicated region
    $region9: #{basic_block_forward.1} parent=5 // pred_check
      _
    $region10: #{basic_block_forward.1} parent=5 // pred_check_branch
      %160 = sbr.rel (%p157) target = $region12
    $region11: #{basic_block_forward.1} parent=5 // pred_region
      %s161 = ssub.s32 %s11, 1
      // Predicated region
      $region13: #{basic_block_forward.1} parent=11 // pred_check
        %p162 = pneg %p58
      $region14: #{basic_block_forward.1} parent=11 // pred_check_branch
        %164 = sbr.rel (%p162) target = $region16
      $region15: #{basic_block_forward.1} parent=11 // pred_region
        _
      $region16: #{basic_block_forward.1} parent=11 // pred_fallthru
        _
      // Predicated region
      $region17: #{basic_block_forward.1} parent=11 // pred_check
        %p165 = pneg %p79
      $region18: #{basic_block_forward.1} parent=11 // pred_check_branch
        %167 = sbr.rel (%p165) target = $region20
      $region19: #{basic_block_forward.1} parent=11 // pred_region
        _
      $region20: #{basic_block_forward.1} parent=11 // pred_fallthru
        _
      // Predicated region
      $region21: #{basic_block_forward.1} parent=11 // pred_check
        %p168 = pneg %p100
      $region22: #{basic_block_forward.1} parent=11 // pred_check_branch
        %170 = sbr.rel (%p168) target = $region24
      $region23: #{basic_block_forward.1} parent=11 // pred_region
        _
      $region24: #{basic_block_forward.1} parent=11 // pred_fallthru
        _
      // Predicated region
      $region25: #{basic_block_forward.1} parent=11 // pred_check
        %p171 = pneg %p121
      $region26: #{basic_block_forward.1} parent=11 // pred_check_branch
        %173 = sbr.rel (%p171) target = $region28
      $region27: #{basic_block_forward.1} parent=11 // pred_region
        _
      $region28: #{basic_block_forward.1} parent=11 // pred_fallthru
        _
    $region12: #{basic_block_forward.1} parent=5 // pred_fallthru
      _
    %p174 = scmp.lt.s32.totalorder %s11, 2
    // Predicated region
    $region29: #{basic_block_forward.1} parent=5 // pred_check
      %p175 = pneg %p174
    $region30: #{basic_block_forward.1} parent=5 // pred_check_branch
      %177 = sbr.rel (%p175) target = $region32
    $region31: #{basic_block_forward.1} parent=5 // pred_region
      // Predicated region
      $region33: #{basic_block_forward.1} parent=31 // pred_check
        %p178 = pneg %p31
      $region34: #{basic_block_forward.1} parent=31 // pred_check_branch
        %180 = sbr.rel (%p178) target = $region36
      $region35: #{basic_block_forward.1} parent=31 // pred_region
        %p181 = scmp.lt.s32.totalorder %s11, 1
        %s182 = scalar_select %p181, %s11, 1
        %s183 = smul.addr %s182, 32
        %s184 = smul.addr %s183, 8
        %s185 = scalar_lea.vmem %s0, %s184
      $region36: #{basic_block_forward.1} parent=31 // pred_fallthru
        _
    $region32: #{basic_block_forward.1} parent=5 // pred_fallthru
      _
    %p186 = scmp.le.s32.totalorder 1, %s11
    %p187 = scmp.lt.s32.totalorder %s11, 3
    %p188 = pnand %p186, %p187
    %p189 = pneg %p188
    // Predicated region
    $region37: #{basic_block_forward.1} parent=5 // pred_check
      _
    $region38: #{basic_block_forward.1} parent=5 // pred_check_branch
      %191 = sbr.rel (%p188) target = $region40
    $region39: #{basic_block_forward.1} parent=5 // pred_region
      %s192 = ssub.s32 %s11, 1
      %p193 = scmp.lt.s32.totalorder %s16, 1
      %s194 = scalar_select %p193, %s16, 1
      %s195 = smul.addr %s194, 32
      %s196 = smul.addr %s195, 8
      %s197 = scalar_lea.vmem %s0, %s196
      %p198 = pneg %p37
      %p199 = pneg %p34
      %p200 = pneg %p58
      %p201 = pneg %p55
      %p202 = pneg %p79
      %p203 = pneg %p76
      %p204 = pneg %p100
      %p205 = pneg %p97
      %p206 = pneg %p121
      %p207 = pneg %p118
      %p208 = pneg %p147
      %p209 = pneg %p144
      %p210 = scmp.lt.s32.totalorder %s16, 1
      %s211 = scalar_select %p210, %s16, 1
      %s212 = smul.addr %s211, 32
      %s213 = smul.addr %s212, 8
      %s214 = scalar_lea.vmem %s5, %s213
      %p215 = scmp.lt.s32.totalorder %s16, 1
      %s216 = scalar_select %p215, %s16, 1
      %s217 = smul.addr %s216, 32
      %s218 = smul.addr %s217, 8
      %s219 = scalar_lea.vmem %s0, %s218
      %p220 = scmp.lt.s32.totalorder %s16, 1
      %s221 = scalar_select %p220, %s16, 1
      %s222 = smul.addr %s221, 32
      %s223 = smul.addr %s222, 8
      %s224 = scalar_lea.vmem %s5, %s223
      %226 = vst [vmem:[#allocation2] sm:$0xff] 0
      %227 = vst [vmem:[#allocation2 + $0x8] sm:$0xf] 0
      %228 = vst [vmem:[#allocation2 + $0xc] sm:$0xff] 0
      %229 = vst [vmem:[#allocation2 + $0x14] sm:$0xf] 0
      %s230 = scalar_lea.vmem [#allocation2], 408
      %231 = vst [vmem:[%s230] sm:$0xff] 0
      %232 = vst [vmem:[%s230 + $0x8] sm:$0xf] 0
      %233 = vst [vmem:[%s230 + $0xc] sm:$0xff] 0
      %234 = vst [vmem:[%s230 + $0x14] sm:$0xf] 0
      %vm235 = vcmask 1040384
      %vm236 = vsmask.f32 256
      %vm237 = vmand %vm235, %vm236
      %v238 = vld [vmem:[#allocation2] sm:$0x1]
      %v239 = vsel %vm237, 0, %v238
      %240 = vst [vmem:[#allocation2] sm:$0x1] %v239
      %v241 = vld [vmem:[#allocation2 + $0x18] sm:$0x1]
      %v242 = vsel %vm237, 0, %v241
      %243 = vst [vmem:[#allocation2 + $0x18] sm:$0x1] %v242
      %v244 = vld [vmem:[#allocation2 + $0x30] sm:$0x1]
      %v245 = vsel %vm237, 0, %v244
      %246 = vst [vmem:[#allocation2 + $0x30] sm:$0x1] %v245
      %v247 = vld [vmem:[#allocation2 + $0x48] sm:$0x1]
      %v248 = vsel %vm237, 0, %v247
      %249 = vst [vmem:[#allocation2 + $0x48] sm:$0x1] %v248
      %v250 = vld [vmem:[#allocation2 + $0x60] sm:$0x1]
      %v251 = vsel %vm237, 0, %v250
      %252 = vst [vmem:[#allocation2 + $0x60] sm:$0x1] %v251
      %v253 = vld [vmem:[#allocation2 + $0x78] sm:$0x1]
      %v254 = vsel %vm237, 0, %v253
      %255 = vst [vmem:[#allocation2 + $0x78] sm:$0x1] %v254
      %v256 = vld [vmem:[#allocation2 + $0x90] sm:$0x1]
      %v257 = vsel %vm237, 0, %v256
      %258 = vst [vmem:[#allocation2 + $0x90] sm:$0x1] %v257
      %v259 = vld [vmem:[#allocation2 + $0xa8] sm:$0x1]
      %v260 = vsel %vm237, 0, %v259
      %261 = vst [vmem:[#allocation2 + $0xa8] sm:$0x1] %v260
      %v262 = vld [vmem:[#allocation2 + $0xc0] sm:$0x1]
      %v263 = vsel %vm237, 0, %v262
      %264 = vst [vmem:[#allocation2 + $0xc0] sm:$0x1] %v263
      %v265 = vld [vmem:[#allocation2 + $0xd8] sm:$0x1]
      %v266 = vsel %vm237, 0, %v265
      %267 = vst [vmem:[#allocation2 + $0xd8] sm:$0x1] %v266
      %v268 = vld [vmem:[#allocation2 + $0xf0] sm:$0x1]
      %v269 = vsel %vm237, 0, %v268
      %270 = vst [vmem:[#allocation2 + $0xf0] sm:$0x1] %v269
      %v271 = vld [vmem:[#allocation2 + $0x108] sm:$0x1]
      %v272 = vsel %vm237, 0, %v271
      %273 = vst [vmem:[#allocation2 + $0x108] sm:$0x1] %v272
      %v274 = vld [vmem:[#allocation2 + $0x120] sm:$0x1]
      %v275 = vsel %vm237, 0, %v274
      %276 = vst [vmem:[#allocation2 + $0x120] sm:$0x1] %v275
      %v277 = vld [vmem:[#allocation2 + $0x138] sm:$0x1]
      %v278 = vsel %vm237, 0, %v277
      %279 = vst [vmem:[#allocation2 + $0x138] sm:$0x1] %v278
      %v280 = vld [vmem:[#allocation2 + $0x150] sm:$0x1]
      %v281 = vsel %vm237, 0, %v280
      %282 = vst [vmem:[#allocation2 + $0x150] sm:$0x1] %v281
      %v283 = vld [vmem:[#allocation2 + $0x168] sm:$0x1]
      %v284 = vsel %vm237, 0, %v283
      %285 = vst [vmem:[#allocation2 + $0x168] sm:$0x1] %v284
      %v286 = vld [vmem:[#allocation2 + $0x180] sm:$0x1]
      %v287 = vsel %vm237, 0, %v286
      %288 = vst [vmem:[#allocation2 + $0x180] sm:$0x1] %v287
      %v289 = vld [vmem:[#allocation2 + $0x198] sm:$0x1]
      %v290 = vsel %vm237, 0, %v289
      %291 = vst [vmem:[#allocation2 + $0x198] sm:$0x1] %v290
      %vm292 = vcmask 1043459
      %vm293 = vsmask.f32 7950
      %vm294 = vmand %vm292, %vm293
      %v295 = vld [vmem:[#allocation2 + $0x14] sm:$0x8]
      %v296 = vsel %vm294, 0, %v295
      %297 = vst [vmem:[#allocation2 + $0x14] sm:$0x8] %v296
      %v298 = vld [vmem:[#allocation2 + $0x2c] sm:$0x8]
      %v299 = vsel %vm294, 0, %v298
      %300 = vst [vmem:[#allocation2 + $0x2c] sm:$0x8] %v299
      %v301 = vld [vmem:[#allocation2 + $0x44] sm:$0x8]
      %v302 = vsel %vm294, 0, %v301
      %303 = vst [vmem:[#allocation2 + $0x44] sm:$0x8] %v302
      %v304 = vld [vmem:[#allocation2 + $0x5c] sm:$0x8]
      %v305 = vsel %vm294, 0, %v304
      %306 = vst [vmem:[#allocation2 + $0x5c] sm:$0x8] %v305
      %v307 = vld [vmem:[#allocation2 + $0x74] sm:$0x8]
      %v308 = vsel %vm294, 0, %v307
      %309 = vst [vmem:[#allocation2 + $0x74] sm:$0x8] %v308
      %v310 = vld [vmem:[#allocation2 + $0x8c] sm:$0x8]
      %v311 = vsel %vm294, 0, %v310
      %312 = vst [vmem:[#allocation2 + $0x8c] sm:$0x8] %v311
      %v313 = vld [vmem:[#allocation2 + $0xa4] sm:$0x8]
      %v314 = vsel %vm294, 0, %v313
      %315 = vst [vmem:[#allocation2 + $0xa4] sm:$0x8] %v314
      %v316 = vld [vmem:[#allocation2 + $0xbc] sm:$0x8]
      %v317 = vsel %vm294, 0, %v316
      %318 = vst [vmem:[#allocation2 + $0xbc] sm:$0x8] %v317
      %v319 = vld [vmem:[#allocation2 + $0xd4] sm:$0x8]
      %v320 = vsel %vm294, 0, %v319
      %321 = vst [vmem:[#allocation2 + $0xd4] sm:$0x8] %v320
      %v322 = vld [vmem:[#allocation2 + $0xec] sm:$0x8]
      %v323 = vsel %vm294, 0, %v322
      %324 = vst [vmem:[#allocation2 + $0xec] sm:$0x8] %v323
      %v325 = vld [vmem:[#allocation2 + $0x104] sm:$0x8]
      %v326 = vsel %vm294, 0, %v325
      %327 = vst [vmem:[#allocation2 + $0x104] sm:$0x8] %v326
      %v328 = vld [vmem:[#allocation2 + $0x11c] sm:$0x8]
      %v329 = vsel %vm294, 0, %v328
      %330 = vst [vmem:[#allocation2 + $0x11c] sm:$0x8] %v329
      %v331 = vld [vmem:[#allocation2 + $0x134] sm:$0x8]
      %v332 = vsel %vm294, 0, %v331
      %333 = vst [vmem:[#allocation2 + $0x134] sm:$0x8] %v332
      %v334 = vld [vmem:[#allocation2 + $0x14c] sm:$0x8]
      %v335 = vsel %vm294, 0, %v334
      %336 = vst [vmem:[#allocation2 + $0x14c] sm:$0x8] %v335
      %v337 = vld [vmem:[#allocation2 + $0x164] sm:$0x8]
      %v338 = vsel %vm294, 0, %v337
      %339 = vst [vmem:[#allocation2 + $0x164] sm:$0x8] %v338
      %v340 = vld [vmem:[#allocation2 + $0x17c] sm:$0x8]
      %v341 = vsel %vm294, 0, %v340
      %342 = vst [vmem:[#allocation2 + $0x17c] sm:$0x8] %v341
      %v343 = vld [vmem:[#allocation2 + $0x194] sm:$0x8]
      %v344 = vsel %vm294, 0, %v343
      %345 = vst [vmem:[#allocation2 + $0x194] sm:$0x8] %v344
      %v346 = vld [vmem:[#allocation2 + $0x1ac] sm:$0x8]
      %v347 = vsel %vm294, 0, %v346
      %348 = vst [vmem:[#allocation2 + $0x1ac] sm:$0x8] %v347
      %v349 = vld [vmem:[%s219] sm:$0xff]
      %v350 = vld [vmem:[%s219 + $0x8] sm:$0xff]
      %v351 = vld [vmem:[%s219 + $0x10] sm:$0xff]
      %v352 = vld [vmem:[%s219 + $0x18] sm:$0xff]
      %v353 = vld [vmem:[%s219 + $0x20] sm:$0xff]
      %v354 = vld [vmem:[%s219 + $0x28] sm:$0xff]
      %v355 = vld [vmem:[%s219 + $0x30] sm:$0xff]
      %v356 = vld [vmem:[%s219 + $0x38] sm:$0xff]
      %v357 = vld [vmem:[%s219 + $0x40] sm:$0xff]
      %v358 = vld [vmem:[%s219 + $0x48] sm:$0xff]
      %v359 = vld [vmem:[%s219 + $0x50] sm:$0xff]
      %v360 = vld [vmem:[%s219 + $0x58] sm:$0xff]
      %v361 = vld [vmem:[%s219 + $0x60] sm:$0xff]
      %v362 = vld [vmem:[%s219 + $0x68] sm:$0xff]
      %v363 = vld [vmem:[%s219 + $0x70] sm:$0xff]
      %v364 = vld [vmem:[%s219 + $0x78] sm:$0xff]
      %v365 = vld [vmem:[%s219 + $0x80] sm:$0xff]
      %v366 = vld [vmem:[%s219 + $0x88] sm:$0xff]
      %v367 = vld [vmem:[%s219 + $0x90] sm:$0xff]
      %v368 = vld [vmem:[%s219 + $0x98] sm:$0xff]
      %v369 = vld [vmem:[%s219 + $0xa0] sm:$0xff]
      %v370 = vld [vmem:[%s219 + $0xa8] sm:$0xff]
      %v371 = vld [vmem:[%s219 + $0xb0] sm:$0xff]
      %v372 = vld [vmem:[%s219 + $0xb8] sm:$0xff]
      %v373 = vld [vmem:[%s219 + $0xc0] sm:$0xff]
      %v374 = vld [vmem:[%s219 + $0xc8] sm:$0xff]
      %v375 = vld [vmem:[%s219 + $0xd0] sm:$0xff]
      %v376 = vld [vmem:[%s219 + $0xd8] sm:$0xff]
      %v377 = vld [vmem:[%s219 + $0xe0] sm:$0xff]
      %v378 = vld [vmem:[%s219 + $0xe8] sm:$0xff]
      %v379 = vld [vmem:[%s219 + $0xf0] sm:$0xff]
      %v380 = vld [vmem:[%s219 + $0xf8] sm:$0xff]
      %v381 = vpack.c.bf16 %v350, %v349
      %v382 = vpack.c.bf16 %v352, %v351
      %v383 = vpack.c.bf16 %v354, %v353
      %v384 = vpack.c.bf16 %v356, %v355
      %v385 = vpack.c.bf16 %v358, %v357
      %v386 = vpack.c.bf16 %v360, %v359
      %v387 = vpack.c.bf16 %v362, %v361
      %v388 = vpack.c.bf16 %v364, %v363
      %v389 = vpack.c.bf16 %v366, %v365
      %v390 = vpack.c.bf16 %v368, %v367
      %v391 = vpack.c.bf16 %v370, %v369
      %v392 = vpack.c.bf16 %v372, %v371
      %v393 = vpack.c.bf16 %v374, %v373
      %v394 = vpack.c.bf16 %v376, %v375
      %v395 = vpack.c.bf16 %v378, %v377
      %v396 = vpack.c.bf16 %v380, %v379
      %v413 = vunpack.c.l.b16 %v381
      %v414 = vunpack.c.h.b16 %v381
      %v415 = vunpack.c.l.b16 %v382
      %v416 = vunpack.c.h.b16 %v382
      %v417 = vunpack.c.l.b16 %v383
      %v418 = vunpack.c.h.b16 %v383
      %v419 = vunpack.c.l.b16 %v384
      %v420 = vunpack.c.h.b16 %v384
      %v421 = vunpack.c.l.b16 %v385
      %v422 = vunpack.c.h.b16 %v385
      %v423 = vunpack.c.l.b16 %v386
      %v424 = vunpack.c.h.b16 %v386
      %v425 = vunpack.c.l.b16 %v387
      %v426 = vunpack.c.h.b16 %v387
      %v427 = vunpack.c.l.b16 %v388
      %v428 = vunpack.c.h.b16 %v388
      %v429 = vunpack.c.l.b16 %v389
      %v430 = vunpack.c.h.b16 %v389
      %v431 = vunpack.c.l.b16 %v390
      %v432 = vunpack.c.h.b16 %v390
      %v433 = vunpack.c.l.b16 %v391
      %v434 = vunpack.c.h.b16 %v391
      %v435 = vunpack.c.l.b16 %v392
      %v436 = vunpack.c.h.b16 %v392
      %v437 = vunpack.c.l.b16 %v393
      %v438 = vunpack.c.h.b16 %v393
      %v439 = vunpack.c.l.b16 %v394
      %v440 = vunpack.c.h.b16 %v394
      %v441 = vunpack.c.l.b16 %v395
      %v442 = vunpack.c.h.b16 %v395
      %v443 = vunpack.c.l.b16 %v396
      %v444 = vunpack.c.h.b16 %v396
      %v445 = vpack.c.b16 %v413, %v413
      %v446 = vpack.c.b16 %v414, %v414
      %v447 = vpack.c.b16 %v415, %v415
      %v448 = vpack.c.b16 %v416, %v416
      %v449 = vpack.c.b16 %v417, %v417
      %v450 = vpack.c.b16 %v418, %v418
      %v451 = vpack.c.b16 %v419, %v419
      %v452 = vpack.c.b16 %v420, %v420
      %v453 = vpack.c.b16 %v421, %v421
      %v454 = vpack.c.b16 %v422, %v422
      %v455 = vpack.c.b16 %v423, %v423
      %v456 = vpack.c.b16 %v424, %v424
      %v457 = vpack.c.b16 %v425, %v425
      %v458 = vpack.c.b16 %v426, %v426
      %v459 = vpack.c.b16 %v427, %v427
      %v460 = vpack.c.b16 %v428, %v428
      %v461 = vpack.c.b16 %v429, %v429
      %v462 = vpack.c.b16 %v430, %v430
      %v463 = vpack.c.b16 %v431, %v431
      %v464 = vpack.c.b16 %v432, %v432
      %v465 = vpack.c.b16 %v433, %v433
      %v466 = vpack.c.b16 %v434, %v434
      %v467 = vpack.c.b16 %v435, %v435
      %v468 = vpack.c.b16 %v436, %v436
      %v469 = vpack.c.b16 %v437, %v437
      %v470 = vpack.c.b16 %v438, %v438
      %v471 = vpack.c.b16 %v439, %v439
      %v472 = vpack.c.b16 %v440, %v440
      %v473 = vpack.c.b16 %v441, %v441
      %v474 = vpack.c.b16 %v442, %v442
      %v475 = vpack.c.b16 %v443, %v443
      %v476 = vpack.c.b16 %v444, %v444
      %s509 = scalar_lea.vmem [#allocation2], 24
      %510 = vst [vmem:[%s509 + $0x4] sm:$0xf] %v445
      %511 = vst [vmem:[%s509 + $0x10] sm:$0xf] %v446
      %512 = vst [vmem:[%s509 + $0x1c] sm:$0xf] %v447
      %513 = vst [vmem:[%s509 + $0x28] sm:$0xf] %v448
      %514 = vst [vmem:[%s509 + $0x34] sm:$0xf] %v449
      %515 = vst [vmem:[%s509 + $0x40] sm:$0xf] %v450
      %516 = vst [vmem:[%s509 + $0x4c] sm:$0xf] %v451
      %517 = vst [vmem:[%s509 + $0x58] sm:$0xf] %v452
      %518 = vst [vmem:[%s509 + $0x64] sm:$0xf] %v453
      %519 = vst [vmem:[%s509 + $0x70] sm:$0xf] %v454
      %520 = vst [vmem:[%s509 + $0x7c] sm:$0xf] %v455
      %521 = vst [vmem:[%s509 + $0x88] sm:$0xf] %v456
      %522 = vst [vmem:[%s509 + $0x94] sm:$0xf] %v457
      %523 = vst [vmem:[%s509 + $0xa0] sm:$0xf] %v458
      %524 = vst [vmem:[%s509 + $0xac] sm:$0xf] %v459
      %525 = vst [vmem:[%s509 + $0xb8] sm:$0xf] %v460
      %526 = vst [vmem:[%s509 + $0xc4] sm:$0xf] %v461
      %527 = vst [vmem:[%s509 + $0xd0] sm:$0xf] %v462
      %528 = vst [vmem:[%s509 + $0xdc] sm:$0xf] %v463
      %529 = vst [vmem:[%s509 + $0xe8] sm:$0xf] %v464
      %530 = vst [vmem:[%s509 + $0xf4] sm:$0xf] %v465
      %531 = vst [vmem:[%s509 + $0x100] sm:$0xf] %v466
      %532 = vst [vmem:[%s509 + $0x10c] sm:$0xf] %v467
      %533 = vst [vmem:[%s509 + $0x118] sm:$0xf] %v468
      %534 = vst [vmem:[%s509 + $0x124] sm:$0xf] %v469
      %535 = vst [vmem:[%s509 + $0x130] sm:$0xf] %v470
      %536 = vst [vmem:[%s509 + $0x13c] sm:$0xf] %v471
      %537 = vst [vmem:[%s509 + $0x148] sm:$0xf] %v472
      %538 = vst [vmem:[%s509 + $0x154] sm:$0xf] %v473
      %539 = vst [vmem:[%s509 + $0x160] sm:$0xf] %v474
      %540 = vst [vmem:[%s509 + $0x16c] sm:$0xf] %v475
      %541 = vst [vmem:[%s509 + $0x178] sm:$0xf] %v476
      %vm542 = vsmask.f32 4368
      %vm543 = vmor %vm236, %vm542
      %v545 = vshrl.u32 %v445, 16
      %v547 = vrot.slane %v545, 7
      %v548 = vshll.u32 %v445, 16
      %v550 = vor.u32 %v547, %v548
      %v551 = vrot.slane %v547, 4
      %v553 = vshrl.u32 %v446, 16
      %v555 = vrot.slane %v553, 7
      %v556 = vshll.u32 %v446, 16
      %v558 = vor.u32 %v555, %v556
      %v559 = vsel %vm543, %v551, %v558
      %v561 = vshrl.u32 %v447, 16
      %v563 = vrot.slane %v561, 7
      %v564 = vshll.u32 %v447, 16
      %v566 = vor.u32 %v563, %v564
      %v567 = vrot.slane %v563, 4
      %v569 = vshrl.u32 %v448, 16
      %v571 = vrot.slane %v569, 7
      %v572 = vshll.u32 %v448, 16
      %v574 = vor.u32 %v571, %v572
      %v575 = vsel %vm543, %v567, %v574
      %v577 = vshrl.u32 %v449, 16
      %v579 = vrot.slane %v577, 7
      %v580 = vshll.u32 %v449, 16
      %v582 = vor.u32 %v579, %v580
      %v583 = vrot.slane %v579, 4
      %v585 = vshrl.u32 %v450, 16
      %v587 = vrot.slane %v585, 7
      %v588 = vshll.u32 %v450, 16
      %v590 = vor.u32 %v587, %v588
      %v591 = vsel %vm543, %v583, %v590
      %v593 = vshrl.u32 %v451, 16
      %v595 = vrot.slane %v593, 7
      %v596 = vshll.u32 %v451, 16
      %v598 = vor.u32 %v595, %v596
      %v599 = vrot.slane %v595, 4
      %v601 = vshrl.u32 %v452, 16
      %v603 = vrot.slane %v601, 7
      %v604 = vshll.u32 %v452, 16
      %v606 = vor.u32 %v603, %v604
      %v607 = vsel %vm543, %v599, %v606
      %v609 = vshrl.u32 %v453, 16
      %v611 = vrot.slane %v609, 7
      %v612 = vshll.u32 %v453, 16
      %v614 = vor.u32 %v611, %v612
      %v615 = vrot.slane %v611, 4
      %v617 = vshrl.u32 %v454, 16
      %v619 = vrot.slane %v617, 7
      %v620 = vshll.u32 %v454, 16
      %v622 = vor.u32 %v619, %v620
      %v623 = vsel %vm543, %v615, %v622
      %v625 = vshrl.u32 %v455, 16
      %v627 = vrot.slane %v625, 7
      %v628 = vshll.u32 %v455, 16
      %v630 = vor.u32 %v627, %v628
      %v631 = vrot.slane %v627, 4
      %v633 = vshrl.u32 %v456, 16
      %v635 = vrot.slane %v633, 7
      %v636 = vshll.u32 %v456, 16
      %v638 = vor.u32 %v635, %v636
      %v639 = vsel %vm543, %v631, %v638
      %v641 = vshrl.u32 %v457, 16
      %v643 = vrot.slane %v641, 7
      %v644 = vshll.u32 %v457, 16
      %v646 = vor.u32 %v643, %v644
      %v647 = vrot.slane %v643, 4
      %v649 = vshrl.u32 %v458, 16
      %v651 = vrot.slane %v649, 7
      %v652 = vshll.u32 %v458, 16
      %v654 = vor.u32 %v651, %v652
      %v655 = vsel %vm543, %v647, %v654
      %v657 = vshrl.u32 %v459, 16
      %v659 = vrot.slane %v657, 7
      %v660 = vshll.u32 %v459, 16
      %v662 = vor.u32 %v659, %v660
      %v663 = vrot.slane %v659, 4
      %v665 = vshrl.u32 %v460, 16
      %v667 = vrot.slane %v665, 7
      %v668 = vshll.u32 %v460, 16
      %v670 = vor.u32 %v667, %v668
      %v671 = vsel %vm543, %v663, %v670
      %v673 = vshrl.u32 %v461, 16
      %v675 = vrot.slane %v673, 7
      %v676 = vshll.u32 %v461, 16
      %v678 = vor.u32 %v675, %v676
      %v679 = vrot.slane %v675, 4
      %v681 = vshrl.u32 %v462, 16
      %v683 = vrot.slane %v681, 7
      %v684 = vshll.u32 %v462, 16
      %v686 = vor.u32 %v683, %v684
      %v687 = vsel %vm543, %v679, %v686
      %v689 = vshrl.u32 %v463, 16
      %v691 = vrot.slane %v689, 7
      %v692 = vshll.u32 %v463, 16
      %v694 = vor.u32 %v691, %v692
      %v695 = vrot.slane %v691, 4
      %v697 = vshrl.u32 %v464, 16
      %v699 = vrot.slane %v697, 7
      %v700 = vshll.u32 %v464, 16
      %v702 = vor.u32 %v699, %v700
      %v703 = vsel %vm543, %v695, %v702
      %v705 = vshrl.u32 %v465, 16
      %v707 = vrot.slane %v705, 7
      %v708 = vshll.u32 %v465, 16
      %v710 = vor.u32 %v707, %v708
      %v711 = vrot.slane %v707, 4
      %v713 = vshrl.u32 %v466, 16
      %v715 = vrot.slane %v713, 7
      %v716 = vshll.u32 %v466, 16
      %v718 = vor.u32 %v715, %v716
      %v719 = vsel %vm543, %v711, %v718
      %v721 = vshrl.u32 %v467, 16
      %v723 = vrot.slane %v721, 7
      %v724 = vshll.u32 %v467, 16
      %v726 = vor.u32 %v723, %v724
      %v727 = vrot.slane %v723, 4
      %v729 = vshrl.u32 %v468, 16
      %v731 = vrot.slane %v729, 7
      %v732 = vshll.u32 %v468, 16
      %v734 = vor.u32 %v731, %v732
      %v735 = vsel %vm543, %v727, %v734
      %v737 = vshrl.u32 %v469, 16
      %v739 = vrot.slane %v737, 7
      %v740 = vshll.u32 %v469, 16
      %v742 = vor.u32 %v739, %v740
      %v743 = vrot.slane %v739, 4
      %v745 = vshrl.u32 %v470, 16
      %v747 = vrot.slane %v745, 7
      %v748 = vshll.u32 %v470, 16
      %v750 = vor.u32 %v747, %v748
      %v751 = vsel %vm543, %v743, %v750
      %v753 = vshrl.u32 %v471, 16
      %v755 = vrot.slane %v753, 7
      %v756 = vshll.u32 %v471, 16
      %v758 = vor.u32 %v755, %v756
      %v759 = vrot.slane %v755, 4
      %v761 = vshrl.u32 %v472, 16
      %v763 = vrot.slane %v761, 7
      %v764 = vshll.u32 %v472, 16
      %v766 = vor.u32 %v763, %v764
      %v767 = vsel %vm543, %v759, %v766
      %v769 = vshrl.u32 %v473, 16
      %v771 = vrot.slane %v769, 7
      %v772 = vshll.u32 %v473, 16
      %v774 = vor.u32 %v771, %v772
      %v775 = vrot.slane %v771, 4
      %v777 = vshrl.u32 %v474, 16
      %v779 = vrot.slane %v777, 7
      %v780 = vshll.u32 %v474, 16
      %v782 = vor.u32 %v779, %v780
      %v783 = vsel %vm543, %v775, %v782
      %v785 = vshrl.u32 %v475, 16
      %v787 = vrot.slane %v785, 7
      %v788 = vshll.u32 %v475, 16
      %v790 = vor.u32 %v787, %v788
      %v791 = vrot.slane %v787, 4
      %v793 = vshrl.u32 %v476, 16
      %v795 = vrot.slane %v793, 7
      %v796 = vshll.u32 %v476, 16
      %v798 = vor.u32 %v795, %v796
      %v799 = vsel %vm543, %v791, %v798
      %vm832 = vcmask 1043456
      %vm833 = vsmask.f32 7938
      %vm834 = vmand %vm832, %vm833
      %v835 = vld [vmem:[%s509] sm:$0xf]
      %v836 = vsel %vm834, %v550, %v835
      %837 = vst [vmem:[%s509] sm:$0xf] %v836
      %838 = vst [vmem:[%s509 + $0xc] sm:$0xf] %v559
      %v839 = vld [vmem:[%s509 + $0x18] sm:$0xf]
      %v840 = vsel %vm834, %v566, %v839
      %841 = vst [vmem:[%s509 + $0x18] sm:$0xf] %v840
      %842 = vst [vmem:[%s509 + $0x24] sm:$0xf] %v575
      %v843 = vld [vmem:[%s509 + $0x30] sm:$0xf]
      %v844 = vsel %vm834, %v582, %v843
      %845 = vst [vmem:[%s509 + $0x30] sm:$0xf] %v844
      %846 = vst [vmem:[%s509 + $0x3c] sm:$0xf] %v591
      %v847 = vld [vmem:[%s509 + $0x48] sm:$0xf]
      %v848 = vsel %vm834, %v598, %v847
      %849 = vst [vmem:[%s509 + $0x48] sm:$0xf] %v848
      %850 = vst [vmem:[%s509 + $0x54] sm:$0xf] %v607
      %v851 = vld [vmem:[%s509 + $0x60] sm:$0xf]
      %v852 = vsel %vm834, %v614, %v851
      %853 = vst [vmem:[%s509 + $0x60] sm:$0xf] %v852
      %854 = vst [vmem:[%s509 + $0x6c] sm:$0xf] %v623
      %v855 = vld [vmem:[%s509 + $0x78] sm:$0xf]
      %v856 = vsel %vm834, %v630, %v855
      %857 = vst [vmem:[%s509 + $0x78] sm:$0xf] %v856
      %858 = vst [vmem:[%s509 + $0x84] sm:$0xf] %v639
      %v859 = vld [vmem:[%s509 + $0x90] sm:$0xf]
      %v860 = vsel %vm834, %v646, %v859
      %861 = vst [vmem:[%s509 + $0x90] sm:$0xf] %v860
      %862 = vst [vmem:[%s509 + $0x9c] sm:$0xf] %v655
      %v863 = vld [vmem:[%s509 + $0xa8] sm:$0xf]
      %v864 = vsel %vm834, %v662, %v863
      %865 = vst [vmem:[%s509 + $0xa8] sm:$0xf] %v864
      %866 = vst [vmem:[%s509 + $0xb4] sm:$0xf] %v671
      %v867 = vld [vmem:[%s509 + $0xc0] sm:$0xf]
      %v868 = vsel %vm834, %v678, %v867
      %869 = vst [vmem:[%s509 + $0xc0] sm:$0xf] %v868
      %870 = vst [vmem:[%s509 + $0xcc] sm:$0xf] %v687
      %v871 = vld [vmem:[%s509 + $0xd8] sm:$0xf]
      %v872 = vsel %vm834, %v694, %v871
      %873 = vst [vmem:[%s509 + $0xd8] sm:$0xf] %v872
      %874 = vst [vmem:[%s509 + $0xe4] sm:$0xf] %v703
      %v875 = vld [vmem:[%s509 + $0xf0] sm:$0xf]
      %v876 = vsel %vm834, %v710, %v875
      %877 = vst [vmem:[%s509 + $0xf0] sm:$0xf] %v876
      %878 = vst [vmem:[%s509 + $0xfc] sm:$0xf] %v719
      %v879 = vld [vmem:[%s509 + $0x108] sm:$0xf]
      %v880 = vsel %vm834, %v726, %v879
      %881 = vst [vmem:[%s509 + $0x108] sm:$0xf] %v880
      %882 = vst [vmem:[%s509 + $0x114] sm:$0xf] %v735
      %v883 = vld [vmem:[%s509 + $0x120] sm:$0xf]
      %v884 = vsel %vm834, %v742, %v883
      %885 = vst [vmem:[%s509 + $0x120] sm:$0xf] %v884
      %886 = vst [vmem:[%s509 + $0x12c] sm:$0xf] %v751
      %v887 = vld [vmem:[%s509 + $0x138] sm:$0xf]
      %v888 = vsel %vm834, %v758, %v887
      %889 = vst [vmem:[%s509 + $0x138] sm:$0xf] %v888
      %890 = vst [vmem:[%s509 + $0x144] sm:$0xf] %v767
      %v891 = vld [vmem:[%s509 + $0x150] sm:$0xf]
      %v892 = vsel %vm834, %v774, %v891
      %893 = vst [vmem:[%s509 + $0x150] sm:$0xf] %v892
      %894 = vst [vmem:[%s509 + $0x15c] sm:$0xf] %v783
      %v895 = vld [vmem:[%s509 + $0x168] sm:$0xf]
      %v896 = vsel %vm834, %v790, %v895
      %897 = vst [vmem:[%s509 + $0x168] sm:$0xf] %v896
      %898 = vst [vmem:[%s509 + $0x174] sm:$0xf] %v799
      %vm899 = vsmask.f32 3328
      %vm900 = vsmask.f32 7440
      %vm901 = vmor %vm899, %vm900
      %v902 = vrot.slane %v545, 4
      %v903 = vrot.slane %v548, 5
      %v904 = vor.u32 %v902, %v903
      %v905 = vrot.slane %v904, 4
      %v906 = vrot.slane %v556, 5
      %v907 = vsel %vm901, %v905, %v906
      %v908 = vrot.slane %v553, 4
      %v909 = vor.u32 %v908, %v906
      %v910 = vrot.slane %v909, 4
      %v911 = vrot.slane %v561, 4
      %v912 = vrot.slane %v564, 5
      %v913 = vor.u32 %v911, %v912
      %v914 = vrot.slane %v913, 4
      %v915 = vrot.slane %v572, 5
      %v916 = vsel %vm901, %v914, %v915
      %v917 = vrot.slane %v569, 4
      %v918 = vor.u32 %v917, %v915
      %v919 = vrot.slane %v918, 4
      %v920 = vrot.slane %v577, 4
      %v921 = vrot.slane %v580, 5
      %v922 = vor.u32 %v920, %v921
      %v923 = vrot.slane %v922, 4
      %v924 = vrot.slane %v588, 5
      %v925 = vsel %vm901, %v923, %v924
      %v926 = vrot.slane %v585, 4
      %v927 = vor.u32 %v926, %v924
      %v928 = vrot.slane %v927, 4
      %v929 = vrot.slane %v593, 4
      %v930 = vrot.slane %v596, 5
      %v931 = vor.u32 %v929, %v930
      %v932 = vrot.slane %v931, 4
      %v933 = vrot.slane %v604, 5
      %v934 = vsel %vm901, %v932, %v933
      %v935 = vrot.slane %v601, 4
      %v936 = vor.u32 %v935, %v933
      %v937 = vrot.slane %v936, 4
      %v938 = vrot.slane %v609, 4
      %v939 = vrot.slane %v612, 5
      %v940 = vor.u32 %v938, %v939
      %v941 = vrot.slane %v940, 4
      %v942 = vrot.slane %v620, 5
      %v943 = vsel %vm901, %v941, %v942
      %v944 = vrot.slane %v617, 4
      %v945 = vor.u32 %v944, %v942
      %v946 = vrot.slane %v945, 4
      %v947 = vrot.slane %v625, 4
      %v948 = vrot.slane %v628, 5
      %v949 = vor.u32 %v947, %v948
      %v950 = vrot.slane %v949, 4
      %v951 = vrot.slane %v636, 5
      %v952 = vsel %vm901, %v950, %v951
      %v953 = vrot.slane %v633, 4
      %v954 = vor.u32 %v953, %v951
      %v955 = vrot.slane %v954, 4
      %v956 = vrot.slane %v641, 4
      %v957 = vrot.slane %v644, 5
      %v958 = vor.u32 %v956, %v957
      %v959 = vrot.slane %v958, 4
      %v960 = vrot.slane %v652, 5
      %v961 = vsel %vm901, %v959, %v960
      %v962 = vrot.slane %v649, 4
      %v963 = vor.u32 %v962, %v960
      %v964 = vrot.slane %v963, 4
      %v965 = vrot.slane %v657, 4
      %v966 = vrot.slane %v660, 5
      %v967 = vor.u32 %v965, %v966
      %v968 = vrot.slane %v967, 4
      %v969 = vrot.slane %v668, 5
      %v970 = vsel %vm901, %v968, %v969
      %v971 = vrot.slane %v665, 4
      %v972 = vor.u32 %v971, %v969
      %v973 = vrot.slane %v972, 4
      %v974 = vrot.slane %v673, 4
      %v975 = vrot.slane %v676, 5
      %v976 = vor.u32 %v974, %v975
      %v977 = vrot.slane %v976, 4
      %v978 = vrot.slane %v684, 5
      %v979 = vsel %vm901, %v977, %v978
      %v980 = vrot.slane %v681, 4
      %v981 = vor.u32 %v980, %v978
      %v982 = vrot.slane %v981, 4
      %v983 = vrot.slane %v689, 4
      %v984 = vrot.slane %v692, 5
      %v985 = vor.u32 %v983, %v984
      %v986 = vrot.slane %v985, 4
      %v987 = vrot.slane %v700, 5
      %v988 = vsel %vm901, %v986, %v987
      %v989 = vrot.slane %v697, 4
      %v990 = vor.u32 %v989, %v987
      %v991 = vrot.slane %v990, 4
      %v992 = vrot.slane %v705, 4
      %v993 = vrot.slane %v708, 5
      %v994 = vor.u32 %v992, %v993
      %v995 = vrot.slane %v994, 4
      %v996 = vrot.slane %v716, 5
      %v997 = vsel %vm901, %v995, %v996
      %v998 = vrot.slane %v713, 4
      %v999 = vor.u32 %v998, %v996
      %v1000 = vrot.slane %v999, 4
      %v1001 = vrot.slane %v721, 4
      %v1002 = vrot.slane %v724, 5
      %v1003 = vor.u32 %v1001, %v1002
      %v1004 = vrot.slane %v1003, 4
      %v1005 = vrot.slane %v732, 5
      %v1006 = vsel %vm901, %v1004, %v1005
      %v1007 = vrot.slane %v729, 4
      %v1008 = vor.u32 %v1007, %v1005
      %v1009 = vrot.slane %v1008, 4
      %v1010 = vrot.slane %v737, 4
      %v1011 = vrot.slane %v740, 5
      %v1012 = vor.u32 %v1010, %v1011
      %v1013 = vrot.slane %v1012, 4
      %v1014 = vrot.slane %v748, 5
      %v1015 = vsel %vm901, %v1013, %v1014
      %v1016 = vrot.slane %v745, 4
      %v1017 = vor.u32 %v1016, %v1014
      %v1018 = vrot.slane %v1017, 4
      %v1019 = vrot.slane %v753, 4
      %v1020 = vrot.slane %v756, 5
      %v1021 = vor.u32 %v1019, %v1020
      %v1022 = vrot.slane %v1021, 4
      %v1023 = vrot.slane %v764, 5
      %v1024 = vsel %vm901, %v1022, %v1023
      %v1025 = vrot.slane %v761, 4
      %v1026 = vor.u32 %v1025, %v1023
      %v1027 = vrot.slane %v1026, 4
      %v1028 = vrot.slane %v769, 4
      %v1029 = vrot.slane %v772, 5
      %v1030 = vor.u32 %v1028, %v1029
      %v1031 = vrot.slane %v1030, 4
      %v1032 = vrot.slane %v780, 5
      %v1033 = vsel %vm901, %v1031, %v1032
      %v1034 = vrot.slane %v777, 4
      %v1035 = vor.u32 %v1034, %v1032
      %v1036 = vrot.slane %v1035, 4
      %v1037 = vrot.slane %v785, 4
      %v1038 = vrot.slane %v788, 5
      %v1039 = vor.u32 %v1037, %v1038
      %v1040 = vrot.slane %v1039, 4
      %v1041 = vrot.slane %v796, 5
      %v1042 = vsel %vm901, %v1040, %v1041
      %v1043 = vrot.slane %v793, 4
      %v1044 = vor.u32 %v1043, %v1041
      %v1045 = vrot.slane %v1044, 4
      %1078 = vst [vmem:[%s509 + $0x8] sm:$0xf] %v907
      %vm1079 = vmand %vm832, %vm899
      %v1080 = vld [vmem:[%s509 + $0x14] sm:$0xf]
      %v1081 = vsel %vm1079, %v910, %v1080
      %1082 = vst [vmem:[%s509 + $0x14] sm:$0xf] %v1081
      %1083 = vst [vmem:[%s509 + $0x20] sm:$0xf] %v916
      %v1084 = vld [vmem:[%s509 + $0x2c] sm:$0xf]
      %v1085 = vsel %vm1079, %v919, %v1084
      %1086 = vst [vmem:[%s509 + $0x2c] sm:$0xf] %v1085
      %1087 = vst [vmem:[%s509 + $0x38] sm:$0xf] %v925
      %v1088 = vld [vmem:[%s509 + $0x44] sm:$0xf]
      %v1089 = vsel %vm1079, %v928, %v1088
      %1090 = vst [vmem:[%s509 + $0x44] sm:$0xf] %v1089
      %1091 = vst [vmem:[%s509 + $0x50] sm:$0xf] %v934
      %v1092 = vld [vmem:[%s509 + $0x5c] sm:$0xf]
      %v1093 = vsel %vm1079, %v937, %v1092
      %1094 = vst [vmem:[%s509 + $0x5c] sm:$0xf] %v1093
      %1095 = vst [vmem:[%s509 + $0x68] sm:$0xf] %v943
      %v1096 = vld [vmem:[%s509 + $0x74] sm:$0xf]
      %v1097 = vsel %vm1079, %v946, %v1096
      %1098 = vst [vmem:[%s509 + $0x74] sm:$0xf] %v1097
      %1099 = vst [vmem:[%s509 + $0x80] sm:$0xf] %v952
      %v1100 = vld [vmem:[%s509 + $0x8c] sm:$0xf]
      %v1101 = vsel %vm1079, %v955, %v1100
      %1102 = vst [vmem:[%s509 + $0x8c] sm:$0xf] %v1101
      %1103 = vst [vmem:[%s509 + $0x98] sm:$0xf] %v961
      %v1104 = vld [vmem:[%s509 + $0xa4] sm:$0xf]
      %v1105 = vsel %vm1079, %v964, %v1104
      %1106 = vst [vmem:[%s509 + $0xa4] sm:$0xf] %v1105
      %1107 = vst [vmem:[%s509 + $0xb0] sm:$0xf] %v970
      %v1108 = vld [vmem:[%s509 + $0xbc] sm:$0xf]
      %v1109 = vsel %vm1079, %v973, %v1108
      %1110 = vst [vmem:[%s509 + $0xbc] sm:$0xf] %v1109
      %1111 = vst [vmem:[%s509 + $0xc8] sm:$0xf] %v979
      %v1112 = vld [vmem:[%s509 + $0xd4] sm:$0xf]
      %v1113 = vsel %vm1079, %v982, %v1112
      %1114 = vst [vmem:[%s509 + $0xd4] sm:$0xf] %v1113
      %1115 = vst [vmem:[%s509 + $0xe0] sm:$0xf] %v988
      %v1116 = vld [vmem:[%s509 + $0xec] sm:$0xf]
      %v1117 = vsel %vm1079, %v991, %v1116
      %1118 = vst [vmem:[%s509 + $0xec] sm:$0xf] %v1117
      %1119 = vst [vmem:[%s509 + $0xf8] sm:$0xf] %v997
      %v1120 = vld [vmem:[%s509 + $0x104] sm:$0xf]
      %v1121 = vsel %vm1079, %v1000, %v1120
      %1122 = vst [vmem:[%s509 + $0x104] sm:$0xf] %v1121
      %1123 = vst [vmem:[%s509 + $0x110] sm:$0xf] %v1006
      %v1124 = vld [vmem:[%s509 + $0x11c] sm:$0xf]
      %v1125 = vsel %vm1079, %v1009, %v1124
      %1126 = vst [vmem:[%s509 + $0x11c] sm:$0xf] %v1125
      %1127 = vst [vmem:[%s509 + $0x128] sm:$0xf] %v1015
      %v1128 = vld [vmem:[%s509 + $0x134] sm:$0xf]
      %v1129 = vsel %vm1079, %v1018, %v1128
      %1130 = vst [vmem:[%s509 + $0x134] sm:$0xf] %v1129
      %1131 = vst [vmem:[%s509 + $0x140] sm:$0xf] %v1024
      %v1132 = vld [vmem:[%s509 + $0x14c] sm:$0xf]
      %v1133 = vsel %vm1079, %v1027, %v1132
      %1134 = vst [vmem:[%s509 + $0x14c] sm:$0xf] %v1133
      %1135 = vst [vmem:[%s509 + $0x158] sm:$0xf] %v1033
      %v1136 = vld [vmem:[%s509 + $0x164] sm:$0xf]
      %v1137 = vsel %vm1079, %v1036, %v1136
      %1138 = vst [vmem:[%s509 + $0x164] sm:$0xf] %v1137
      %1139 = vst [vmem:[%s509 + $0x170] sm:$0xf] %v1042
      %v1140 = vld [vmem:[%s509 + $0x17c] sm:$0xf]
      %v1141 = vsel %vm1079, %v1045, %v1140
      %1142 = vst [vmem:[%s509 + $0x17c] sm:$0xf] %v1141
      %v1143 = vld [vmem:[#allocation2] sm:$0xff]
      %v1144 = vld [vmem:[#allocation2 + $0x8] sm:$0xf]
      %v1145 = vld [vmem:[#allocation2 + $0xc] sm:$0xff]
      %v1146 = vld [vmem:[#allocation2 + $0x14] sm:$0xf]
      %v1147 = vld [vmem:[#allocation2 + $0x18] sm:$0xff]
      %v1148 = vld [vmem:[#allocation2 + $0x20] sm:$0xf]
      %v1149 = vld [vmem:[#allocation2 + $0x24] sm:$0xff]
      %v1150 = vld [vmem:[#allocation2 + $0x2c] sm:$0xf]
      %v1151 = vld [vmem:[#allocation2 + $0x30] sm:$0xff]
      %v1152 = vld [vmem:[#allocation2 + $0x38] sm:$0xf]
      %v1153 = vld [vmem:[#allocation2 + $0x3c] sm:$0xff]
      %v1154 = vld [vmem:[#allocation2 + $0x44] sm:$0xf]
      %v1155 = vld [vmem:[#allocation2 + $0x48] sm:$0xff]
      %v1156 = vld [vmem:[#allocation2 + $0x50] sm:$0xf]
      %v1157 = vld [vmem:[#allocation2 + $0x54] sm:$0xff]
      %v1158 = vld [vmem:[#allocation2 + $0x5c] sm:$0xf]
      %v1159 = vld [vmem:[#allocation2 + $0x60] sm:$0xff]
      %v1160 = vld [vmem:[#allocation2 + $0x68] sm:$0xf]
      %v1161 = vld [vmem:[#allocation2 + $0x6c] sm:$0xff]
      %v1162 = vld [vmem:[#allocation2 + $0x74] sm:$0xf]
      %v1163 = vld [vmem:[#allocation2 + $0x78] sm:$0xff]
      %v1164 = vld [vmem:[#allocation2 + $0x80] sm:$0xf]
      %v1165 = vld [vmem:[#allocation2 + $0x84] sm:$0xff]
      %v1166 = vld [vmem:[#allocation2 + $0x8c] sm:$0xf]
      %v1167 = vld [vmem:[#allocation2 + $0x90] sm:$0xff]
      %v1168 = vld [vmem:[#allocation2 + $0x98] sm:$0xf]
      %v1169 = vld [vmem:[#allocation2 + $0x9c] sm:$0xff]
      %v1170 = vld [vmem:[#allocation2 + $0xa4] sm:$0xf]
      %v1171 = vld [vmem:[#allocation2 + $0xa8] sm:$0xff]
      %v1172 = vld [vmem:[#allocation2 + $0xb0] sm:$0xf]
      %v1173 = vld [vmem:[#allocation2 + $0xb4] sm:$0xff]
      %v1174 = vld [vmem:[#allocation2 + $0xbc] sm:$0xf]
      %v1175 = vld [vmem:[#allocation2 + $0xc0] sm:$0xff]
      %v1176 = vld [vmem:[#allocation2 + $0xc8] sm:$0xf]
      %v1177 = vld [vmem:[#allocation2 + $0xcc] sm:$0xff]
      %v1178 = vld [vmem:[#allocation2 + $0xd4] sm:$0xf]
      %v1179 = vld [vmem:[#allocation2 + $0xd8] sm:$0xff]
      %v1180 = vld [vmem:[#allocation2 + $0xe0] sm:$0xf]
      %v1181 = vld [vmem:[#allocation2 + $0xe4] sm:$0xff]
      %v1182 = vld [vmem:[#allocation2 + $0xec] sm:$0xf]
      %v1183 = vld [vmem:[#allocation2 + $0xf0] sm:$0xff]
      %v1184 = vld [vmem:[#allocation2 + $0xf8] sm:$0xf]
      %v1185 = vld [vmem:[#allocation2 + $0xfc] sm:$0xff]
      %v1186 = vld [vmem:[#allocation2 + $0x104] sm:$0xf]
      %v1187 = vld [vmem:[#allocation2 + $0x108] sm:$0xff]
      %v1188 = vld [vmem:[#allocation2 + $0x110] sm:$0xf]
      %v1189 = vld [vmem:[#allocation2 + $0x114] sm:$0xff]
      %v1190 = vld [vmem:[#allocation2 + $0x11c] sm:$0xf]
      %v1191 = vld [vmem:[#allocation2 + $0x120] sm:$0xff]
      %v1192 = vld [vmem:[#allocation2 + $0x128] sm:$0xf]
      %v1193 = vld [vmem:[#allocation2 + $0x12c] sm:$0xff]
      %v1194 = vld [vmem:[#allocation2 + $0x134] sm:$0xf]
      %v1195 = vld [vmem:[#allocation2 + $0x138] sm:$0xff]
      %v1196 = vld [vmem:[#allocation2 + $0x140] sm:$0xf]
      %v1197 = vld [vmem:[#allocation2 + $0x144] sm:$0xff]
      %v1198 = vld [vmem:[#allocation2 + $0x14c] sm:$0xf]
      %v1199 = vld [vmem:[#allocation2 + $0x150] sm:$0xff]
      %v1200 = vld [vmem:[#allocation2 + $0x158] sm:$0xf]
      %v1201 = vld [vmem:[#allocation2 + $0x15c] sm:$0xff]
      %v1202 = vld [vmem:[#allocation2 + $0x164] sm:$0xf]
      %v1203 = vld [vmem:[#allocation2 + $0x168] sm:$0xff]
      %v1204 = vld [vmem:[#allocation2 + $0x170] sm:$0xf]
      %v1205 = vld [vmem:[#allocation2 + $0x174] sm:$0xff]
      %v1206 = vld [vmem:[#allocation2 + $0x17c] sm:$0xf]
      %v1207 = vld [vmem:[%s1] sm:$0xf]
      %v1208 = vld [vmem:[%s1 + $0x4] sm:$0xf]
      %v1209 = vld [vmem:[%s1 + $0x8] sm:$0xf]
      %v1210 = vld [vmem:[%s1 + $0xc] sm:$0xf]
      %v1211 = vld [vmem:[%s1 + $0x10] sm:$0xf]
      %v1212 = vld [vmem:[%s1 + $0x14] sm:$0xf]
      %v1213 = vld [vmem:[%s1 + $0x18] sm:$0xf]
      %v1214 = vld [vmem:[%s1 + $0x1c] sm:$0xf]
      %v1215 = vld [vmem:[%s1 + $0x20] sm:$0xf]
      %v1216 = vld [vmem:[%s1 + $0x24] sm:$0xf]
      %v1217 = vld [vmem:[%s1 + $0x28] sm:$0xf]
      %v1218 = vld [vmem:[%s1 + $0x2c] sm:$0xf]
      %v1219 = vld [vmem:[%s1 + $0x30] sm:$0xf]
      %v1220 = vld [vmem:[%s1 + $0x34] sm:$0xf]
      %v1221 = vld [vmem:[%s1 + $0x38] sm:$0xf]
      %v1222 = vld [vmem:[%s1 + $0x3c] sm:$0xf]
      %v1223 = vld [vmem:[%s1 + $0x40] sm:$0xf]
      %v1224 = vld [vmem:[%s1 + $0x44] sm:$0xf]
      %v1225 = vld [vmem:[%s1 + $0x48] sm:$0xf]
      %v1226 = vld [vmem:[%s1 + $0x4c] sm:$0xf]
      %v1227 = vld [vmem:[%s1 + $0x50] sm:$0xf]
      %v1228 = vld [vmem:[%s1 + $0x54] sm:$0xf]
      %v1229 = vld [vmem:[%s1 + $0x58] sm:$0xf]
      %v1230 = vld [vmem:[%s1 + $0x5c] sm:$0xf]
      %v1231 = vld [vmem:[%s1 + $0x60] sm:$0xf]
      %v1232 = vld [vmem:[%s1 + $0x64] sm:$0xf]
      %v1233 = vld [vmem:[%s1 + $0x68] sm:$0xf]
      %v1234 = vld [vmem:[%s1 + $0x6c] sm:$0xf]
      %v1235 = vld [vmem:[%s1 + $0x70] sm:$0xf]
      %v1236 = vld [vmem:[%s1 + $0x74] sm:$0xf]
      %v1237 = vld [vmem:[%s1 + $0x78] sm:$0xf]
      %v1238 = vld [vmem:[%s1 + $0x7c] sm:$0xf]
      %v1239 = vld [vmem:[%s1 + $0x80] sm:$0xf]
      %v1240 = vld [vmem:[%s1 + $0x84] sm:$0xf]
      %v1241 = vld [vmem:[%s1 + $0x88] sm:$0xf]
      %v1242 = vld [vmem:[%s1 + $0x8c] sm:$0xf]
      %v1243 = vld [vmem:[%s1 + $0x90] sm:$0xf]
      %v1244 = vld [vmem:[%s1 + $0x94] sm:$0xf]
      %v1245 = vld [vmem:[%s1 + $0x98] sm:$0xf]
      %v1246 = vld [vmem:[%s1 + $0x9c] sm:$0xf]
      %v1247 = vld [vmem:[%s1 + $0xa0] sm:$0xf]
      %v1248 = vld [vmem:[%s1 + $0xa4] sm:$0xf]
      %v1249 = vld [vmem:[%s1 + $0xa8] sm:$0xf]
      %v1250 = vld [vmem:[%s1 + $0xac] sm:$0xf]
      %v1251 = vld [vmem:[%s1 + $0xb0] sm:$0xf]
      %v1252 = vld [vmem:[%s1 + $0xb4] sm:$0xf]
      %v1253 = vld [vmem:[%s1 + $0xb8] sm:$0xf]
      %v1254 = vld [vmem:[%s1 + $0xbc] sm:$0xf]
      %v1255 = vld [vmem:[%s509] sm:$0xff]
      %v1256 = vld [vmem:[%s509 + $0x8] sm:$0xf]
      %v1257 = vld [vmem:[%s509 + $0xc] sm:$0xff]
      %v1258 = vld [vmem:[%s509 + $0x14] sm:$0xf]
      %v1259 = vld [vmem:[%s509 + $0x18] sm:$0xff]
      %v1260 = vld [vmem:[%s509 + $0x20] sm:$0xf]
      %v1261 = vld [vmem:[%s509 + $0x24] sm:$0xff]
      %v1262 = vld [vmem:[%s509 + $0x2c] sm:$0xf]
      %v1263 = vld [vmem:[%s509 + $0x30] sm:$0xff]
      %v1264 = vld [vmem:[%s509 + $0x38] sm:$0xf]
      %v1265 = vld [vmem:[%s509 + $0x3c] sm:$0xff]
      %v1266 = vld [vmem:[%s509 + $0x44] sm:$0xf]
      %v1267 = vld [vmem:[%s509 + $0x48] sm:$0xff]
      %v1268 = vld [vmem:[%s509 + $0x50] sm:$0xf]
      %v1269 = vld [vmem:[%s509 + $0x54] sm:$0xff]
      %v1270 = vld [vmem:[%s509 + $0x5c] sm:$0xf]
      %v1271 = vld [vmem:[%s509 + $0x60] sm:$0xff]
      %v1272 = vld [vmem:[%s509 + $0x68] sm:$0xf]
      %v1273 = vld [vmem:[%s509 + $0x6c] sm:$0xff]
      %v1274 = vld [vmem:[%s509 + $0x74] sm:$0xf]
      %v1275 = vld [vmem:[%s509 + $0x78] sm:$0xff]
      %v1276 = vld [vmem:[%s509 + $0x80] sm:$0xf]
      %v1277 = vld [vmem:[%s509 + $0x84] sm:$0xff]
      %v1278 = vld [vmem:[%s509 + $0x8c] sm:$0xf]
      %v1279 = vld [vmem:[%s509 + $0x90] sm:$0xff]
      %v1280 = vld [vmem:[%s509 + $0x98] sm:$0xf]
      %v1281 = vld [vmem:[%s509 + $0x9c] sm:$0xff]
      %v1282 = vld [vmem:[%s509 + $0xa4] sm:$0xf]
      %v1283 = vld [vmem:[%s509 + $0xa8] sm:$0xff]
      %v1284 = vld [vmem:[%s509 + $0xb0] sm:$0xf]
      %v1285 = vld [vmem:[%s509 + $0xb4] sm:$0xff]
      %v1286 = vld [vmem:[%s509 + $0xbc] sm:$0xf]
      %v1287 = vld [vmem:[%s509 + $0xc0] sm:$0xff]
      %v1288 = vld [vmem:[%s509 + $0xc8] sm:$0xf]
      %v1289 = vld [vmem:[%s509 + $0xcc] sm:$0xff]
      %v1290 = vld [vmem:[%s509 + $0xd4] sm:$0xf]
      %v1291 = vld [vmem:[%s509 + $0xd8] sm:$0xff]
      %v1292 = vld [vmem:[%s509 + $0xe0] sm:$0xf]
      %v1293 = vld [vmem:[%s509 + $0xe4] sm:$0xff]
      %v1294 = vld [vmem:[%s509 + $0xec] sm:$0xf]
      %v1295 = vld [vmem:[%s509 + $0xf0] sm:$0xff]
      %v1296 = vld [vmem:[%s509 + $0xf8] sm:$0xf]
      %v1297 = vld [vmem:[%s509 + $0xfc] sm:$0xff]
      %v1298 = vld [vmem:[%s509 + $0x104] sm:$0xf]
      %v1299 = vld [vmem:[%s509 + $0x108] sm:$0xff]
      %v1300 = vld [vmem:[%s509 + $0x110] sm:$0xf]
      %v1301 = vld [vmem:[%s509 + $0x114] sm:$0xff]
      %v1302 = vld [vmem:[%s509 + $0x11c] sm:$0xf]
      %v1303 = vld [vmem:[%s509 + $0x120] sm:$0xff]
      %v1304 = vld [vmem:[%s509 + $0x128] sm:$0xf]
      %v1305 = vld [vmem:[%s509 + $0x12c] sm:$0xff]
      %v1306 = vld [vmem:[%s509 + $0x134] sm:$0xf]
      %v1307 = vld [vmem:[%s509 + $0x138] sm:$0xff]
      %v1308 = vld [vmem:[%s509 + $0x140] sm:$0xf]
      %v1309 = vld [vmem:[%s509 + $0x144] sm:$0xff]
      %v1310 = vld [vmem:[%s509 + $0x14c] sm:$0xf]
      %v1311 = vld [vmem:[%s509 + $0x150] sm:$0xff]
      %v1312 = vld [vmem:[%s509 + $0x158] sm:$0xf]
      %v1313 = vld [vmem:[%s509 + $0x15c] sm:$0xff]
      %v1314 = vld [vmem:[%s509 + $0x164] sm:$0xf]
      %v1315 = vld [vmem:[%s509 + $0x168] sm:$0xff]
      %v1316 = vld [vmem:[%s509 + $0x170] sm:$0xf]
      %v1317 = vld [vmem:[%s509 + $0x174] sm:$0xff]
      %v1318 = vld [vmem:[%s509 + $0x17c] sm:$0xf]
      %s1319 = scalar_lea.vmem %s1, 192
      %v1320 = vld [vmem:[%s1319] sm:$0xf]
      %v1321 = vld [vmem:[%s1319 + $0x4] sm:$0xf]
      %v1322 = vld [vmem:[%s1319 + $0x8] sm:$0xf]
      %v1323 = vld [vmem:[%s1319 + $0xc] sm:$0xf]
      %v1324 = vld [vmem:[%s1319 + $0x10] sm:$0xf]
      %v1325 = vld [vmem:[%s1319 + $0x14] sm:$0xf]
      %v1326 = vld [vmem:[%s1319 + $0x18] sm:$0xf]
      %v1327 = vld [vmem:[%s1319 + $0x1c] sm:$0xf]
      %v1328 = vld [vmem:[%s1319 + $0x20] sm:$0xf]
      %v1329 = vld [vmem:[%s1319 + $0x24] sm:$0xf]
      %v1330 = vld [vmem:[%s1319 + $0x28] sm:$0xf]
      %v1331 = vld [vmem:[%s1319 + $0x2c] sm:$0xf]
      %v1332 = vld [vmem:[%s1319 + $0x30] sm:$0xf]
      %v1333 = vld [vmem:[%s1319 + $0x34] sm:$0xf]
      %v1334 = vld [vmem:[%s1319 + $0x38] sm:$0xf]
      %v1335 = vld [vmem:[%s1319 + $0x3c] sm:$0xf]
      %v1336 = vld [vmem:[%s1319 + $0x40] sm:$0xf]
      %v1337 = vld [vmem:[%s1319 + $0x44] sm:$0xf]
      %v1338 = vld [vmem:[%s1319 + $0x48] sm:$0xf]
      %v1339 = vld [vmem:[%s1319 + $0x4c] sm:$0xf]
      %v1340 = vld [vmem:[%s1319 + $0x50] sm:$0xf]
      %v1341 = vld [vmem:[%s1319 + $0x54] sm:$0xf]
      %v1342 = vld [vmem:[%s1319 + $0x58] sm:$0xf]
      %v1343 = vld [vmem:[%s1319 + $0x5c] sm:$0xf]
      %v1344 = vld [vmem:[%s1319 + $0x60] sm:$0xf]
      %v1345 = vld [vmem:[%s1319 + $0x64] sm:$0xf]
      %v1346 = vld [vmem:[%s1319 + $0x68] sm:$0xf]
      %v1347 = vld [vmem:[%s1319 + $0x6c] sm:$0xf]
      %v1348 = vld [vmem:[%s1319 + $0x70] sm:$0xf]
      %v1349 = vld [vmem:[%s1319 + $0x74] sm:$0xf]
      %v1350 = vld [vmem:[%s1319 + $0x78] sm:$0xf]
      %v1351 = vld [vmem:[%s1319 + $0x7c] sm:$0xf]
      %v1352 = vld [vmem:[%s1319 + $0x80] sm:$0xf]
      %v1353 = vld [vmem:[%s1319 + $0x84] sm:$0xf]
      %v1354 = vld [vmem:[%s1319 + $0x88] sm:$0xf]
      %v1355 = vld [vmem:[%s1319 + $0x8c] sm:$0xf]
      %v1356 = vld [vmem:[%s1319 + $0x90] sm:$0xf]
      %v1357 = vld [vmem:[%s1319 + $0x94] sm:$0xf]
      %v1358 = vld [vmem:[%s1319 + $0x98] sm:$0xf]
      %v1359 = vld [vmem:[%s1319 + $0x9c] sm:$0xf]
      %v1360 = vld [vmem:[%s1319 + $0xa0] sm:$0xf]
      %v1361 = vld [vmem:[%s1319 + $0xa4] sm:$0xf]
      %v1362 = vld [vmem:[%s1319 + $0xa8] sm:$0xf]
      %v1363 = vld [vmem:[%s1319 + $0xac] sm:$0xf]
      %v1364 = vld [vmem:[%s1319 + $0xb0] sm:$0xf]
      %v1365 = vld [vmem:[%s1319 + $0xb4] sm:$0xf]
      %v1366 = vld [vmem:[%s1319 + $0xb8] sm:$0xf]
      %v1367 = vld [vmem:[%s1319 + $0xbc] sm:$0xf]
      %v1432 = vunpack.c.l.b16 %v1255
      %v1433 = vunpack.c.h.b16 %v1255
      %v1434 = vunpack.c.l.b16 %v1256
      %v1435 = vunpack.c.l.b16 %v1257
      %v1436 = vunpack.c.h.b16 %v1257
      %v1437 = vunpack.c.l.b16 %v1258
      %v1438 = vunpack.c.l.b16 %v1259
      %v1439 = vunpack.c.h.b16 %v1259
      %v1440 = vunpack.c.l.b16 %v1260
      %v1441 = vunpack.c.l.b16 %v1261
      %v1442 = vunpack.c.h.b16 %v1261
      %v1443 = vunpack.c.l.b16 %v1262
      %v1444 = vunpack.c.l.b16 %v1263
      %v1445 = vunpack.c.h.b16 %v1263
      %v1446 = vunpack.c.l.b16 %v1264
      %v1447 = vunpack.c.l.b16 %v1265
      %v1448 = vunpack.c.h.b16 %v1265
      %v1449 = vunpack.c.l.b16 %v1266
      %v1450 = vunpack.c.l.b16 %v1267
      %v1451 = vunpack.c.h.b16 %v1267
      %v1452 = vunpack.c.l.b16 %v1268
      %v1453 = vunpack.c.l.b16 %v1269
      %v1454 = vunpack.c.h.b16 %v1269
      %v1455 = vunpack.c.l.b16 %v1270
      %v1456 = vunpack.c.l.b16 %v1271
      %v1457 = vunpack.c.h.b16 %v1271
      %v1458 = vunpack.c.l.b16 %v1272
      %v1459 = vunpack.c.l.b16 %v1273
      %v1460 = vunpack.c.h.b16 %v1273
      %v1461 = vunpack.c.l.b16 %v1274
      %v1462 = vunpack.c.l.b16 %v1275
      %v1463 = vunpack.c.h.b16 %v1275
      %v1464 = vunpack.c.l.b16 %v1276
      %v1465 = vunpack.c.l.b16 %v1277
      %v1466 = vunpack.c.h.b16 %v1277
      %v1467 = vunpack.c.l.b16 %v1278
      %v1468 = vunpack.c.l.b16 %v1279
      %v1469 = vunpack.c.h.b16 %v1279
      %v1470 = vunpack.c.l.b16 %v1280
      %v1471 = vunpack.c.l.b16 %v1281
      %v1472 = vunpack.c.h.b16 %v1281
      %v1473 = vunpack.c.l.b16 %v1282
      %v1474 = vunpack.c.l.b16 %v1283
      %v1475 = vunpack.c.h.b16 %v1283
      %v1476 = vunpack.c.l.b16 %v1284
      %v1477 = vunpack.c.l.b16 %v1285
      %v1478 = vunpack.c.h.b16 %v1285
      %v1479 = vunpack.c.l.b16 %v1286
      %v1480 = vunpack.c.l.b16 %v1287
      %v1481 = vunpack.c.h.b16 %v1287
      %v1482 = vunpack.c.l.b16 %v1288
      %v1483 = vunpack.c.l.b16 %v1289
      %v1484 = vunpack.c.h.b16 %v1289
      %v1485 = vunpack.c.l.b16 %v1290
      %v1486 = vunpack.c.l.b16 %v1291
      %v1487 = vunpack.c.h.b16 %v1291
      %v1488 = vunpack.c.l.b16 %v1292
      %v1489 = vunpack.c.l.b16 %v1293
      %v1490 = vunpack.c.h.b16 %v1293
      %v1491 = vunpack.c.l.b16 %v1294
      %v1492 = vunpack.c.l.b16 %v1295
      %v1493 = vunpack.c.h.b16 %v1295
      %v1494 = vunpack.c.l.b16 %v1296
      %v1495 = vunpack.c.l.b16 %v1297
      %v1496 = vunpack.c.h.b16 %v1297
      %v1497 = vunpack.c.l.b16 %v1298
      %v1498 = vunpack.c.l.b16 %v1299
      %v1499 = vunpack.c.h.b16 %v1299
      %v1500 = vunpack.c.l.b16 %v1300
      %v1501 = vunpack.c.l.b16 %v1301
      %v1502 = vunpack.c.h.b16 %v1301
      %v1503 = vunpack.c.l.b16 %v1302
      %v1504 = vunpack.c.l.b16 %v1303
      %v1505 = vunpack.c.h.b16 %v1303
      %v1506 = vunpack.c.l.b16 %v1304
      %v1507 = vunpack.c.l.b16 %v1305
      %v1508 = vunpack.c.h.b16 %v1305
      %v1509 = vunpack.c.l.b16 %v1306
      %v1510 = vunpack.c.l.b16 %v1307
      %v1511 = vunpack.c.h.b16 %v1307
      %v1512 = vunpack.c.l.b16 %v1308
      %v1513 = vunpack.c.l.b16 %v1309
      %v1514 = vunpack.c.h.b16 %v1309
      %v1515 = vunpack.c.l.b16 %v1310
      %v1516 = vunpack.c.l.b16 %v1311
      %v1517 = vunpack.c.h.b16 %v1311
      %v1518 = vunpack.c.l.b16 %v1312
      %v1519 = vunpack.c.l.b16 %v1313
      %v1520 = vunpack.c.h.b16 %v1313
      %v1521 = vunpack.c.l.b16 %v1314
      %v1522 = vunpack.c.l.b16 %v1315
      %v1523 = vunpack.c.h.b16 %v1315
      %v1524 = vunpack.c.l.b16 %v1316
      %v1525 = vunpack.c.l.b16 %v1317
      %v1526 = vunpack.c.h.b16 %v1317
      %v1527 = vunpack.c.l.b16 %v1318
      %v1528 = vpack.c.b16 %v1435, %v1432
      %v1529 = vpack.c.b16 %v1436, %v1433
      %v1530 = vpack.c.b16 %v1437, %v1434
      %v1531 = vpack.c.b16 %v1441, %v1438
      %v1532 = vpack.c.b16 %v1442, %v1439
      %v1533 = vpack.c.b16 %v1443, %v1440
      %v1534 = vpack.c.b16 %v1447, %v1444
      %v1535 = vpack.c.b16 %v1448, %v1445
      %v1536 = vpack.c.b16 %v1449, %v1446
      %v1537 = vpack.c.b16 %v1453, %v1450
      %v1538 = vpack.c.b16 %v1454, %v1451
      %v1539 = vpack.c.b16 %v1455, %v1452
      %v1540 = vpack.c.b16 %v1459, %v1456
      %v1541 = vpack.c.b16 %v1460, %v1457
      %v1542 = vpack.c.b16 %v1461, %v1458
      %v1543 = vpack.c.b16 %v1465, %v1462
      %v1544 = vpack.c.b16 %v1466, %v1463
      %v1545 = vpack.c.b16 %v1467, %v1464
      %v1546 = vpack.c.b16 %v1471, %v1468
      %v1547 = vpack.c.b16 %v1472, %v1469
      %v1548 = vpack.c.b16 %v1473, %v1470
      %v1549 = vpack.c.b16 %v1477, %v1474
      %v1550 = vpack.c.b16 %v1478, %v1475
      %v1551 = vpack.c.b16 %v1479, %v1476
      %v1552 = vpack.c.b16 %v1483, %v1480
      %v1553 = vpack.c.b16 %v1484, %v1481
      %v1554 = vpack.c.b16 %v1485, %v1482
      %v1555 = vpack.c.b16 %v1489, %v1486
      %v1556 = vpack.c.b16 %v1490, %v1487
      %v1557 = vpack.c.b16 %v1491, %v1488
      %v1558 = vpack.c.b16 %v1495, %v1492
      %v1559 = vpack.c.b16 %v1496, %v1493
      %v1560 = vpack.c.b16 %v1497, %v1494
      %v1561 = vpack.c.b16 %v1501, %v1498
      %v1562 = vpack.c.b16 %v1502, %v1499
      %v1563 = vpack.c.b16 %v1503, %v1500
      %v1564 = vpack.c.b16 %v1507, %v1504
      %v1565 = vpack.c.b16 %v1508, %v1505
      %v1566 = vpack.c.b16 %v1509, %v1506
      %v1567 = vpack.c.b16 %v1513, %v1510
      %v1568 = vpack.c.b16 %v1514, %v1511
      %v1569 = vpack.c.b16 %v1515, %v1512
      %v1570 = vpack.c.b16 %v1519, %v1516
      %v1571 = vpack.c.b16 %v1520, %v1517
      %v1572 = vpack.c.b16 %v1521, %v1518
      %v1573 = vpack.c.b16 %v1525, %v1522
      %v1574 = vpack.c.b16 %v1526, %v1523
      %v1575 = vpack.c.b16 %v1527, %v1524
      %v1672 = vunpack.c.l.b16 %v1320
      %v1673 = vunpack.c.l.b16 %v1321
      %v1674 = vunpack.c.l.b16 %v1322
      %v1675 = vunpack.c.l.b16 %v1323
      %v1676 = vunpack.c.l.b16 %v1324
      %v1677 = vunpack.c.l.b16 %v1325
      %v1678 = vunpack.c.l.b16 %v1326
      %v1679 = vunpack.c.l.b16 %v1327
      %v1680 = vunpack.c.l.b16 %v1328
      %v1681 = vunpack.c.l.b16 %v1329
      %v1682 = vunpack.c.l.b16 %v1330
      %v1683 = vunpack.c.l.b16 %v1331
      %v1684 = vunpack.c.l.b16 %v1332
      %v1685 = vunpack.c.l.b16 %v1333
      %v1686 = vunpack.c.l.b16 %v1334
      %v1687 = vunpack.c.l.b16 %v1335
      %v1688 = vunpack.c.l.b16 %v1336
      %v1689 = vunpack.c.l.b16 %v1337
      %v1690 = vunpack.c.l.b16 %v1338
      %v1691 = vunpack.c.l.b16 %v1339
      %v1692 = vunpack.c.l.b16 %v1340
      %v1693 = vunpack.c.l.b16 %v1341
      %v1694 = vunpack.c.l.b16 %v1342
      %v1695 = vunpack.c.l.b16 %v1343
      %v1696 = vunpack.c.l.b16 %v1344
      %v1697 = vunpack.c.l.b16 %v1345
      %v1698 = vunpack.c.l.b16 %v1346
      %v1699 = vunpack.c.l.b16 %v1347
      %v1700 = vunpack.c.l.b16 %v1348
      %v1701 = vunpack.c.l.b16 %v1349
      %v1702 = vunpack.c.l.b16 %v1350
      %v1703 = vunpack.c.l.b16 %v1351
      %v1704 = vunpack.c.l.b16 %v1352
      %v1705 = vunpack.c.l.b16 %v1353
      %v1706 = vunpack.c.l.b16 %v1354
      %v1707 = vunpack.c.l.b16 %v1355
      %v1708 = vunpack.c.l.b16 %v1356
      %v1709 = vunpack.c.l.b16 %v1357
      %v1710 = vunpack.c.l.b16 %v1358
      %v1711 = vunpack.c.l.b16 %v1359
      %v1712 = vunpack.c.l.b16 %v1360
      %v1713 = vunpack.c.l.b16 %v1361
      %v1714 = vunpack.c.l.b16 %v1362
      %v1715 = vunpack.c.l.b16 %v1363
      %v1716 = vunpack.c.l.b16 %v1364
      %v1717 = vunpack.c.l.b16 %v1365
      %v1718 = vunpack.c.l.b16 %v1366
      %v1719 = vunpack.c.l.b16 %v1367
      %v1720 = vpack.c.b16 %v1673, %v1672
      %v1721 = vpack.c.b16 %v1675, %v1674
      %v1722 = vpack.c.b16 %v1677, %v1676
      %v1723 = vpack.c.b16 %v1679, %v1678
      %v1724 = vpack.c.b16 %v1681, %v1680
      %v1725 = vpack.c.b16 %v1683, %v1682
      %v1726 = vpack.c.b16 %v1685, %v1684
      %v1727 = vpack.c.b16 %v1687, %v1686
      %v1728 = vpack.c.b16 %v1689, %v1688
      %v1729 = vpack.c.b16 %v1691, %v1690
      %v1730 = vpack.c.b16 %v1693, %v1692
      %v1731 = vpack.c.b16 %v1695, %v1694
      %v1732 = vpack.c.b16 %v1697, %v1696
      %v1733 = vpack.c.b16 %v1699, %v1698
      %v1734 = vpack.c.b16 %v1701, %v1700
      %v1735 = vpack.c.b16 %v1703, %v1702
      %v1736 = vpack.c.b16 %v1705, %v1704
      %v1737 = vpack.c.b16 %v1707, %v1706
      %v1738 = vpack.c.b16 %v1709, %v1708
      %v1739 = vpack.c.b16 %v1711, %v1710
      %v1740 = vpack.c.b16 %v1713, %v1712
      %v1741 = vpack.c.b16 %v1715, %v1714
      %v1742 = vpack.c.b16 %v1717, %v1716
      %v1743 = vpack.c.b16 %v1719, %v1718
      %1768 = vmatprep.subr.bf16.mxu0 0
      %1769 = vmatpush1.bf16.msra.mxu0 %v1727
      %1770 = vmatprep.subr.bf16.mxu0 0
      %1771 = vmatpush1.bf16.msra.mxu0 %v1726
      %1772 = vmatprep.subr.bf16.mxu0 0
      %1773 = vmatpush1.bf16.msra.mxu0 %v1725
      %1774 = vmatprep.subr.bf16.mxu0 0
      %1775 = vmatpush1.bf16.msra.mxu0 %v1724
      %1776 = vmatprep.subr.bf16.mxu0 0
      %1777 = vmatpush1.bf16.msra.mxu0 %v1723
      %1778 = vmatprep.subr.bf16.mxu0 0
      %1779 = vmatpush1.bf16.msra.mxu0 %v1722
      %1780 = vmatprep.subr.bf16.mxu0 0
      %1781 = vmatpush1.bf16.msra.mxu0 %v1721
      %1782 = vmatprep.subr.bf16.mxu0 0
      %1783 = vmatpush1.bf16.msra.mxu0 %v1720
      %1784 = vmatprep.subr.bf16.mxu0 0
      %1785 = vmatpush2.bf16.msra.mxu0 %v1735
      %1786 = vmatprep.subr.bf16.mxu0 0
      %1787 = vmatpush2.bf16.msra.mxu0 %v1734
      %1788 = vmatprep.subr.bf16.mxu0 0
      %1789 = vmatpush2.bf16.msra.mxu0 %v1733
      %1790 = vmatprep.subr.bf16.mxu0 0
      %1791 = vmatpush2.bf16.msra.mxu0 %v1732
      %1792 = vmatprep.subr.bf16.mxu0 0
      %1793 = vmatpush2.bf16.msra.mxu0 %v1731
      %1794 = vmatprep.subr.bf16.mxu0 0
      %1795 = vmatpush2.bf16.msra.mxu0 %v1730
      %1796 = vmatprep.subr.bf16.mxu0 0
      %1797 = vmatpush2.bf16.msra.mxu0 %v1729
      %1798 = vmatprep.subr.bf16.mxu0 0
      %1799 = vmatpush2.bf16.msra.mxu0 %v1728
      %1800 = vmatprep.mubr.bf16.mxu0 %v1529
      %1801 = vmatmul.mubr.bf16.gmra.mxu0 %v1528
      %v1802 = vpop.f32.mrf.mxu0
      %v1803 = vadd.f32 0.0, %v1802
      %v1804 = vpop.f32.mrf.mxu0
      %v1805 = vpop.f32.mrf.mxu0
      %v1806 = vadd.f32 0.0, %v1805
      %v1807 = vpop.f32.mrf.mxu0
      %1808 = vmatprep.mubr.bf16.mxu0 %v1532
      %1809 = vmatmul.mubr.bf16.gmra.mxu0 %v1531
      %v1810 = vpop.f32.mrf.mxu0
      %v1811 = vadd.f32 0.0, %v1810
      %v1812 = vpop.f32.mrf.mxu0
      %v1813 = vpop.f32.mrf.mxu0
      %v1814 = vadd.f32 0.0, %v1813
      %v1815 = vpop.f32.mrf.mxu0
      %1816 = vmatprep.mubr.bf16.mxu0 %v1535
      %1817 = vmatmul.mubr.bf16.gmra.mxu0 %v1534
      %v1818 = vpop.f32.mrf.mxu0
      %v1819 = vadd.f32 0.0, %v1818
      %v1820 = vpop.f32.mrf.mxu0
      %v1821 = vpop.f32.mrf.mxu0
      %v1822 = vadd.f32 0.0, %v1821
      %v1823 = vpop.f32.mrf.mxu0
      %1824 = vmatprep.mubr.bf16.mxu0 %v1538
      %1825 = vmatmul.mubr.bf16.gmra.mxu0 %v1537
      %v1826 = vpop.f32.mrf.mxu0
      %v1827 = vadd.f32 0.0, %v1826
      %v1828 = vpop.f32.mrf.mxu0
      %v1829 = vpop.f32.mrf.mxu0
      %v1830 = vadd.f32 0.0, %v1829
      %v1831 = vpop.f32.mrf.mxu0
      %1832 = vmatprep.mubr.bf16.mxu0 %v1541
      %1833 = vmatmul.mubr.bf16.gmra.mxu0 %v1540
      %v1834 = vpop.f32.mrf.mxu0
      %v1835 = vadd.f32 0.0, %v1834
      %v1836 = vpop.f32.mrf.mxu0
      %v1837 = vpop.f32.mrf.mxu0
      %v1838 = vadd.f32 0.0, %v1837
      %v1839 = vpop.f32.mrf.mxu0
      %1840 = vmatprep.mubr.bf16.mxu0 %v1544
      %1841 = vmatmul.mubr.bf16.gmra.mxu0 %v1543
      %v1842 = vpop.f32.mrf.mxu0
      %v1843 = vadd.f32 0.0, %v1842
      %v1844 = vpop.f32.mrf.mxu0
      %v1845 = vpop.f32.mrf.mxu0
      %v1846 = vadd.f32 0.0, %v1845
      %v1847 = vpop.f32.mrf.mxu0
      %1848 = vmatprep.mubr.bf16.mxu0 %v1547
      %1849 = vmatmul.mubr.bf16.gmra.mxu0 %v1546
      %v1850 = vpop.f32.mrf.mxu0
      %v1851 = vadd.f32 0.0, %v1850
      %v1852 = vpop.f32.mrf.mxu0
      %v1853 = vpop.f32.mrf.mxu0
      %v1854 = vadd.f32 0.0, %v1853
      %v1855 = vpop.f32.mrf.mxu0
      %1856 = vmatprep.mubr.bf16.mxu0 %v1550
      %1857 = vmatmul.mubr.bf16.gmra.mxu0 %v1549
      %v1858 = vpop.f32.mrf.mxu0
      %v1859 = vadd.f32 0.0, %v1858
      %v1860 = vpop.f32.mrf.mxu0
      %v1861 = vpop.f32.mrf.mxu0
      %v1862 = vadd.f32 0.0, %v1861
      %v1863 = vpop.f32.mrf.mxu0
      %1864 = vmatprep.mubr.bf16.mxu0 %v1553
      %1865 = vmatmul.mubr.bf16.gmra.mxu0 %v1552
      %v1866 = vpop.f32.mrf.mxu0
      %v1867 = vadd.f32 0.0, %v1866
      %v1868 = vpop.f32.mrf.mxu0
      %v1869 = vpop.f32.mrf.mxu0
      %v1870 = vadd.f32 0.0, %v1869
      %v1871 = vpop.f32.mrf.mxu0
      %1872 = vmatprep.mubr.bf16.mxu0 %v1556
      %1873 = vmatmul.mubr.bf16.gmra.mxu0 %v1555
      %v1874 = vpop.f32.mrf.mxu0
      %v1875 = vadd.f32 0.0, %v1874
      %v1876 = vpop.f32.mrf.mxu0
      %v1877 = vpop.f32.mrf.mxu0
      %v1878 = vadd.f32 0.0, %v1877
      %v1879 = vpop.f32.mrf.mxu0
      %1880 = vmatprep.mubr.bf16.mxu0 %v1559
      %1881 = vmatmul.mubr.bf16.gmra.mxu0 %v1558
      %v1882 = vpop.f32.mrf.mxu0
      %v1883 = vadd.f32 0.0, %v1882
      %v1884 = vpop.f32.mrf.mxu0
      %v1885 = vpop.f32.mrf.mxu0
      %v1886 = vadd.f32 0.0, %v1885
      %v1887 = vpop.f32.mrf.mxu0
      %1888 = vmatprep.mubr.bf16.mxu0 %v1562
      %1889 = vmatmul.mubr.bf16.gmra.mxu0 %v1561
      %v1890 = vpop.f32.mrf.mxu0
      %v1891 = vadd.f32 0.0, %v1890
      %v1892 = vpop.f32.mrf.mxu0
      %v1893 = vpop.f32.mrf.mxu0
      %v1894 = vadd.f32 0.0, %v1893
      %v1895 = vpop.f32.mrf.mxu0
      %1896 = vmatprep.mubr.bf16.mxu0 %v1565
      %1897 = vmatmul.mubr.bf16.gmra.mxu0 %v1564
      %v1898 = vpop.f32.mrf.mxu0
      %v1899 = vadd.f32 0.0, %v1898
      %v1900 = vpop.f32.mrf.mxu0
      %v1901 = vpop.f32.mrf.mxu0
      %v1902 = vadd.f32 0.0, %v1901
      %v1903 = vpop.f32.mrf.mxu0
      %1904 = vmatprep.mubr.bf16.mxu0 %v1568
      %1905 = vmatmul.mubr.bf16.gmra.mxu0 %v1567
      %v1906 = vpop.f32.mrf.mxu0
      %v1907 = vadd.f32 0.0, %v1906
      %v1908 = vpop.f32.mrf.mxu0
      %v1909 = vpop.f32.mrf.mxu0
      %v1910 = vadd.f32 0.0, %v1909
      %v1911 = vpop.f32.mrf.mxu0
      %1912 = vmatprep.mubr.bf16.mxu0 %v1571
      %1913 = vmatmul.mubr.bf16.gmra.mxu0 %v1570
      %v1914 = vpop.f32.mrf.mxu0
      %v1915 = vadd.f32 0.0, %v1914
      %v1916 = vpop.f32.mrf.mxu0
      %v1917 = vpop.f32.mrf.mxu0
      %v1918 = vadd.f32 0.0, %v1917
      %v1919 = vpop.f32.mrf.mxu0
      %1920 = vmatprep.mubr.bf16.mxu0 %v1574
      %1921 = vmatmul.mubr.bf16.gmra.mxu0 %v1573
      %v1922 = vpop.f32.mrf.mxu0
      %v1923 = vadd.f32 0.0, %v1922
      %v1924 = vpop.f32.mrf.mxu0
      %v1925 = vpop.f32.mrf.mxu0
      %v1926 = vadd.f32 0.0, %v1925
      %v1927 = vpop.f32.mrf.mxu0
      %1928 = vdwg.mxu0
      %1929 = vmatprep.subr.bf16.mxu0 0
      %1930 = vmatpush1.bf16.msra.mxu0 %v1743
      %1931 = vmatprep.subr.bf16.mxu0 0
      %1932 = vmatpush1.bf16.msra.mxu0 %v1742
      %1933 = vmatprep.subr.bf16.mxu0 0
      %1934 = vmatpush1.bf16.msra.mxu0 %v1741
      %1935 = vmatprep.subr.bf16.mxu0 0
      %1936 = vmatpush1.bf16.msra.mxu0 %v1740
      %1937 = vmatprep.subr.bf16.mxu0 0
      %1938 = vmatpush1.bf16.msra.mxu0 %v1739
      %1939 = vmatprep.subr.bf16.mxu0 0
      %1940 = vmatpush1.bf16.msra.mxu0 %v1738
      %1941 = vmatprep.subr.bf16.mxu0 0
      %1942 = vmatpush1.bf16.msra.mxu0 %v1737
      %1943 = vmatprep.subr.bf16.mxu0 0
      %1944 = vmatpush1.bf16.msra.mxu0 %v1736
      %1945 = vmatprep.subr.bf16.mxu0 0
      %1946 = vmatpush2.bf16.msra.mxu0 0
      %1947 = vmatprep.subr.bf16.mxu0 0
      %1948 = vmatpush2.bf16.msra.mxu0 0
      %1949 = vmatprep.subr.bf16.mxu0 0
      %1950 = vmatpush2.bf16.msra.mxu0 0
      %1951 = vmatprep.subr.bf16.mxu0 0
      %1952 = vmatpush2.bf16.msra.mxu0 0
      %1953 = vmatprep.subr.bf16.mxu0 0
      %1954 = vmatpush2.bf16.msra.mxu0 0
      %1955 = vmatprep.subr.bf16.mxu0 0
      %1956 = vmatpush2.bf16.msra.mxu0 0
      %1957 = vmatprep.subr.bf16.mxu0 0
      %1958 = vmatpush2.bf16.msra.mxu0 0
      %1959 = vmatprep.subr.bf16.mxu0 0
      %1960 = vmatpush2.bf16.msra.mxu0 0
      %1961 = vmatprep.mubr.bf16.mxu0 0
      %1962 = vmatmul.mubr.bf16.gmra.mxu0 %v1530
      %v1963 = vpop.f32.mrf.mxu0
      %v1964 = vadd.f32 %v1803, %v1963
      %v1965 = vpop.f32.mrf.mxu0
      %v1966 = vpop.f32.mrf.mxu0
      %v1967 = vadd.f32 %v1806, %v1966
      %v1968 = vpop.f32.mrf.mxu0
      %1969 = vmatprep.mubr.bf16.mxu0 0
      %1970 = vmatmul.mubr.bf16.gmra.mxu0 %v1533
      %v1971 = vpop.f32.mrf.mxu0
      %v1972 = vadd.f32 %v1811, %v1971
      %v1973 = vpop.f32.mrf.mxu0
      %v1974 = vpop.f32.mrf.mxu0
      %v1975 = vadd.f32 %v1814, %v1974
      %v1976 = vpop.f32.mrf.mxu0
      %1977 = vmatprep.mubr.bf16.mxu0 0
      %1978 = vmatmul.mubr.bf16.gmra.mxu0 %v1536
      %v1979 = vpop.f32.mrf.mxu0
      %v1980 = vadd.f32 %v1819, %v1979
      %v1981 = vpop.f32.mrf.mxu0
      %v1982 = vpop.f32.mrf.mxu0
      %v1983 = vadd.f32 %v1822, %v1982
      %v1984 = vpop.f32.mrf.mxu0
      %1985 = vmatprep.mubr.bf16.mxu0 0
      %1986 = vmatmul.mubr.bf16.gmra.mxu0 %v1539
      %v1987 = vpop.f32.mrf.mxu0
      %v1988 = vadd.f32 %v1827, %v1987
      %v1989 = vpop.f32.mrf.mxu0
      %v1990 = vpop.f32.mrf.mxu0
      %v1991 = vadd.f32 %v1830, %v1990
      %v1992 = vpop.f32.mrf.mxu0
      %1993 = vmatprep.mubr.bf16.mxu0 0
      %1994 = vmatmul.mubr.bf16.gmra.mxu0 %v1542
      %v1995 = vpop.f32.mrf.mxu0
      %v1996 = vadd.f32 %v1835, %v1995
      %v1997 = vpop.f32.mrf.mxu0
      %v1998 = vpop.f32.mrf.mxu0
      %v1999 = vadd.f32 %v1838, %v1998
      %v2000 = vpop.f32.mrf.mxu0
      %2001 = vmatprep.mubr.bf16.mxu0 0
      %2002 = vmatmul.mubr.bf16.gmra.mxu0 %v1545
      %v2003 = vpop.f32.mrf.mxu0
      %v2004 = vadd.f32 %v1843, %v2003
      %v2005 = vpop.f32.mrf.mxu0
      %v2006 = vpop.f32.mrf.mxu0
      %v2007 = vadd.f32 %v1846, %v2006
      %v2008 = vpop.f32.mrf.mxu0
      %2009 = vmatprep.mubr.bf16.mxu0 0
      %2010 = vmatmul.mubr.bf16.gmra.mxu0 %v1548
      %v2011 = vpop.f32.mrf.mxu0
      %v2012 = vadd.f32 %v1851, %v2011
      %v2013 = vpop.f32.mrf.mxu0
      %v2014 = vpop.f32.mrf.mxu0
      %v2015 = vadd.f32 %v1854, %v2014
      %v2016 = vpop.f32.mrf.mxu0
      %2017 = vmatprep.mubr.bf16.mxu0 0
      %2018 = vmatmul.mubr.bf16.gmra.mxu0 %v1551
      %v2019 = vpop.f32.mrf.mxu0
      %v2020 = vadd.f32 %v1859, %v2019
      %v2021 = vpop.f32.mrf.mxu0
      %v2022 = vpop.f32.mrf.mxu0
      %v2023 = vadd.f32 %v1862, %v2022
      %v2024 = vpop.f32.mrf.mxu0
      %2025 = vmatprep.mubr.bf16.mxu0 0
      %2026 = vmatmul.mubr.bf16.gmra.mxu0 %v1554
      %v2027 = vpop.f32.mrf.mxu0
      %v2028 = vadd.f32 %v1867, %v2027
      %v2029 = vpop.f32.mrf.mxu0
      %v2030 = vpop.f32.mrf.mxu0
      %v2031 = vadd.f32 %v1870, %v2030
      %v2032 = vpop.f32.mrf.mxu0
      %2033 = vmatprep.mubr.bf16.mxu0 0
      %2034 = vmatmul.mubr.bf16.gmra.mxu0 %v1557
      %v2035 = vpop.f32.mrf.mxu0
      %v2036 = vadd.f32 %v1875, %v2035
      %v2037 = vpop.f32.mrf.mxu0
      %v2038 = vpop.f32.mrf.mxu0
      %v2039 = vadd.f32 %v1878, %v2038
      %v2040 = vpop.f32.mrf.mxu0
      %2041 = vmatprep.mubr.bf16.mxu0 0
      %2042 = vmatmul.mubr.bf16.gmra.mxu0 %v1560
      %v2043 = vpop.f32.mrf.mxu0
      %v2044 = vadd.f32 %v1883, %v2043
      %v2045 = vpop.f32.mrf.mxu0
      %v2046 = vpop.f32.mrf.mxu0
      %v2047 = vadd.f32 %v1886, %v2046
      %v2048 = vpop.f32.mrf.mxu0
      %2049 = vmatprep.mubr.bf16.mxu0 0
      %2050 = vmatmul.mubr.bf16.gmra.mxu0 %v1563
      %v2051 = vpop.f32.mrf.mxu0
      %v2052 = vadd.f32 %v1891, %v2051
      %v2053 = vpop.f32.mrf.mxu0
      %v2054 = vpop.f32.mrf.mxu0
      %v2055 = vadd.f32 %v1894, %v2054
      %v2056 = vpop.f32.mrf.mxu0
      %2057 = vmatprep.mubr.bf16.mxu0 0
      %2058 = vmatmul.mubr.bf16.gmra.mxu0 %v1566
      %v2059 = vpop.f32.mrf.mxu0
      %v2060 = vadd.f32 %v1899, %v2059
      %v2061 = vpop.f32.mrf.mxu0
      %v2062 = vpop.f32.mrf.mxu0
      %v2063 = vadd.f32 %v1902, %v2062
      %v2064 = vpop.f32.mrf.mxu0
      %2065 = vmatprep.mubr.bf16.mxu0 0
      %2066 = vmatmul.mubr.bf16.gmra.mxu0 %v1569
      %v2067 = vpop.f32.mrf.mxu0
      %v2068 = vadd.f32 %v1907, %v2067
      %v2069 = vpop.f32.mrf.mxu0
      %v2070 = vpop.f32.mrf.mxu0
      %v2071 = vadd.f32 %v1910, %v2070
      %v2072 = vpop.f32.mrf.mxu0
      %2073 = vmatprep.mubr.bf16.mxu0 0
      %2074 = vmatmul.mubr.bf16.gmra.mxu0 %v1572
      %v2075 = vpop.f32.mrf.mxu0
      %v2076 = vadd.f32 %v1915, %v2075
      %v2077 = vpop.f32.mrf.mxu0
      %v2078 = vpop.f32.mrf.mxu0
      %v2079 = vadd.f32 %v1918, %v2078
      %v2080 = vpop.f32.mrf.mxu0
      %2081 = vmatprep.mubr.bf16.mxu0 0
      %2082 = vmatmul.mubr.bf16.gmra.mxu0 %v1575
      %v2083 = vpop.f32.mrf.mxu0
      %v2084 = vadd.f32 %v1923, %v2083
      %v2085 = vpop.f32.mrf.mxu0
      %v2086 = vpop.f32.mrf.mxu0
      %v2087 = vadd.f32 %v1926, %v2086
      %v2088 = vpop.f32.mrf.mxu0
      %2089 = vdwg.mxu0
      %v2154 = vunpack.c.l.b16 %v1143
      %v2155 = vunpack.c.h.b16 %v1143
      %v2156 = vunpack.c.l.b16 %v1144
      %v2157 = vunpack.c.l.b16 %v1145
      %v2158 = vunpack.c.h.b16 %v1145
      %v2159 = vunpack.c.l.b16 %v1146
      %v2160 = vunpack.c.l.b16 %v1147
      %v2161 = vunpack.c.h.b16 %v1147
      %v2162 = vunpack.c.l.b16 %v1148
      %v2163 = vunpack.c.l.b16 %v1149
      %v2164 = vunpack.c.h.b16 %v1149
      %v2165 = vunpack.c.l.b16 %v1150
      %v2166 = vunpack.c.l.b16 %v1151
      %v2167 = vunpack.c.h.b16 %v1151
      %v2168 = vunpack.c.l.b16 %v1152
      %v2169 = vunpack.c.l.b16 %v1153
      %v2170 = vunpack.c.h.b16 %v1153
      %v2171 = vunpack.c.l.b16 %v1154
      %v2172 = vunpack.c.l.b16 %v1155
      %v2173 = vunpack.c.h.b16 %v1155
      %v2174 = vunpack.c.l.b16 %v1156
      %v2175 = vunpack.c.l.b16 %v1157
      %v2176 = vunpack.c.h.b16 %v1157
      %v2177 = vunpack.c.l.b16 %v1158
      %v2178 = vunpack.c.l.b16 %v1159
      %v2179 = vunpack.c.h.b16 %v1159
      %v2180 = vunpack.c.l.b16 %v1160
      %v2181 = vunpack.c.l.b16 %v1161
      %v2182 = vunpack.c.h.b16 %v1161
      %v2183 = vunpack.c.l.b16 %v1162
      %v2184 = vunpack.c.l.b16 %v1163
      %v2185 = vunpack.c.h.b16 %v1163
      %v2186 = vunpack.c.l.b16 %v1164
      %v2187 = vunpack.c.l.b16 %v1165
      %v2188 = vunpack.c.h.b16 %v1165
      %v2189 = vunpack.c.l.b16 %v1166
      %v2190 = vunpack.c.l.b16 %v1167
      %v2191 = vunpack.c.h.b16 %v1167
      %v2192 = vunpack.c.l.b16 %v1168
      %v2193 = vunpack.c.l.b16 %v1169
      %v2194 = vunpack.c.h.b16 %v1169
      %v2195 = vunpack.c.l.b16 %v1170
      %v2196 = vunpack.c.l.b16 %v1171
      %v2197 = vunpack.c.h.b16 %v1171
      %v2198 = vunpack.c.l.b16 %v1172
      %v2199 = vunpack.c.l.b16 %v1173
      %v2200 = vunpack.c.h.b16 %v1173
      %v2201 = vunpack.c.l.b16 %v1174
      %v2202 = vunpack.c.l.b16 %v1175
      %v2203 = vunpack.c.h.b16 %v1175
      %v2204 = vunpack.c.l.b16 %v1176
      %v2205 = vunpack.c.l.b16 %v1177
      %v2206 = vunpack.c.h.b16 %v1177
      %v2207 = vunpack.c.l.b16 %v1178
      %v2208 = vunpack.c.l.b16 %v1179
      %v2209 = vunpack.c.h.b16 %v1179
      %v2210 = vunpack.c.l.b16 %v1180
      %v2211 = vunpack.c.l.b16 %v1181
      %v2212 = vunpack.c.h.b16 %v1181
      %v2213 = vunpack.c.l.b16 %v1182
      %v2214 = vunpack.c.l.b16 %v1183
      %v2215 = vunpack.c.h.b16 %v1183
      %v2216 = vunpack.c.l.b16 %v1184
      %v2217 = vunpack.c.l.b16 %v1185
      %v2218 = vunpack.c.h.b16 %v1185
      %v2219 = vunpack.c.l.b16 %v1186
      %v2220 = vunpack.c.l.b16 %v1187
      %v2221 = vunpack.c.h.b16 %v1187
      %v2222 = vunpack.c.l.b16 %v1188
      %v2223 = vunpack.c.l.b16 %v1189
      %v2224 = vunpack.c.h.b16 %v1189
      %v2225 = vunpack.c.l.b16 %v1190
      %v2226 = vunpack.c.l.b16 %v1191
      %v2227 = vunpack.c.h.b16 %v1191
      %v2228 = vunpack.c.l.b16 %v1192
      %v2229 = vunpack.c.l.b16 %v1193
      %v2230 = vunpack.c.h.b16 %v1193
      %v2231 = vunpack.c.l.b16 %v1194
      %v2232 = vunpack.c.l.b16 %v1195
      %v2233 = vunpack.c.h.b16 %v1195
      %v2234 = vunpack.c.l.b16 %v1196
      %v2235 = vunpack.c.l.b16 %v1197
      %v2236 = vunpack.c.h.b16 %v1197
      %v2237 = vunpack.c.l.b16 %v1198
      %v2238 = vunpack.c.l.b16 %v1199
      %v2239 = vunpack.c.h.b16 %v1199
      %v2240 = vunpack.c.l.b16 %v1200
      %v2241 = vunpack.c.l.b16 %v1201
      %v2242 = vunpack.c.h.b16 %v1201
      %v2243 = vunpack.c.l.b16 %v1202
      %v2244 = vunpack.c.l.b16 %v1203
      %v2245 = vunpack.c.h.b16 %v1203
      %v2246 = vunpack.c.l.b16 %v1204
      %v2247 = vunpack.c.l.b16 %v1205
      %v2248 = vunpack.c.h.b16 %v1205
      %v2249 = vunpack.c.l.b16 %v1206
      %v2250 = vpack.c.b16 %v2157, %v2154
      %v2251 = vpack.c.b16 %v2158, %v2155
      %v2252 = vpack.c.b16 %v2159, %v2156
      %v2253 = vpack.c.b16 %v2163, %v2160
      %v2254 = vpack.c.b16 %v2164, %v2161
      %v2255 = vpack.c.b16 %v2165, %v2162
      %v2256 = vpack.c.b16 %v2169, %v2166
      %v2257 = vpack.c.b16 %v2170, %v2167
      %v2258 = vpack.c.b16 %v2171, %v2168
      %v2259 = vpack.c.b16 %v2175, %v2172
      %v2260 = vpack.c.b16 %v2176, %v2173
      %v2261 = vpack.c.b16 %v2177, %v2174
      %v2262 = vpack.c.b16 %v2181, %v2178
      %v2263 = vpack.c.b16 %v2182, %v2179
      %v2264 = vpack.c.b16 %v2183, %v2180
      %v2265 = vpack.c.b16 %v2187, %v2184
      %v2266 = vpack.c.b16 %v2188, %v2185
      %v2267 = vpack.c.b16 %v2189, %v2186
      %v2268 = vpack.c.b16 %v2193, %v2190
      %v2269 = vpack.c.b16 %v2194, %v2191
      %v2270 = vpack.c.b16 %v2195, %v2192
      %v2271 = vpack.c.b16 %v2199, %v2196
      %v2272 = vpack.c.b16 %v2200, %v2197
      %v2273 = vpack.c.b16 %v2201, %v2198
      %v2274 = vpack.c.b16 %v2205, %v2202
      %v2275 = vpack.c.b16 %v2206, %v2203
      %v2276 = vpack.c.b16 %v2207, %v2204
      %v2277 = vpack.c.b16 %v2211, %v2208
      %v2278 = vpack.c.b16 %v2212, %v2209
      %v2279 = vpack.c.b16 %v2213, %v2210
      %v2280 = vpack.c.b16 %v2217, %v2214
      %v2281 = vpack.c.b16 %v2218, %v2215
      %v2282 = vpack.c.b16 %v2219, %v2216
      %v2283 = vpack.c.b16 %v2223, %v2220
      %v2284 = vpack.c.b16 %v2224, %v2221
      %v2285 = vpack.c.b16 %v2225, %v2222
      %v2286 = vpack.c.b16 %v2229, %v2226
      %v2287 = vpack.c.b16 %v2230, %v2227
      %v2288 = vpack.c.b16 %v2231, %v2228
      %v2289 = vpack.c.b16 %v2235, %v2232
      %v2290 = vpack.c.b16 %v2236, %v2233
      %v2291 = vpack.c.b16 %v2237, %v2234
      %v2292 = vpack.c.b16 %v2241, %v2238
      %v2293 = vpack.c.b16 %v2242, %v2239
      %v2294 = vpack.c.b16 %v2243, %v2240
      %v2295 = vpack.c.b16 %v2247, %v2244
      %v2296 = vpack.c.b16 %v2248, %v2245
      %v2297 = vpack.c.b16 %v2249, %v2246
      %v2394 = vunpack.c.l.b16 %v1207
      %v2395 = vunpack.c.l.b16 %v1208
      %v2396 = vunpack.c.l.b16 %v1209
      %v2397 = vunpack.c.l.b16 %v1210
      %v2398 = vunpack.c.l.b16 %v1211
      %v2399 = vunpack.c.l.b16 %v1212
      %v2400 = vunpack.c.l.b16 %v1213
      %v2401 = vunpack.c.l.b16 %v1214
      %v2402 = vunpack.c.l.b16 %v1215
      %v2403 = vunpack.c.l.b16 %v1216
      %v2404 = vunpack.c.l.b16 %v1217
      %v2405 = vunpack.c.l.b16 %v1218
      %v2406 = vunpack.c.l.b16 %v1219
      %v2407 = vunpack.c.l.b16 %v1220
      %v2408 = vunpack.c.l.b16 %v1221
      %v2409 = vunpack.c.l.b16 %v1222
      %v2410 = vunpack.c.l.b16 %v1223
      %v2411 = vunpack.c.l.b16 %v1224
      %v2412 = vunpack.c.l.b16 %v1225
      %v2413 = vunpack.c.l.b16 %v1226
      %v2414 = vunpack.c.l.b16 %v1227
      %v2415 = vunpack.c.l.b16 %v1228
      %v2416 = vunpack.c.l.b16 %v1229
      %v2417 = vunpack.c.l.b16 %v1230
      %v2418 = vunpack.c.l.b16 %v1231
      %v2419 = vunpack.c.l.b16 %v1232
      %v2420 = vunpack.c.l.b16 %v1233
      %v2421 = vunpack.c.l.b16 %v1234
      %v2422 = vunpack.c.l.b16 %v1235
      %v2423 = vunpack.c.l.b16 %v1236
      %v2424 = vunpack.c.l.b16 %v1237
      %v2425 = vunpack.c.l.b16 %v1238
      %v2426 = vunpack.c.l.b16 %v1239
      %v2427 = vunpack.c.l.b16 %v1240
      %v2428 = vunpack.c.l.b16 %v1241
      %v2429 = vunpack.c.l.b16 %v1242
      %v2430 = vunpack.c.l.b16 %v1243
      %v2431 = vunpack.c.l.b16 %v1244
      %v2432 = vunpack.c.l.b16 %v1245
      %v2433 = vunpack.c.l.b16 %v1246
      %v2434 = vunpack.c.l.b16 %v1247
      %v2435 = vunpack.c.l.b16 %v1248
      %v2436 = vunpack.c.l.b16 %v1249
      %v2437 = vunpack.c.l.b16 %v1250
      %v2438 = vunpack.c.l.b16 %v1251
      %v2439 = vunpack.c.l.b16 %v1252
      %v2440 = vunpack.c.l.b16 %v1253
      %v2441 = vunpack.c.l.b16 %v1254
      %v2442 = vpack.c.b16 %v2395, %v2394
      %v2443 = vpack.c.b16 %v2397, %v2396
      %v2444 = vpack.c.b16 %v2399, %v2398
      %v2445 = vpack.c.b16 %v2401, %v2400
      %v2446 = vpack.c.b16 %v2403, %v2402
      %v2447 = vpack.c.b16 %v2405, %v2404
      %v2448 = vpack.c.b16 %v2407, %v2406
      %v2449 = vpack.c.b16 %v2409, %v2408
      %v2450 = vpack.c.b16 %v2411, %v2410
      %v2451 = vpack.c.b16 %v2413, %v2412
      %v2452 = vpack.c.b16 %v2415, %v2414
      %v2453 = vpack.c.b16 %v2417, %v2416
      %v2454 = vpack.c.b16 %v2419, %v2418
      %v2455 = vpack.c.b16 %v2421, %v2420
      %v2456 = vpack.c.b16 %v2423, %v2422
      %v2457 = vpack.c.b16 %v2425, %v2424
      %v2458 = vpack.c.b16 %v2427, %v2426
      %v2459 = vpack.c.b16 %v2429, %v2428
      %v2460 = vpack.c.b16 %v2431, %v2430
      %v2461 = vpack.c.b16 %v2433, %v2432
      %v2462 = vpack.c.b16 %v2435, %v2434
      %v2463 = vpack.c.b16 %v2437, %v2436
      %v2464 = vpack.c.b16 %v2439, %v2438
      %v2465 = vpack.c.b16 %v2441, %v2440
      %2490 = vmatprep.subr.bf16.mxu0 0
      %2491 = vmatpush1.bf16.msra.mxu0 %v2449
      %2492 = vmatprep.subr.bf16.mxu0 0
      %2493 = vmatpush1.bf16.msra.mxu0 %v2448
      %2494 = vmatprep.subr.bf16.mxu0 0
      %2495 = vmatpush1.bf16.msra.mxu0 %v2447
      %2496 = vmatprep.subr.bf16.mxu0 0
      %2497 = vmatpush1.bf16.msra.mxu0 %v2446
      %2498 = vmatprep.subr.bf16.mxu0 0
      %2499 = vmatpush1.bf16.msra.mxu0 %v2445
      %2500 = vmatprep.subr.bf16.mxu0 0
      %2501 = vmatpush1.bf16.msra.mxu0 %v2444
      %2502 = vmatprep.subr.bf16.mxu0 0
      %2503 = vmatpush1.bf16.msra.mxu0 %v2443
      %2504 = vmatprep.subr.bf16.mxu0 0
      %2505 = vmatpush1.bf16.msra.mxu0 %v2442
      %2506 = vmatprep.subr.bf16.mxu0 0
      %2507 = vmatpush2.bf16.msra.mxu0 %v2457
      %2508 = vmatprep.subr.bf16.mxu0 0
      %2509 = vmatpush2.bf16.msra.mxu0 %v2456
      %2510 = vmatprep.subr.bf16.mxu0 0
      %2511 = vmatpush2.bf16.msra.mxu0 %v2455
      %2512 = vmatprep.subr.bf16.mxu0 0
      %2513 = vmatpush2.bf16.msra.mxu0 %v2454
      %2514 = vmatprep.subr.bf16.mxu0 0
      %2515 = vmatpush2.bf16.msra.mxu0 %v2453
      %2516 = vmatprep.subr.bf16.mxu0 0
      %2517 = vmatpush2.bf16.msra.mxu0 %v2452
      %2518 = vmatprep.subr.bf16.mxu0 0
      %2519 = vmatpush2.bf16.msra.mxu0 %v2451
      %2520 = vmatprep.subr.bf16.mxu0 0
      %2521 = vmatpush2.bf16.msra.mxu0 %v2450
      %2522 = vmatprep.mubr.bf16.mxu0 %v2251
      %2523 = vmatmul.mubr.bf16.gmra.mxu0 %v2250
      %v2524 = vpop.f32.mrf.mxu0
      %v2525 = vadd.f32 %v1964, %v2524
      %v2526 = vpop.f32.mrf.mxu0
      %v2527 = vpop.f32.mrf.mxu0
      %v2528 = vadd.f32 %v1967, %v2527
      %v2529 = vpop.f32.mrf.mxu0
      %2530 = vmatprep.mubr.bf16.mxu0 %v2254
      %2531 = vmatmul.mubr.bf16.gmra.mxu0 %v2253
      %v2532 = vpop.f32.mrf.mxu0
      %v2533 = vadd.f32 %v1972, %v2532
      %v2534 = vpop.f32.mrf.mxu0
      %v2535 = vpop.f32.mrf.mxu0
      %v2536 = vadd.f32 %v1975, %v2535
      %v2537 = vpop.f32.mrf.mxu0
      %2538 = vmatprep.mubr.bf16.mxu0 %v2257
      %2539 = vmatmul.mubr.bf16.gmra.mxu0 %v2256
      %v2540 = vpop.f32.mrf.mxu0
      %v2541 = vadd.f32 %v1980, %v2540
      %v2542 = vpop.f32.mrf.mxu0
      %v2543 = vpop.f32.mrf.mxu0
      %v2544 = vadd.f32 %v1983, %v2543
      %v2545 = vpop.f32.mrf.mxu0
      %2546 = vmatprep.mubr.bf16.mxu0 %v2260
      %2547 = vmatmul.mubr.bf16.gmra.mxu0 %v2259
      %v2548 = vpop.f32.mrf.mxu0
      %v2549 = vadd.f32 %v1988, %v2548
      %v2550 = vpop.f32.mrf.mxu0
      %v2551 = vpop.f32.mrf.mxu0
      %v2552 = vadd.f32 %v1991, %v2551
      %v2553 = vpop.f32.mrf.mxu0
      %2554 = vmatprep.mubr.bf16.mxu0 %v2263
      %2555 = vmatmul.mubr.bf16.gmra.mxu0 %v2262
      %v2556 = vpop.f32.mrf.mxu0
      %v2557 = vadd.f32 %v1996, %v2556
      %v2558 = vpop.f32.mrf.mxu0
      %v2559 = vpop.f32.mrf.mxu0
      %v2560 = vadd.f32 %v1999, %v2559
      %v2561 = vpop.f32.mrf.mxu0
      %2562 = vmatprep.mubr.bf16.mxu0 %v2266
      %2563 = vmatmul.mubr.bf16.gmra.mxu0 %v2265
      %v2564 = vpop.f32.mrf.mxu0
      %v2565 = vadd.f32 %v2004, %v2564
      %v2566 = vpop.f32.mrf.mxu0
      %v2567 = vpop.f32.mrf.mxu0
      %v2568 = vadd.f32 %v2007, %v2567
      %v2569 = vpop.f32.mrf.mxu0
      %2570 = vmatprep.mubr.bf16.mxu0 %v2269
      %2571 = vmatmul.mubr.bf16.gmra.mxu0 %v2268
      %v2572 = vpop.f32.mrf.mxu0
      %v2573 = vadd.f32 %v2012, %v2572
      %v2574 = vpop.f32.mrf.mxu0
      %v2575 = vpop.f32.mrf.mxu0
      %v2576 = vadd.f32 %v2015, %v2575
      %v2577 = vpop.f32.mrf.mxu0
      %2578 = vmatprep.mubr.bf16.mxu0 %v2272
      %2579 = vmatmul.mubr.bf16.gmra.mxu0 %v2271
      %v2580 = vpop.f32.mrf.mxu0
      %v2581 = vadd.f32 %v2020, %v2580
      %v2582 = vpop.f32.mrf.mxu0
      %v2583 = vpop.f32.mrf.mxu0
      %v2584 = vadd.f32 %v2023, %v2583
      %v2585 = vpop.f32.mrf.mxu0
      %2586 = vmatprep.mubr.bf16.mxu0 %v2275
      %2587 = vmatmul.mubr.bf16.gmra.mxu0 %v2274
      %v2588 = vpop.f32.mrf.mxu0
      %v2589 = vadd.f32 %v2028, %v2588
      %v2590 = vpop.f32.mrf.mxu0
      %v2591 = vpop.f32.mrf.mxu0
      %v2592 = vadd.f32 %v2031, %v2591
      %v2593 = vpop.f32.mrf.mxu0
      %2594 = vmatprep.mubr.bf16.mxu0 %v2278
      %2595 = vmatmul.mubr.bf16.gmra.mxu0 %v2277
      %v2596 = vpop.f32.mrf.mxu0
      %v2597 = vadd.f32 %v2036, %v2596
      %v2598 = vpop.f32.mrf.mxu0
      %v2599 = vpop.f32.mrf.mxu0
      %v2600 = vadd.f32 %v2039, %v2599
      %v2601 = vpop.f32.mrf.mxu0
      %2602 = vmatprep.mubr.bf16.mxu0 %v2281
      %2603 = vmatmul.mubr.bf16.gmra.mxu0 %v2280
      %v2604 = vpop.f32.mrf.mxu0
      %v2605 = vadd.f32 %v2044, %v2604
      %v2606 = vpop.f32.mrf.mxu0
      %v2607 = vpop.f32.mrf.mxu0
      %v2608 = vadd.f32 %v2047, %v2607
      %v2609 = vpop.f32.mrf.mxu0
      %2610 = vmatprep.mubr.bf16.mxu0 %v2284
      %2611 = vmatmul.mubr.bf16.gmra.mxu0 %v2283
      %v2612 = vpop.f32.mrf.mxu0
      %v2613 = vadd.f32 %v2052, %v2612
      %v2614 = vpop.f32.mrf.mxu0
      %v2615 = vpop.f32.mrf.mxu0
      %v2616 = vadd.f32 %v2055, %v2615
      %v2617 = vpop.f32.mrf.mxu0
      %2618 = vmatprep.mubr.bf16.mxu0 %v2287
      %2619 = vmatmul.mubr.bf16.gmra.mxu0 %v2286
      %v2620 = vpop.f32.mrf.mxu0
      %v2621 = vadd.f32 %v2060, %v2620
      %v2622 = vpop.f32.mrf.mxu0
      %v2623 = vpop.f32.mrf.mxu0
      %v2624 = vadd.f32 %v2063, %v2623
      %v2625 = vpop.f32.mrf.mxu0
      %2626 = vmatprep.mubr.bf16.mxu0 %v2290
      %2627 = vmatmul.mubr.bf16.gmra.mxu0 %v2289
      %v2628 = vpop.f32.mrf.mxu0
      %v2629 = vadd.f32 %v2068, %v2628
      %v2630 = vpop.f32.mrf.mxu0
      %v2631 = vpop.f32.mrf.mxu0
      %v2632 = vadd.f32 %v2071, %v2631
      %v2633 = vpop.f32.mrf.mxu0
      %2634 = vmatprep.mubr.bf16.mxu0 %v2293
      %2635 = vmatmul.mubr.bf16.gmra.mxu0 %v2292
      %v2636 = vpop.f32.mrf.mxu0
      %v2637 = vadd.f32 %v2076, %v2636
      %v2638 = vpop.f32.mrf.mxu0
      %v2639 = vpop.f32.mrf.mxu0
      %v2640 = vadd.f32 %v2079, %v2639
      %v2641 = vpop.f32.mrf.mxu0
      %2642 = vmatprep.mubr.bf16.mxu0 %v2296
      %2643 = vmatmul.mubr.bf16.gmra.mxu0 %v2295
      %v2644 = vpop.f32.mrf.mxu0
      %v2645 = vadd.f32 %v2084, %v2644
      %v2646 = vpop.f32.mrf.mxu0
      %v2647 = vpop.f32.mrf.mxu0
      %v2648 = vadd.f32 %v2087, %v2647
      %v2649 = vpop.f32.mrf.mxu0
      %2650 = vdwg.mxu0
      %2651 = vmatprep.subr.bf16.mxu0 0
      %2652 = vmatpush1.bf16.msra.mxu0 %v2465
      %2653 = vmatprep.subr.bf16.mxu0 0
      %2654 = vmatpush1.bf16.msra.mxu0 %v2464
      %2655 = vmatprep.subr.bf16.mxu0 0
      %2656 = vmatpush1.bf16.msra.mxu0 %v2463
      %2657 = vmatprep.subr.bf16.mxu0 0
      %2658 = vmatpush1.bf16.msra.mxu0 %v2462
      %2659 = vmatprep.subr.bf16.mxu0 0
      %2660 = vmatpush1.bf16.msra.mxu0 %v2461
      %2661 = vmatprep.subr.bf16.mxu0 0
      %2662 = vmatpush1.bf16.msra.mxu0 %v2460
      %2663 = vmatprep.subr.bf16.mxu0 0
      %2664 = vmatpush1.bf16.msra.mxu0 %v2459
      %2665 = vmatprep.subr.bf16.mxu0 0
      %2666 = vmatpush1.bf16.msra.mxu0 %v2458
      %2667 = vmatprep.subr.bf16.mxu0 0
      %2668 = vmatpush2.bf16.msra.mxu0 0
      %2669 = vmatprep.subr.bf16.mxu0 0
      %2670 = vmatpush2.bf16.msra.mxu0 0
      %2671 = vmatprep.subr.bf16.mxu0 0
      %2672 = vmatpush2.bf16.msra.mxu0 0
      %2673 = vmatprep.subr.bf16.mxu0 0
      %2674 = vmatpush2.bf16.msra.mxu0 0
      %2675 = vmatprep.subr.bf16.mxu0 0
      %2676 = vmatpush2.bf16.msra.mxu0 0
      %2677 = vmatprep.subr.bf16.mxu0 0
      %2678 = vmatpush2.bf16.msra.mxu0 0
      %2679 = vmatprep.subr.bf16.mxu0 0
      %2680 = vmatpush2.bf16.msra.mxu0 0
      %2681 = vmatprep.subr.bf16.mxu0 0
      %2682 = vmatpush2.bf16.msra.mxu0 0
      %2683 = vmatprep.mubr.bf16.mxu0 0
      %2684 = vmatmul.mubr.bf16.gmra.mxu0 %v2252
      %v2685 = vpop.f32.mrf.mxu0
      %v2686 = vadd.f32 %v2525, %v2685
      %v2687 = vpop.f32.mrf.mxu0
      %v2688 = vpop.f32.mrf.mxu0
      %v2689 = vadd.f32 %v2528, %v2688
      %v2690 = vpop.f32.mrf.mxu0
      %2691 = vmatprep.mubr.bf16.mxu0 0
      %2692 = vmatmul.mubr.bf16.gmra.mxu0 %v2255
      %v2693 = vpop.f32.mrf.mxu0
      %v2694 = vadd.f32 %v2533, %v2693
      %v2695 = vpop.f32.mrf.mxu0
      %v2696 = vpop.f32.mrf.mxu0
      %v2697 = vadd.f32 %v2536, %v2696
      %v2698 = vpop.f32.mrf.mxu0
      %2699 = vmatprep.mubr.bf16.mxu0 0
      %2700 = vmatmul.mubr.bf16.gmra.mxu0 %v2258
      %v2701 = vpop.f32.mrf.mxu0
      %v2702 = vadd.f32 %v2541, %v2701
      %v2703 = vpop.f32.mrf.mxu0
      %v2704 = vpop.f32.mrf.mxu0
      %v2705 = vadd.f32 %v2544, %v2704
      %v2706 = vpop.f32.mrf.mxu0
      %2707 = vmatprep.mubr.bf16.mxu0 0
      %2708 = vmatmul.mubr.bf16.gmra.mxu0 %v2261
      %v2709 = vpop.f32.mrf.mxu0
      %v2710 = vadd.f32 %v2549, %v2709
      %v2711 = vpop.f32.mrf.mxu0
      %v2712 = vpop.f32.mrf.mxu0
      %v2713 = vadd.f32 %v2552, %v2712
      %v2714 = vpop.f32.mrf.mxu0
      %2715 = vmatprep.mubr.bf16.mxu0 0
      %2716 = vmatmul.mubr.bf16.gmra.mxu0 %v2264
      %v2717 = vpop.f32.mrf.mxu0
      %v2718 = vadd.f32 %v2557, %v2717
      %v2719 = vpop.f32.mrf.mxu0
      %v2720 = vpop.f32.mrf.mxu0
      %v2721 = vadd.f32 %v2560, %v2720
      %v2722 = vpop.f32.mrf.mxu0
      %2723 = vmatprep.mubr.bf16.mxu0 0
      %2724 = vmatmul.mubr.bf16.gmra.mxu0 %v2267
      %v2725 = vpop.f32.mrf.mxu0
      %v2726 = vadd.f32 %v2565, %v2725
      %v2727 = vpop.f32.mrf.mxu0
      %v2728 = vpop.f32.mrf.mxu0
      %v2729 = vadd.f32 %v2568, %v2728
      %v2730 = vpop.f32.mrf.mxu0
      %2731 = vmatprep.mubr.bf16.mxu0 0
      %2732 = vmatmul.mubr.bf16.gmra.mxu0 %v2270
      %v2733 = vpop.f32.mrf.mxu0
      %v2734 = vadd.f32 %v2573, %v2733
      %v2735 = vpop.f32.mrf.mxu0
      %v2736 = vpop.f32.mrf.mxu0
      %v2737 = vadd.f32 %v2576, %v2736
      %v2738 = vpop.f32.mrf.mxu0
      %2739 = vmatprep.mubr.bf16.mxu0 0
      %2740 = vmatmul.mubr.bf16.gmra.mxu0 %v2273
      %v2741 = vpop.f32.mrf.mxu0
      %v2742 = vadd.f32 %v2581, %v2741
      %v2743 = vpop.f32.mrf.mxu0
      %v2744 = vpop.f32.mrf.mxu0
      %v2745 = vadd.f32 %v2584, %v2744
      %v2746 = vpop.f32.mrf.mxu0
      %2747 = vmatprep.mubr.bf16.mxu0 0
      %2748 = vmatmul.mubr.bf16.gmra.mxu0 %v2276
      %v2749 = vpop.f32.mrf.mxu0
      %v2750 = vadd.f32 %v2589, %v2749
      %v2751 = vpop.f32.mrf.mxu0
      %v2752 = vpop.f32.mrf.mxu0
      %v2753 = vadd.f32 %v2592, %v2752
      %v2754 = vpop.f32.mrf.mxu0
      %2755 = vmatprep.mubr.bf16.mxu0 0
      %2756 = vmatmul.mubr.bf16.gmra.mxu0 %v2279
      %v2757 = vpop.f32.mrf.mxu0
      %v2758 = vadd.f32 %v2597, %v2757
      %v2759 = vpop.f32.mrf.mxu0
      %v2760 = vpop.f32.mrf.mxu0
      %v2761 = vadd.f32 %v2600, %v2760
      %v2762 = vpop.f32.mrf.mxu0
      %2763 = vmatprep.mubr.bf16.mxu0 0
      %2764 = vmatmul.mubr.bf16.gmra.mxu0 %v2282
      %v2765 = vpop.f32.mrf.mxu0
      %v2766 = vadd.f32 %v2605, %v2765
      %v2767 = vpop.f32.mrf.mxu0
      %v2768 = vpop.f32.mrf.mxu0
      %v2769 = vadd.f32 %v2608, %v2768
      %v2770 = vpop.f32.mrf.mxu0
      %2771 = vmatprep.mubr.bf16.mxu0 0
      %2772 = vmatmul.mubr.bf16.gmra.mxu0 %v2285
      %v2773 = vpop.f32.mrf.mxu0
      %v2774 = vadd.f32 %v2613, %v2773
      %v2775 = vpop.f32.mrf.mxu0
      %v2776 = vpop.f32.mrf.mxu0
      %v2777 = vadd.f32 %v2616, %v2776
      %v2778 = vpop.f32.mrf.mxu0
      %2779 = vmatprep.mubr.bf16.mxu0 0
      %2780 = vmatmul.mubr.bf16.gmra.mxu0 %v2288
      %v2781 = vpop.f32.mrf.mxu0
      %v2782 = vadd.f32 %v2621, %v2781
      %v2783 = vpop.f32.mrf.mxu0
      %v2784 = vpop.f32.mrf.mxu0
      %v2785 = vadd.f32 %v2624, %v2784
      %v2786 = vpop.f32.mrf.mxu0
      %2787 = vmatprep.mubr.bf16.mxu0 0
      %2788 = vmatmul.mubr.bf16.gmra.mxu0 %v2291
      %v2789 = vpop.f32.mrf.mxu0
      %v2790 = vadd.f32 %v2629, %v2789
      %v2791 = vpop.f32.mrf.mxu0
      %v2792 = vpop.f32.mrf.mxu0
      %v2793 = vadd.f32 %v2632, %v2792
      %v2794 = vpop.f32.mrf.mxu0
      %2795 = vmatprep.mubr.bf16.mxu0 0
      %2796 = vmatmul.mubr.bf16.gmra.mxu0 %v2294
      %v2797 = vpop.f32.mrf.mxu0
      %v2798 = vadd.f32 %v2637, %v2797
      %v2799 = vpop.f32.mrf.mxu0
      %v2800 = vpop.f32.mrf.mxu0
      %v2801 = vadd.f32 %v2640, %v2800
      %v2802 = vpop.f32.mrf.mxu0
      %2803 = vmatprep.mubr.bf16.mxu0 0
      %2804 = vmatmul.mubr.bf16.gmra.mxu0 %v2297
      %v2805 = vpop.f32.mrf.mxu0
      %v2806 = vadd.f32 %v2645, %v2805
      %v2807 = vpop.f32.mrf.mxu0
      %v2808 = vpop.f32.mrf.mxu0
      %v2809 = vadd.f32 %v2648, %v2808
      %v2810 = vpop.f32.mrf.mxu0
      %2811 = vdwg.mxu0
      %s2812 = scalar_lea.vmem [#allocation2], 48
      %v2813 = vld [vmem:[%s2812] sm:$0xff]
      %v2814 = vld [vmem:[%s2812 + $0x8] sm:$0xf]
      %v2815 = vld [vmem:[%s2812 + $0xc] sm:$0xff]
      %v2816 = vld [vmem:[%s2812 + $0x14] sm:$0xf]
      %v2817 = vld [vmem:[%s2812 + $0x18] sm:$0xff]
      %v2818 = vld [vmem:[%s2812 + $0x20] sm:$0xf]
      %v2819 = vld [vmem:[%s2812 + $0x24] sm:$0xff]
      %v2820 = vld [vmem:[%s2812 + $0x2c] sm:$0xf]
      %v2821 = vld [vmem:[%s2812 + $0x30] sm:$0xff]
      %v2822 = vld [vmem:[%s2812 + $0x38] sm:$0xf]
      %v2823 = vld [vmem:[%s2812 + $0x3c] sm:$0xff]
      %v2824 = vld [vmem:[%s2812 + $0x44] sm:$0xf]
      %v2825 = vld [vmem:[%s2812 + $0x48] sm:$0xff]
      %v2826 = vld [vmem:[%s2812 + $0x50] sm:$0xf]
      %v2827 = vld [vmem:[%s2812 + $0x54] sm:$0xff]
      %v2828 = vld [vmem:[%s2812 + $0x5c] sm:$0xf]
      %v2829 = vld [vmem:[%s2812 + $0x60] sm:$0xff]
      %v2830 = vld [vmem:[%s2812 + $0x68] sm:$0xf]
      %v2831 = vld [vmem:[%s2812 + $0x6c] sm:$0xff]
      %v2832 = vld [vmem:[%s2812 + $0x74] sm:$0xf]
      %v2833 = vld [vmem:[%s2812 + $0x78] sm:$0xff]
      %v2834 = vld [vmem:[%s2812 + $0x80] sm:$0xf]
      %v2835 = vld [vmem:[%s2812 + $0x84] sm:$0xff]
      %v2836 = vld [vmem:[%s2812 + $0x8c] sm:$0xf]
      %v2837 = vld [vmem:[%s2812 + $0x90] sm:$0xff]
      %v2838 = vld [vmem:[%s2812 + $0x98] sm:$0xf]
      %v2839 = vld [vmem:[%s2812 + $0x9c] sm:$0xff]
      %v2840 = vld [vmem:[%s2812 + $0xa4] sm:$0xf]
      %v2841 = vld [vmem:[%s2812 + $0xa8] sm:$0xff]
      %v2842 = vld [vmem:[%s2812 + $0xb0] sm:$0xf]
      %v2843 = vld [vmem:[%s2812 + $0xb4] sm:$0xff]
      %v2844 = vld [vmem:[%s2812 + $0xbc] sm:$0xf]
      %v2845 = vld [vmem:[%s2812 + $0xc0] sm:$0xff]
      %v2846 = vld [vmem:[%s2812 + $0xc8] sm:$0xf]
      %v2847 = vld [vmem:[%s2812 + $0xcc] sm:$0xff]
      %v2848 = vld [vmem:[%s2812 + $0xd4] sm:$0xf]
      %v2849 = vld [vmem:[%s2812 + $0xd8] sm:$0xff]
      %v2850 = vld [vmem:[%s2812 + $0xe0] sm:$0xf]
      %v2851 = vld [vmem:[%s2812 + $0xe4] sm:$0xff]
      %v2852 = vld [vmem:[%s2812 + $0xec] sm:$0xf]
      %v2853 = vld [vmem:[%s2812 + $0xf0] sm:$0xff]
      %v2854 = vld [vmem:[%s2812 + $0xf8] sm:$0xf]
      %v2855 = vld [vmem:[%s2812 + $0xfc] sm:$0xff]
      %v2856 = vld [vmem:[%s2812 + $0x104] sm:$0xf]
      %v2857 = vld [vmem:[%s2812 + $0x108] sm:$0xff]
      %v2858 = vld [vmem:[%s2812 + $0x110] sm:$0xf]
      %v2859 = vld [vmem:[%s2812 + $0x114] sm:$0xff]
      %v2860 = vld [vmem:[%s2812 + $0x11c] sm:$0xf]
      %v2861 = vld [vmem:[%s2812 + $0x120] sm:$0xff]
      %v2862 = vld [vmem:[%s2812 + $0x128] sm:$0xf]
      %v2863 = vld [vmem:[%s2812 + $0x12c] sm:$0xff]
      %v2864 = vld [vmem:[%s2812 + $0x134] sm:$0xf]
      %v2865 = vld [vmem:[%s2812 + $0x138] sm:$0xff]
      %v2866 = vld [vmem:[%s2812 + $0x140] sm:$0xf]
      %v2867 = vld [vmem:[%s2812 + $0x144] sm:$0xff]
      %v2868 = vld [vmem:[%s2812 + $0x14c] sm:$0xf]
      %v2869 = vld [vmem:[%s2812 + $0x150] sm:$0xff]
      %v2870 = vld [vmem:[%s2812 + $0x158] sm:$0xf]
      %v2871 = vld [vmem:[%s2812 + $0x15c] sm:$0xff]
      %v2872 = vld [vmem:[%s2812 + $0x164] sm:$0xf]
      %v2873 = vld [vmem:[%s2812 + $0x168] sm:$0xff]
      %v2874 = vld [vmem:[%s2812 + $0x170] sm:$0xf]
      %v2875 = vld [vmem:[%s2812 + $0x174] sm:$0xff]
      %v2876 = vld [vmem:[%s2812 + $0x17c] sm:$0xf]
      %s2877 = scalar_lea.vmem %s1, 384
      %v2878 = vld [vmem:[%s2877] sm:$0xf]
      %v2879 = vld [vmem:[%s2877 + $0x4] sm:$0xf]
      %v2880 = vld [vmem:[%s2877 + $0x8] sm:$0xf]
      %v2881 = vld [vmem:[%s2877 + $0xc] sm:$0xf]
      %v2882 = vld [vmem:[%s2877 + $0x10] sm:$0xf]
      %v2883 = vld [vmem:[%s2877 + $0x14] sm:$0xf]
      %v2884 = vld [vmem:[%s2877 + $0x18] sm:$0xf]
      %v2885 = vld [vmem:[%s2877 + $0x1c] sm:$0xf]
      %v2886 = vld [vmem:[%s2877 + $0x20] sm:$0xf]
      %v2887 = vld [vmem:[%s2877 + $0x24] sm:$0xf]
      %v2888 = vld [vmem:[%s2877 + $0x28] sm:$0xf]
      %v2889 = vld [vmem:[%s2877 + $0x2c] sm:$0xf]
      %v2890 = vld [vmem:[%s2877 + $0x30] sm:$0xf]
      %v2891 = vld [vmem:[%s2877 + $0x34] sm:$0xf]
      %v2892 = vld [vmem:[%s2877 + $0x38] sm:$0xf]
      %v2893 = vld [vmem:[%s2877 + $0x3c] sm:$0xf]
      %v2894 = vld [vmem:[%s2877 + $0x40] sm:$0xf]
      %v2895 = vld [vmem:[%s2877 + $0x44] sm:$0xf]
      %v2896 = vld [vmem:[%s2877 + $0x48] sm:$0xf]
      %v2897 = vld [vmem:[%s2877 + $0x4c] sm:$0xf]
      %v2898 = vld [vmem:[%s2877 + $0x50] sm:$0xf]
      %v2899 = vld [vmem:[%s2877 + $0x54] sm:$0xf]
      %v2900 = vld [vmem:[%s2877 + $0x58] sm:$0xf]
      %v2901 = vld [vmem:[%s2877 + $0x5c] sm:$0xf]
      %v2902 = vld [vmem:[%s2877 + $0x60] sm:$0xf]
      %v2903 = vld [vmem:[%s2877 + $0x64] sm:$0xf]
      %v2904 = vld [vmem:[%s2877 + $0x68] sm:$0xf]
      %v2905 = vld [vmem:[%s2877 + $0x6c] sm:$0xf]
      %v2906 = vld [vmem:[%s2877 + $0x70] sm:$0xf]
      %v2907 = vld [vmem:[%s2877 + $0x74] sm:$0xf]
      %v2908 = vld [vmem:[%s2877 + $0x78] sm:$0xf]
      %v2909 = vld [vmem:[%s2877 + $0x7c] sm:$0xf]
      %v2910 = vld [vmem:[%s2877 + $0x80] sm:$0xf]
      %v2911 = vld [vmem:[%s2877 + $0x84] sm:$0xf]
      %v2912 = vld [vmem:[%s2877 + $0x88] sm:$0xf]
      %v2913 = vld [vmem:[%s2877 + $0x8c] sm:$0xf]
      %v2914 = vld [vmem:[%s2877 + $0x90] sm:$0xf]
      %v2915 = vld [vmem:[%s2877 + $0x94] sm:$0xf]
      %v2916 = vld [vmem:[%s2877 + $0x98] sm:$0xf]
      %v2917 = vld [vmem:[%s2877 + $0x9c] sm:$0xf]
      %v2918 = vld [vmem:[%s2877 + $0xa0] sm:$0xf]
      %v2919 = vld [vmem:[%s2877 + $0xa4] sm:$0xf]
      %v2920 = vld [vmem:[%s2877 + $0xa8] sm:$0xf]
      %v2921 = vld [vmem:[%s2877 + $0xac] sm:$0xf]
      %v2922 = vld [vmem:[%s2877 + $0xb0] sm:$0xf]
      %v2923 = vld [vmem:[%s2877 + $0xb4] sm:$0xf]
      %v2924 = vld [vmem:[%s2877 + $0xb8] sm:$0xf]
      %v2925 = vld [vmem:[%s2877 + $0xbc] sm:$0xf]
      %v2990 = vunpack.c.l.b16 %v2813
      %v2991 = vunpack.c.h.b16 %v2813
      %v2992 = vunpack.c.l.b16 %v2814
      %v2993 = vunpack.c.l.b16 %v2815
      %v2994 = vunpack.c.h.b16 %v2815
      %v2995 = vunpack.c.l.b16 %v2816
      %v2996 = vunpack.c.l.b16 %v2817
      %v2997 = vunpack.c.h.b16 %v2817
      %v2998 = vunpack.c.l.b16 %v2818
      %v2999 = vunpack.c.l.b16 %v2819
      %v3000 = vunpack.c.h.b16 %v2819
      %v3001 = vunpack.c.l.b16 %v2820
      %v3002 = vunpack.c.l.b16 %v2821
      %v3003 = vunpack.c.h.b16 %v2821
      %v3004 = vunpack.c.l.b16 %v2822
      %v3005 = vunpack.c.l.b16 %v2823
      %v3006 = vunpack.c.h.b16 %v2823
      %v3007 = vunpack.c.l.b16 %v2824
      %v3008 = vunpack.c.l.b16 %v2825
      %v3009 = vunpack.c.h.b16 %v2825
      %v3010 = vunpack.c.l.b16 %v2826
      %v3011 = vunpack.c.l.b16 %v2827
      %v3012 = vunpack.c.h.b16 %v2827
      %v3013 = vunpack.c.l.b16 %v2828
      %v3014 = vunpack.c.l.b16 %v2829
      %v3015 = vunpack.c.h.b16 %v2829
      %v3016 = vunpack.c.l.b16 %v2830
      %v3017 = vunpack.c.l.b16 %v2831
      %v3018 = vunpack.c.h.b16 %v2831
      %v3019 = vunpack.c.l.b16 %v2832
      %v3020 = vunpack.c.l.b16 %v2833
      %v3021 = vunpack.c.h.b16 %v2833
      %v3022 = vunpack.c.l.b16 %v2834
      %v3023 = vunpack.c.l.b16 %v2835
      %v3024 = vunpack.c.h.b16 %v2835
      %v3025 = vunpack.c.l.b16 %v2836
      %v3026 = vunpack.c.l.b16 %v2837
      %v3027 = vunpack.c.h.b16 %v2837
      %v3028 = vunpack.c.l.b16 %v2838
      %v3029 = vunpack.c.l.b16 %v2839
      %v3030 = vunpack.c.h.b16 %v2839
      %v3031 = vunpack.c.l.b16 %v2840
      %v3032 = vunpack.c.l.b16 %v2841
      %v3033 = vunpack.c.h.b16 %v2841
      %v3034 = vunpack.c.l.b16 %v2842
      %v3035 = vunpack.c.l.b16 %v2843
      %v3036 = vunpack.c.h.b16 %v2843
      %v3037 = vunpack.c.l.b16 %v2844
      %v3038 = vunpack.c.l.b16 %v2845
      %v3039 = vunpack.c.h.b16 %v2845
      %v3040 = vunpack.c.l.b16 %v2846
      %v3041 = vunpack.c.l.b16 %v2847
      %v3042 = vunpack.c.h.b16 %v2847
      %v3043 = vunpack.c.l.b16 %v2848
      %v3044 = vunpack.c.l.b16 %v2849
      %v3045 = vunpack.c.h.b16 %v2849
      %v3046 = vunpack.c.l.b16 %v2850
      %v3047 = vunpack.c.l.b16 %v2851
      %v3048 = vunpack.c.h.b16 %v2851
      %v3049 = vunpack.c.l.b16 %v2852
      %v3050 = vunpack.c.l.b16 %v2853
      %v3051 = vunpack.c.h.b16 %v2853
      %v3052 = vunpack.c.l.b16 %v2854
      %v3053 = vunpack.c.l.b16 %v2855
      %v3054 = vunpack.c.h.b16 %v2855
      %v3055 = vunpack.c.l.b16 %v2856
      %v3056 = vunpack.c.l.b16 %v2857
      %v3057 = vunpack.c.h.b16 %v2857
      %v3058 = vunpack.c.l.b16 %v2858
      %v3059 = vunpack.c.l.b16 %v2859
      %v3060 = vunpack.c.h.b16 %v2859
      %v3061 = vunpack.c.l.b16 %v2860
      %v3062 = vunpack.c.l.b16 %v2861
      %v3063 = vunpack.c.h.b16 %v2861
      %v3064 = vunpack.c.l.b16 %v2862
      %v3065 = vunpack.c.l.b16 %v2863
      %v3066 = vunpack.c.h.b16 %v2863
      %v3067 = vunpack.c.l.b16 %v2864
      %v3068 = vunpack.c.l.b16 %v2865
      %v3069 = vunpack.c.h.b16 %v2865
      %v3070 = vunpack.c.l.b16 %v2866
      %v3071 = vunpack.c.l.b16 %v2867
      %v3072 = vunpack.c.h.b16 %v2867
      %v3073 = vunpack.c.l.b16 %v2868
      %v3074 = vunpack.c.l.b16 %v2869
      %v3075 = vunpack.c.h.b16 %v2869
      %v3076 = vunpack.c.l.b16 %v2870
      %v3077 = vunpack.c.l.b16 %v2871
      %v3078 = vunpack.c.h.b16 %v2871
      %v3079 = vunpack.c.l.b16 %v2872
      %v3080 = vunpack.c.l.b16 %v2873
      %v3081 = vunpack.c.h.b16 %v2873
      %v3082 = vunpack.c.l.b16 %v2874
      %v3083 = vunpack.c.l.b16 %v2875
      %v3084 = vunpack.c.h.b16 %v2875
      %v3085 = vunpack.c.l.b16 %v2876
      %v3086 = vpack.c.b16 %v2993, %v2990
      %v3087 = vpack.c.b16 %v2994, %v2991
      %v3088 = vpack.c.b16 %v2995, %v2992
      %v3089 = vpack.c.b16 %v2999, %v2996
      %v3090 = vpack.c.b16 %v3000, %v2997
      %v3091 = vpack.c.b16 %v3001, %v2998
      %v3092 = vpack.c.b16 %v3005, %v3002
      %v3093 = vpack.c.b16 %v3006, %v3003
      %v3094 = vpack.c.b16 %v3007, %v3004
      %v3095 = vpack.c.b16 %v3011, %v3008
      %v3096 = vpack.c.b16 %v3012, %v3009
      %v3097 = vpack.c.b16 %v3013, %v3010
      %v3098 = vpack.c.b16 %v3017, %v3014
      %v3099 = vpack.c.b16 %v3018, %v3015
      %v3100 = vpack.c.b16 %v3019, %v3016
      %v3101 = vpack.c.b16 %v3023, %v3020
      %v3102 = vpack.c.b16 %v3024, %v3021
      %v3103 = vpack.c.b16 %v3025, %v3022
      %v3104 = vpack.c.b16 %v3029, %v3026
      %v3105 = vpack.c.b16 %v3030, %v3027
      %v3106 = vpack.c.b16 %v3031, %v3028
      %v3107 = vpack.c.b16 %v3035, %v3032
      %v3108 = vpack.c.b16 %v3036, %v3033
      %v3109 = vpack.c.b16 %v3037, %v3034
      %v3110 = vpack.c.b16 %v3041, %v3038
      %v3111 = vpack.c.b16 %v3042, %v3039
      %v3112 = vpack.c.b16 %v3043, %v3040
      %v3113 = vpack.c.b16 %v3047, %v3044
      %v3114 = vpack.c.b16 %v3048, %v3045
      %v3115 = vpack.c.b16 %v3049, %v3046
      %v3116 = vpack.c.b16 %v3053, %v3050
      %v3117 = vpack.c.b16 %v3054, %v3051
      %v3118 = vpack.c.b16 %v3055, %v3052
      %v3119 = vpack.c.b16 %v3059, %v3056
      %v3120 = vpack.c.b16 %v3060, %v3057
      %v3121 = vpack.c.b16 %v3061, %v3058
      %v3122 = vpack.c.b16 %v3065, %v3062
      %v3123 = vpack.c.b16 %v3066, %v3063
      %v3124 = vpack.c.b16 %v3067, %v3064
      %v3125 = vpack.c.b16 %v3071, %v3068
      %v3126 = vpack.c.b16 %v3072, %v3069
      %v3127 = vpack.c.b16 %v3073, %v3070
      %v3128 = vpack.c.b16 %v3077, %v3074
      %v3129 = vpack.c.b16 %v3078, %v3075
      %v3130 = vpack.c.b16 %v3079, %v3076
      %v3131 = vpack.c.b16 %v3083, %v3080
      %v3132 = vpack.c.b16 %v3084, %v3081
      %v3133 = vpack.c.b16 %v3085, %v3082
      %v3230 = vunpack.c.l.b16 %v2878
      %v3231 = vunpack.c.l.b16 %v2879
      %v3232 = vunpack.c.l.b16 %v2880
      %v3233 = vunpack.c.l.b16 %v2881
      %v3234 = vunpack.c.l.b16 %v2882
      %v3235 = vunpack.c.l.b16 %v2883
      %v3236 = vunpack.c.l.b16 %v2884
      %v3237 = vunpack.c.l.b16 %v2885
      %v3238 = vunpack.c.l.b16 %v2886
      %v3239 = vunpack.c.l.b16 %v2887
      %v3240 = vunpack.c.l.b16 %v2888
      %v3241 = vunpack.c.l.b16 %v2889
      %v3242 = vunpack.c.l.b16 %v2890
      %v3243 = vunpack.c.l.b16 %v2891
      %v3244 = vunpack.c.l.b16 %v2892
      %v3245 = vunpack.c.l.b16 %v2893
      %v3246 = vunpack.c.l.b16 %v2894
      %v3247 = vunpack.c.l.b16 %v2895
      %v3248 = vunpack.c.l.b16 %v2896
      %v3249 = vunpack.c.l.b16 %v2897
      %v3250 = vunpack.c.l.b16 %v2898
      %v3251 = vunpack.c.l.b16 %v2899
      %v3252 = vunpack.c.l.b16 %v2900
      %v3253 = vunpack.c.l.b16 %v2901
      %v3254 = vunpack.c.l.b16 %v2902
      %v3255 = vunpack.c.l.b16 %v2903
      %v3256 = vunpack.c.l.b16 %v2904
      %v3257 = vunpack.c.l.b16 %v2905
      %v3258 = vunpack.c.l.b16 %v2906
      %v3259 = vunpack.c.l.b16 %v2907
      %v3260 = vunpack.c.l.b16 %v2908
      %v3261 = vunpack.c.l.b16 %v2909
      %v3262 = vunpack.c.l.b16 %v2910
      %v3263 = vunpack.c.l.b16 %v2911
      %v3264 = vunpack.c.l.b16 %v2912
      %v3265 = vunpack.c.l.b16 %v2913
      %v3266 = vunpack.c.l.b16 %v2914
      %v3267 = vunpack.c.l.b16 %v2915
      %v3268 = vunpack.c.l.b16 %v2916
      %v3269 = vunpack.c.l.b16 %v2917
      %v3270 = vunpack.c.l.b16 %v2918
      %v3271 = vunpack.c.l.b16 %v2919
      %v3272 = vunpack.c.l.b16 %v2920
      %v3273 = vunpack.c.l.b16 %v2921
      %v3274 = vunpack.c.l.b16 %v2922
      %v3275 = vunpack.c.l.b16 %v2923
      %v3276 = vunpack.c.l.b16 %v2924
      %v3277 = vunpack.c.l.b16 %v2925
      %v3278 = vpack.c.b16 %v3231, %v3230
      %v3279 = vpack.c.b16 %v3233, %v3232
      %v3280 = vpack.c.b16 %v3235, %v3234
      %v3281 = vpack.c.b16 %v3237, %v3236
      %v3282 = vpack.c.b16 %v3239, %v3238
      %v3283 = vpack.c.b16 %v3241, %v3240
      %v3284 = vpack.c.b16 %v3243, %v3242
      %v3285 = vpack.c.b16 %v3245, %v3244
      %v3286 = vpack.c.b16 %v3247, %v3246
      %v3287 = vpack.c.b16 %v3249, %v3248
      %v3288 = vpack.c.b16 %v3251, %v3250
      %v3289 = vpack.c.b16 %v3253, %v3252
      %v3290 = vpack.c.b16 %v3255, %v3254
      %v3291 = vpack.c.b16 %v3257, %v3256
      %v3292 = vpack.c.b16 %v3259, %v3258
      %v3293 = vpack.c.b16 %v3261, %v3260
      %v3294 = vpack.c.b16 %v3263, %v3262
      %v3295 = vpack.c.b16 %v3265, %v3264
      %v3296 = vpack.c.b16 %v3267, %v3266
      %v3297 = vpack.c.b16 %v3269, %v3268
      %v3298 = vpack.c.b16 %v3271, %v3270
      %v3299 = vpack.c.b16 %v3273, %v3272
      %v3300 = vpack.c.b16 %v3275, %v3274
      %v3301 = vpack.c.b16 %v3277, %v3276
      %3326 = vmatprep.subr.bf16.mxu0 0
      %3327 = vmatpush1.bf16.msra.mxu0 %v3285
      %3328 = vmatprep.subr.bf16.mxu0 0
      %3329 = vmatpush1.bf16.msra.mxu0 %v3284
      %3330 = vmatprep.subr.bf16.mxu0 0
      %3331 = vmatpush1.bf16.msra.mxu0 %v3283
      %3332 = vmatprep.subr.bf16.mxu0 0
      %3333 = vmatpush1.bf16.msra.mxu0 %v3282
      %3334 = vmatprep.subr.bf16.mxu0 0
      %3335 = vmatpush1.bf16.msra.mxu0 %v3281
      %3336 = vmatprep.subr.bf16.mxu0 0
      %3337 = vmatpush1.bf16.msra.mxu0 %v3280
      %3338 = vmatprep.subr.bf16.mxu0 0
      %3339 = vmatpush1.bf16.msra.mxu0 %v3279
      %3340 = vmatprep.subr.bf16.mxu0 0
      %3341 = vmatpush1.bf16.msra.mxu0 %v3278
      %3342 = vmatprep.subr.bf16.mxu0 0
      %3343 = vmatpush2.bf16.msra.mxu0 %v3293
      %3344 = vmatprep.subr.bf16.mxu0 0
      %3345 = vmatpush2.bf16.msra.mxu0 %v3292
      %3346 = vmatprep.subr.bf16.mxu0 0
      %3347 = vmatpush2.bf16.msra.mxu0 %v3291
      %3348 = vmatprep.subr.bf16.mxu0 0
      %3349 = vmatpush2.bf16.msra.mxu0 %v3290
      %3350 = vmatprep.subr.bf16.mxu0 0
      %3351 = vmatpush2.bf16.msra.mxu0 %v3289
      %3352 = vmatprep.subr.bf16.mxu0 0
      %3353 = vmatpush2.bf16.msra.mxu0 %v3288
      %3354 = vmatprep.subr.bf16.mxu0 0
      %3355 = vmatpush2.bf16.msra.mxu0 %v3287
      %3356 = vmatprep.subr.bf16.mxu0 0
      %3357 = vmatpush2.bf16.msra.mxu0 %v3286
      %3358 = vmatprep.mubr.bf16.mxu0 %v3087
      %3359 = vmatmul.mubr.bf16.gmra.mxu0 %v3086
      %v3360 = vpop.f32.mrf.mxu0
      %v3361 = vadd.f32 0.0, %v3360
      %v3362 = vpop.f32.mrf.mxu0
      %v3363 = vpop.f32.mrf.mxu0
      %v3364 = vadd.f32 0.0, %v3363
      %v3365 = vpop.f32.mrf.mxu0
      %3366 = vmatprep.mubr.bf16.mxu0 %v3090
      %3367 = vmatmul.mubr.bf16.gmra.mxu0 %v3089
      %v3368 = vpop.f32.mrf.mxu0
      %v3369 = vadd.f32 0.0, %v3368
      %v3370 = vpop.f32.mrf.mxu0
      %v3371 = vpop.f32.mrf.mxu0
      %v3372 = vadd.f32 0.0, %v3371
      %v3373 = vpop.f32.mrf.mxu0
      %3374 = vmatprep.mubr.bf16.mxu0 %v3093
      %3375 = vmatmul.mubr.bf16.gmra.mxu0 %v3092
      %v3376 = vpop.f32.mrf.mxu0
      %v3377 = vadd.f32 0.0, %v3376
      %v3378 = vpop.f32.mrf.mxu0
      %v3379 = vpop.f32.mrf.mxu0
      %v3380 = vadd.f32 0.0, %v3379
      %v3381 = vpop.f32.mrf.mxu0
      %3382 = vmatprep.mubr.bf16.mxu0 %v3096
      %3383 = vmatmul.mubr.bf16.gmra.mxu0 %v3095
      %v3384 = vpop.f32.mrf.mxu0
      %v3385 = vadd.f32 0.0, %v3384
      %v3386 = vpop.f32.mrf.mxu0
      %v3387 = vpop.f32.mrf.mxu0
      %v3388 = vadd.f32 0.0, %v3387
      %v3389 = vpop.f32.mrf.mxu0
      %3390 = vmatprep.mubr.bf16.mxu0 %v3099
      %3391 = vmatmul.mubr.bf16.gmra.mxu0 %v3098
      %v3392 = vpop.f32.mrf.mxu0
      %v3393 = vadd.f32 0.0, %v3392
      %v3394 = vpop.f32.mrf.mxu0
      %v3395 = vpop.f32.mrf.mxu0
      %v3396 = vadd.f32 0.0, %v3395
      %v3397 = vpop.f32.mrf.mxu0
      %3398 = vmatprep.mubr.bf16.mxu0 %v3102
      %3399 = vmatmul.mubr.bf16.gmra.mxu0 %v3101
      %v3400 = vpop.f32.mrf.mxu0
      %v3401 = vadd.f32 0.0, %v3400
      %v3402 = vpop.f32.mrf.mxu0
      %v3403 = vpop.f32.mrf.mxu0
      %v3404 = vadd.f32 0.0, %v3403
      %v3405 = vpop.f32.mrf.mxu0
      %3406 = vmatprep.mubr.bf16.mxu0 %v3105
      %3407 = vmatmul.mubr.bf16.gmra.mxu0 %v3104
      %v3408 = vpop.f32.mrf.mxu0
      %v3409 = vadd.f32 0.0, %v3408
      %v3410 = vpop.f32.mrf.mxu0
      %v3411 = vpop.f32.mrf.mxu0
      %v3412 = vadd.f32 0.0, %v3411
      %v3413 = vpop.f32.mrf.mxu0
      %3414 = vmatprep.mubr.bf16.mxu0 %v3108
      %3415 = vmatmul.mubr.bf16.gmra.mxu0 %v3107
      %v3416 = vpop.f32.mrf.mxu0
      %v3417 = vadd.f32 0.0, %v3416
      %v3418 = vpop.f32.mrf.mxu0
      %v3419 = vpop.f32.mrf.mxu0
      %v3420 = vadd.f32 0.0, %v3419
      %v3421 = vpop.f32.mrf.mxu0
      %3422 = vmatprep.mubr.bf16.mxu0 %v3111
      %3423 = vmatmul.mubr.bf16.gmra.mxu0 %v3110
      %v3424 = vpop.f32.mrf.mxu0
      %v3425 = vadd.f32 0.0, %v3424
      %v3426 = vpop.f32.mrf.mxu0
      %v3427 = vpop.f32.mrf.mxu0
      %v3428 = vadd.f32 0.0, %v3427
      %v3429 = vpop.f32.mrf.mxu0
      %3430 = vmatprep.mubr.bf16.mxu0 %v3114
      %3431 = vmatmul.mubr.bf16.gmra.mxu0 %v3113
      %v3432 = vpop.f32.mrf.mxu0
      %v3433 = vadd.f32 0.0, %v3432
      %v3434 = vpop.f32.mrf.mxu0
      %v3435 = vpop.f32.mrf.mxu0
      %v3436 = vadd.f32 0.0, %v3435
      %v3437 = vpop.f32.mrf.mxu0
      %3438 = vmatprep.mubr.bf16.mxu0 %v3117
      %3439 = vmatmul.mubr.bf16.gmra.mxu0 %v3116
      %v3440 = vpop.f32.mrf.mxu0
      %v3441 = vadd.f32 0.0, %v3440
      %v3442 = vpop.f32.mrf.mxu0
      %v3443 = vpop.f32.mrf.mxu0
      %v3444 = vadd.f32 0.0, %v3443
      %v3445 = vpop.f32.mrf.mxu0
      %3446 = vmatprep.mubr.bf16.mxu0 %v3120
      %3447 = vmatmul.mubr.bf16.gmra.mxu0 %v3119
      %v3448 = vpop.f32.mrf.mxu0
      %v3449 = vadd.f32 0.0, %v3448
      %v3450 = vpop.f32.mrf.mxu0
      %v3451 = vpop.f32.mrf.mxu0
      %v3452 = vadd.f32 0.0, %v3451
      %v3453 = vpop.f32.mrf.mxu0
      %3454 = vmatprep.mubr.bf16.mxu0 %v3123
      %3455 = vmatmul.mubr.bf16.gmra.mxu0 %v3122
      %v3456 = vpop.f32.mrf.mxu0
      %v3457 = vadd.f32 0.0, %v3456
      %v3458 = vpop.f32.mrf.mxu0
      %v3459 = vpop.f32.mrf.mxu0
      %v3460 = vadd.f32 0.0, %v3459
      %v3461 = vpop.f32.mrf.mxu0
      %3462 = vmatprep.mubr.bf16.mxu0 %v3126
      %3463 = vmatmul.mubr.bf16.gmra.mxu0 %v3125
      %v3464 = vpop.f32.mrf.mxu0
      %v3465 = vadd.f32 0.0, %v3464
      %v3466 = vpop.f32.mrf.mxu0
      %v3467 = vpop.f32.mrf.mxu0
      %v3468 = vadd.f32 0.0, %v3467
      %v3469 = vpop.f32.mrf.mxu0
      %3470 = vmatprep.mubr.bf16.mxu0 %v3129
      %3471 = vmatmul.mubr.bf16.gmra.mxu0 %v3128
      %v3472 = vpop.f32.mrf.mxu0
      %v3473 = vadd.f32 0.0, %v3472
      %v3474 = vpop.f32.mrf.mxu0
      %v3475 = vpop.f32.mrf.mxu0
      %v3476 = vadd.f32 0.0, %v3475
      %v3477 = vpop.f32.mrf.mxu0
      %3478 = vmatprep.mubr.bf16.mxu0 %v3132
      %3479 = vmatmul.mubr.bf16.gmra.mxu0 %v3131
      %v3480 = vpop.f32.mrf.mxu0
      %v3481 = vadd.f32 0.0, %v3480
      %v3482 = vpop.f32.mrf.mxu0
      %v3483 = vpop.f32.mrf.mxu0
      %v3484 = vadd.f32 0.0, %v3483
      %v3485 = vpop.f32.mrf.mxu0
      %3486 = vdwg.mxu0
      %3487 = vmatprep.subr.bf16.mxu0 0
      %3488 = vmatpush1.bf16.msra.mxu0 %v3301
      %3489 = vmatprep.subr.bf16.mxu0 0
      %3490 = vmatpush1.bf16.msra.mxu0 %v3300
      %3491 = vmatprep.subr.bf16.mxu0 0
      %3492 = vmatpush1.bf16.msra.mxu0 %v3299
      %3493 = vmatprep.subr.bf16.mxu0 0
      %3494 = vmatpush1.bf16.msra.mxu0 %v3298
      %3495 = vmatprep.subr.bf16.mxu0 0
      %3496 = vmatpush1.bf16.msra.mxu0 %v3297
      %3497 = vmatprep.subr.bf16.mxu0 0
      %3498 = vmatpush1.bf16.msra.mxu0 %v3296
      %3499 = vmatprep.subr.bf16.mxu0 0
      %3500 = vmatpush1.bf16.msra.mxu0 %v3295
      %3501 = vmatprep.subr.bf16.mxu0 0
      %3502 = vmatpush1.bf16.msra.mxu0 %v3294
      %3503 = vmatprep.subr.bf16.mxu0 0
      %3504 = vmatpush2.bf16.msra.mxu0 0
      %3505 = vmatprep.subr.bf16.mxu0 0
      %3506 = vmatpush2.bf16.msra.mxu0 0
      %3507 = vmatprep.subr.bf16.mxu0 0
      %3508 = vmatpush2.bf16.msra.mxu0 0
      %3509 = vmatprep.subr.bf16.mxu0 0
      %3510 = vmatpush2.bf16.msra.mxu0 0
      %3511 = vmatprep.subr.bf16.mxu0 0
      %3512 = vmatpush2.bf16.msra.mxu0 0
      %3513 = vmatprep.subr.bf16.mxu0 0
      %3514 = vmatpush2.bf16.msra.mxu0 0
      %3515 = vmatprep.subr.bf16.mxu0 0
      %3516 = vmatpush2.bf16.msra.mxu0 0
      %3517 = vmatprep.subr.bf16.mxu0 0
      %3518 = vmatpush2.bf16.msra.mxu0 0
      %3519 = vmatprep.mubr.bf16.mxu0 0
      %3520 = vmatmul.mubr.bf16.gmra.mxu0 %v3088
      %v3521 = vpop.f32.mrf.mxu0
      %v3522 = vadd.f32 %v3361, %v3521
      %v3523 = vpop.f32.mrf.mxu0
      %v3524 = vpop.f32.mrf.mxu0
      %v3525 = vadd.f32 %v3364, %v3524
      %v3526 = vpop.f32.mrf.mxu0
      %3527 = vmatprep.mubr.bf16.mxu0 0
      %3528 = vmatmul.mubr.bf16.gmra.mxu0 %v3091
      %v3529 = vpop.f32.mrf.mxu0
      %v3530 = vadd.f32 %v3369, %v3529
      %v3531 = vpop.f32.mrf.mxu0
      %v3532 = vpop.f32.mrf.mxu0
      %v3533 = vadd.f32 %v3372, %v3532
      %v3534 = vpop.f32.mrf.mxu0
      %3535 = vmatprep.mubr.bf16.mxu0 0
      %3536 = vmatmul.mubr.bf16.gmra.mxu0 %v3094
      %v3537 = vpop.f32.mrf.mxu0
      %v3538 = vadd.f32 %v3377, %v3537
      %v3539 = vpop.f32.mrf.mxu0
      %v3540 = vpop.f32.mrf.mxu0
      %v3541 = vadd.f32 %v3380, %v3540
      %v3542 = vpop.f32.mrf.mxu0
      %3543 = vmatprep.mubr.bf16.mxu0 0
      %3544 = vmatmul.mubr.bf16.gmra.mxu0 %v3097
      %v3545 = vpop.f32.mrf.mxu0
      %v3546 = vadd.f32 %v3385, %v3545
      %v3547 = vpop.f32.mrf.mxu0
      %v3548 = vpop.f32.mrf.mxu0
      %v3549 = vadd.f32 %v3388, %v3548
      %v3550 = vpop.f32.mrf.mxu0
      %3551 = vmatprep.mubr.bf16.mxu0 0
      %3552 = vmatmul.mubr.bf16.gmra.mxu0 %v3100
      %v3553 = vpop.f32.mrf.mxu0
      %v3554 = vadd.f32 %v3393, %v3553
      %v3555 = vpop.f32.mrf.mxu0
      %v3556 = vpop.f32.mrf.mxu0
      %v3557 = vadd.f32 %v3396, %v3556
      %v3558 = vpop.f32.mrf.mxu0
      %3559 = vmatprep.mubr.bf16.mxu0 0
      %3560 = vmatmul.mubr.bf16.gmra.mxu0 %v3103
      %v3561 = vpop.f32.mrf.mxu0
      %v3562 = vadd.f32 %v3401, %v3561
      %v3563 = vpop.f32.mrf.mxu0
      %v3564 = vpop.f32.mrf.mxu0
      %v3565 = vadd.f32 %v3404, %v3564
      %v3566 = vpop.f32.mrf.mxu0
      %3567 = vmatprep.mubr.bf16.mxu0 0
      %3568 = vmatmul.mubr.bf16.gmra.mxu0 %v3106
      %v3569 = vpop.f32.mrf.mxu0
      %v3570 = vadd.f32 %v3409, %v3569
      %v3571 = vpop.f32.mrf.mxu0
      %v3572 = vpop.f32.mrf.mxu0
      %v3573 = vadd.f32 %v3412, %v3572
      %v3574 = vpop.f32.mrf.mxu0
      %3575 = vmatprep.mubr.bf16.mxu0 0
      %3576 = vmatmul.mubr.bf16.gmra.mxu0 %v3109
      %v3577 = vpop.f32.mrf.mxu0
      %v3578 = vadd.f32 %v3417, %v3577
      %v3579 = vpop.f32.mrf.mxu0
      %v3580 = vpop.f32.mrf.mxu0
      %v3581 = vadd.f32 %v3420, %v3580
      %v3582 = vpop.f32.mrf.mxu0
      %3583 = vmatprep.mubr.bf16.mxu0 0
      %3584 = vmatmul.mubr.bf16.gmra.mxu0 %v3112
      %v3585 = vpop.f32.mrf.mxu0
      %v3586 = vadd.f32 %v3425, %v3585
      %v3587 = vpop.f32.mrf.mxu0
      %v3588 = vpop.f32.mrf.mxu0
      %v3589 = vadd.f32 %v3428, %v3588
      %v3590 = vpop.f32.mrf.mxu0
      %3591 = vmatprep.mubr.bf16.mxu0 0
      %3592 = vmatmul.mubr.bf16.gmra.mxu0 %v3115
      %v3593 = vpop.f32.mrf.mxu0
      %v3594 = vadd.f32 %v3433, %v3593
      %v3595 = vpop.f32.mrf.mxu0
      %v3596 = vpop.f32.mrf.mxu0
      %v3597 = vadd.f32 %v3436, %v3596
      %v3598 = vpop.f32.mrf.mxu0
      %3599 = vmatprep.mubr.bf16.mxu0 0
      %3600 = vmatmul.mubr.bf16.gmra.mxu0 %v3118
      %v3601 = vpop.f32.mrf.mxu0
      %v3602 = vadd.f32 %v3441, %v3601
      %v3603 = vpop.f32.mrf.mxu0
      %v3604 = vpop.f32.mrf.mxu0
      %v3605 = vadd.f32 %v3444, %v3604
      %v3606 = vpop.f32.mrf.mxu0
      %3607 = vmatprep.mubr.bf16.mxu0 0
      %3608 = vmatmul.mubr.bf16.gmra.mxu0 %v3121
      %v3609 = vpop.f32.mrf.mxu0
      %v3610 = vadd.f32 %v3449, %v3609
      %v3611 = vpop.f32.mrf.mxu0
      %v3612 = vpop.f32.mrf.mxu0
      %v3613 = vadd.f32 %v3452, %v3612
      %v3614 = vpop.f32.mrf.mxu0
      %3615 = vmatprep.mubr.bf16.mxu0 0
      %3616 = vmatmul.mubr.bf16.gmra.mxu0 %v3124
      %v3617 = vpop.f32.mrf.mxu0
      %v3618 = vadd.f32 %v3457, %v3617
      %v3619 = vpop.f32.mrf.mxu0
      %v3620 = vpop.f32.mrf.mxu0
      %v3621 = vadd.f32 %v3460, %v3620
      %v3622 = vpop.f32.mrf.mxu0
      %3623 = vmatprep.mubr.bf16.mxu0 0
      %3624 = vmatmul.mubr.bf16.gmra.mxu0 %v3127
      %v3625 = vpop.f32.mrf.mxu0
      %v3626 = vadd.f32 %v3465, %v3625
      %v3627 = vpop.f32.mrf.mxu0
      %v3628 = vpop.f32.mrf.mxu0
      %v3629 = vadd.f32 %v3468, %v3628
      %v3630 = vpop.f32.mrf.mxu0
      %3631 = vmatprep.mubr.bf16.mxu0 0
      %3632 = vmatmul.mubr.bf16.gmra.mxu0 %v3130
      %v3633 = vpop.f32.mrf.mxu0
      %v3634 = vadd.f32 %v3473, %v3633
      %v3635 = vpop.f32.mrf.mxu0
      %v3636 = vpop.f32.mrf.mxu0
      %v3637 = vadd.f32 %v3476, %v3636
      %v3638 = vpop.f32.mrf.mxu0
      %3639 = vmatprep.mubr.bf16.mxu0 0
      %3640 = vmatmul.mubr.bf16.gmra.mxu0 %v3133
      %v3641 = vpop.f32.mrf.mxu0
      %v3642 = vadd.f32 %v3481, %v3641
      %v3643 = vpop.f32.mrf.mxu0
      %v3644 = vpop.f32.mrf.mxu0
      %v3645 = vadd.f32 %v3484, %v3644
      %v3646 = vpop.f32.mrf.mxu0
      %3647 = vdwg.mxu0
      %v3648 = vadd.f32 %v2686, %v3522
      %v3649 = vadd.f32 %v2689, %v3525
      %v3650 = vadd.f32 %v2694, %v3530
      %v3651 = vadd.f32 %v2697, %v3533
      %v3652 = vadd.f32 %v2702, %v3538
      %v3653 = vadd.f32 %v2705, %v3541
      %v3654 = vadd.f32 %v2710, %v3546
      %v3655 = vadd.f32 %v2713, %v3549
      %v3656 = vadd.f32 %v2718, %v3554
      %v3657 = vadd.f32 %v2721, %v3557
      %v3658 = vadd.f32 %v2726, %v3562
      %v3659 = vadd.f32 %v2729, %v3565
      %v3660 = vadd.f32 %v2734, %v3570
      %v3661 = vadd.f32 %v2737, %v3573
      %v3662 = vadd.f32 %v2742, %v3578
      %v3663 = vadd.f32 %v2745, %v3581
      %v3664 = vadd.f32 %v2750, %v3586
      %v3665 = vadd.f32 %v2753, %v3589
      %v3666 = vadd.f32 %v2758, %v3594
      %v3667 = vadd.f32 %v2761, %v3597
      %v3668 = vadd.f32 %v2766, %v3602
      %v3669 = vadd.f32 %v2769, %v3605
      %v3670 = vadd.f32 %v2774, %v3610
      %v3671 = vadd.f32 %v2777, %v3613
      %v3672 = vadd.f32 %v2782, %v3618
      %v3673 = vadd.f32 %v2785, %v3621
      %v3674 = vadd.f32 %v2790, %v3626
      %v3675 = vadd.f32 %v2793, %v3629
      %v3676 = vadd.f32 %v2798, %v3634
      %v3677 = vadd.f32 %v2801, %v3637
      %v3678 = vadd.f32 %v2806, %v3642
      %v3679 = vadd.f32 %v2809, %v3645
      %v3680 = vld [vmem:[%s2] sm:$0x1]
      %v3682 = vlaneseq
      %v3683 = vshrl.u32 %v3682, 7
      %v3684 = vsub.s32 0, %v3683
      %v3685 = vrot.slane %v3680, %v3684
      %v3687 = vadd.f32 %v3648, %v3685
      %v3688 = vadd.f32 %v3649, %v3685
      %v3689 = vadd.f32 %v3650, %v3685
      %v3690 = vadd.f32 %v3651, %v3685
      %v3691 = vadd.f32 %v3652, %v3685
      %v3692 = vadd.f32 %v3653, %v3685
      %v3693 = vadd.f32 %v3654, %v3685
      %v3694 = vadd.f32 %v3655, %v3685
      %v3695 = vadd.f32 %v3656, %v3685
      %v3696 = vadd.f32 %v3657, %v3685
      %v3697 = vadd.f32 %v3658, %v3685
      %v3698 = vadd.f32 %v3659, %v3685
      %v3699 = vadd.f32 %v3660, %v3685
      %v3700 = vadd.f32 %v3661, %v3685
      %v3701 = vadd.f32 %v3662, %v3685
      %v3702 = vadd.f32 %v3663, %v3685
      %v3703 = vadd.f32 %v3664, %v3685
      %v3704 = vadd.f32 %v3665, %v3685
      %v3705 = vadd.f32 %v3666, %v3685
      %v3706 = vadd.f32 %v3667, %v3685
      %v3707 = vadd.f32 %v3668, %v3685
      %v3708 = vadd.f32 %v3669, %v3685
      %v3709 = vadd.f32 %v3670, %v3685
      %v3710 = vadd.f32 %v3671, %v3685
      %v3711 = vadd.f32 %v3672, %v3685
      %v3712 = vadd.f32 %v3673, %v3685
      %v3713 = vadd.f32 %v3674, %v3685
      %v3714 = vadd.f32 %v3675, %v3685
      %v3715 = vadd.f32 %v3676, %v3685
      %v3716 = vadd.f32 %v3677, %v3685
      %v3717 = vadd.f32 %v3678, %v3685
      %v3718 = vadd.f32 %v3679, %v3685
      %v3719 = vmax.f32 %v3687, 0.0
      %v3720 = vmax.f32 %v3688, 0.0
      %v3721 = vmax.f32 %v3689, 0.0
      %v3722 = vmax.f32 %v3690, 0.0
      %v3723 = vmax.f32 %v3691, 0.0
      %v3724 = vmax.f32 %v3692, 0.0
      %v3725 = vmax.f32 %v3693, 0.0
      %v3726 = vmax.f32 %v3694, 0.0
      %v3727 = vmax.f32 %v3695, 0.0
      %v3728 = vmax.f32 %v3696, 0.0
      %v3729 = vmax.f32 %v3697, 0.0
      %v3730 = vmax.f32 %v3698, 0.0
      %v3731 = vmax.f32 %v3699, 0.0
      %v3732 = vmax.f32 %v3700, 0.0
      %v3733 = vmax.f32 %v3701, 0.0
      %v3734 = vmax.f32 %v3702, 0.0
      %v3735 = vmax.f32 %v3703, 0.0
      %v3736 = vmax.f32 %v3704, 0.0
      %v3737 = vmax.f32 %v3705, 0.0
      %v3738 = vmax.f32 %v3706, 0.0
      %v3739 = vmax.f32 %v3707, 0.0
      %v3740 = vmax.f32 %v3708, 0.0
      %v3741 = vmax.f32 %v3709, 0.0
      %v3742 = vmax.f32 %v3710, 0.0
      %v3743 = vmax.f32 %v3711, 0.0
      %v3744 = vmax.f32 %v3712, 0.0
      %v3745 = vmax.f32 %v3713, 0.0
      %v3746 = vmax.f32 %v3714, 0.0
      %v3747 = vmax.f32 %v3715, 0.0
      %v3748 = vmax.f32 %v3716, 0.0
      %v3749 = vmax.f32 %v3717, 0.0
      %v3750 = vmax.f32 %v3718, 0.0
      %v3751 = vpack.c.bf16 %v3720, %v3719
      %v3752 = vpack.c.bf16 %v3722, %v3721
      %v3753 = vpack.c.bf16 %v3724, %v3723
      %v3754 = vpack.c.bf16 %v3726, %v3725
      %v3755 = vpack.c.bf16 %v3728, %v3727
      %v3756 = vpack.c.bf16 %v3730, %v3729
      %v3757 = vpack.c.bf16 %v3732, %v3731
      %v3758 = vpack.c.bf16 %v3734, %v3733
      %v3759 = vpack.c.bf16 %v3736, %v3735
      %v3760 = vpack.c.bf16 %v3738, %v3737
      %v3761 = vpack.c.bf16 %v3740, %v3739
      %v3762 = vpack.c.bf16 %v3742, %v3741
      %v3763 = vpack.c.bf16 %v3744, %v3743
      %v3764 = vpack.c.bf16 %v3746, %v3745
      %v3765 = vpack.c.bf16 %v3748, %v3747
      %v3766 = vpack.c.bf16 %v3750, %v3749
      %v3783 = vunpack.c.l.b16 %v3751
      %v3784 = vunpack.c.h.b16 %v3751
      %v3785 = vunpack.c.l.b16 %v3752
      %v3786 = vunpack.c.h.b16 %v3752
      %v3787 = vunpack.c.l.b16 %v3753
      %v3788 = vunpack.c.h.b16 %v3753
      %v3789 = vunpack.c.l.b16 %v3754
      %v3790 = vunpack.c.h.b16 %v3754
      %v3791 = vunpack.c.l.b16 %v3755
      %v3792 = vunpack.c.h.b16 %v3755
      %v3793 = vunpack.c.l.b16 %v3756
      %v3794 = vunpack.c.h.b16 %v3756
      %v3795 = vunpack.c.l.b16 %v3757
      %v3796 = vunpack.c.h.b16 %v3757
      %v3797 = vunpack.c.l.b16 %v3758
      %v3798 = vunpack.c.h.b16 %v3758
      %v3799 = vunpack.c.l.b16 %v3759
      %v3800 = vunpack.c.h.b16 %v3759
      %v3801 = vunpack.c.l.b16 %v3760
      %v3802 = vunpack.c.h.b16 %v3760
      %v3803 = vunpack.c.l.b16 %v3761
      %v3804 = vunpack.c.h.b16 %v3761
      %v3805 = vunpack.c.l.b16 %v3762
      %v3806 = vunpack.c.h.b16 %v3762
      %v3807 = vunpack.c.l.b16 %v3763
      %v3808 = vunpack.c.h.b16 %v3763
      %v3809 = vunpack.c.l.b16 %v3764
      %v3810 = vunpack.c.h.b16 %v3764
      %v3811 = vunpack.c.l.b16 %v3765
      %v3812 = vunpack.c.h.b16 %v3765
      %v3813 = vunpack.c.l.b16 %v3766
      %v3814 = vunpack.c.h.b16 %v3766
      %v3815 = vpack.c.b16 %v3783, %v3783
      %v3816 = vpack.c.b16 %v3784, %v3784
      %v3817 = vpack.c.b16 %v3785, %v3785
      %v3818 = vpack.c.b16 %v3786, %v3786
      %v3819 = vpack.c.b16 %v3787, %v3787
      %v3820 = vpack.c.b16 %v3788, %v3788
      %v3821 = vpack.c.b16 %v3789, %v3789
      %v3822 = vpack.c.b16 %v3790, %v3790
      %v3823 = vpack.c.b16 %v3791, %v3791
      %v3824 = vpack.c.b16 %v3792, %v3792
      %v3825 = vpack.c.b16 %v3793, %v3793
      %v3826 = vpack.c.b16 %v3794, %v3794
      %v3827 = vpack.c.b16 %v3795, %v3795
      %v3828 = vpack.c.b16 %v3796, %v3796
      %v3829 = vpack.c.b16 %v3797, %v3797
      %v3830 = vpack.c.b16 %v3798, %v3798
      %v3831 = vpack.c.b16 %v3799, %v3799
      %v3832 = vpack.c.b16 %v3800, %v3800
      %v3833 = vpack.c.b16 %v3801, %v3801
      %v3834 = vpack.c.b16 %v3802, %v3802
      %v3835 = vpack.c.b16 %v3803, %v3803
      %v3836 = vpack.c.b16 %v3804, %v3804
      %v3837 = vpack.c.b16 %v3805, %v3805
      %v3838 = vpack.c.b16 %v3806, %v3806
      %v3839 = vpack.c.b16 %v3807, %v3807
      %v3840 = vpack.c.b16 %v3808, %v3808
      %v3841 = vpack.c.b16 %v3809, %v3809
      %v3842 = vpack.c.b16 %v3810, %v3810
      %v3843 = vpack.c.b16 %v3811, %v3811
      %v3844 = vpack.c.b16 %v3812, %v3812
      %v3845 = vpack.c.b16 %v3813, %v3813
      %v3846 = vpack.c.b16 %v3814, %v3814
      %3879 = vst [vmem:[%s509 + $0x4] sm:$0xf] %v3815
      %3880 = vst [vmem:[%s509 + $0x10] sm:$0xf] %v3816
      %3881 = vst [vmem:[%s509 + $0x1c] sm:$0xf] %v3817
      %3882 = vst [vmem:[%s509 + $0x28] sm:$0xf] %v3818
      %3883 = vst [vmem:[%s509 + $0x34] sm:$0xf] %v3819
      %3884 = vst [vmem:[%s509 + $0x40] sm:$0xf] %v3820
      %3885 = vst [vmem:[%s509 + $0x4c] sm:$0xf] %v3821
      %3886 = vst [vmem:[%s509 + $0x58] sm:$0xf] %v3822
      %3887 = vst [vmem:[%s509 + $0x64] sm:$0xf] %v3823
      %3888 = vst [vmem:[%s509 + $0x70] sm:$0xf] %v3824
      %3889 = vst [vmem:[%s509 + $0x7c] sm:$0xf] %v3825
      %3890 = vst [vmem:[%s509 + $0x88] sm:$0xf] %v3826
      %3891 = vst [vmem:[%s509 + $0x94] sm:$0xf] %v3827
      %3892 = vst [vmem:[%s509 + $0xa0] sm:$0xf] %v3828
      %3893 = vst [vmem:[%s509 + $0xac] sm:$0xf] %v3829
      %3894 = vst [vmem:[%s509 + $0xb8] sm:$0xf] %v3830
      %3895 = vst [vmem:[%s509 + $0xc4] sm:$0xf] %v3831
      %3896 = vst [vmem:[%s509 + $0xd0] sm:$0xf] %v3832
      %3897 = vst [vmem:[%s509 + $0xdc] sm:$0xf] %v3833
      %3898 = vst [vmem:[%s509 + $0xe8] sm:$0xf] %v3834
      %3899 = vst [vmem:[%s509 + $0xf4] sm:$0xf] %v3835
      %3900 = vst [vmem:[%s509 + $0x100] sm:$0xf] %v3836
      %3901 = vst [vmem:[%s509 + $0x10c] sm:$0xf] %v3837
      %3902 = vst [vmem:[%s509 + $0x118] sm:$0xf] %v3838
      %3903 = vst [vmem:[%s509 + $0x124] sm:$0xf] %v3839
      %3904 = vst [vmem:[%s509 + $0x130] sm:$0xf] %v3840
      %3905 = vst [vmem:[%s509 + $0x13c] sm:$0xf] %v3841
      %3906 = vst [vmem:[%s509 + $0x148] sm:$0xf] %v3842
      %3907 = vst [vmem:[%s509 + $0x154] sm:$0xf] %v3843
      %3908 = vst [vmem:[%s509 + $0x160] sm:$0xf] %v3844
      %3909 = vst [vmem:[%s509 + $0x16c] sm:$0xf] %v3845
      %3910 = vst [vmem:[%s509 + $0x178] sm:$0xf] %v3846
      %v3912 = vshrl.u32 %v3815, 16
      %v3914 = vrot.slane %v3912, 7
      %v3915 = vshll.u32 %v3815, 16
      %v3917 = vor.u32 %v3914, %v3915
      %v3918 = vrot.slane %v3914, 4
      %v3920 = vshrl.u32 %v3816, 16
      %v3922 = vrot.slane %v3920, 7
      %v3923 = vshll.u32 %v3816, 16
      %v3925 = vor.u32 %v3922, %v3923
      %v3926 = vsel %vm543, %v3918, %v3925
      %v3928 = vshrl.u32 %v3817, 16
      %v3930 = vrot.slane %v3928, 7
      %v3931 = vshll.u32 %v3817, 16
      %v3933 = vor.u32 %v3930, %v3931
      %v3934 = vrot.slane %v3930, 4
      %v3936 = vshrl.u32 %v3818, 16
      %v3938 = vrot.slane %v3936, 7
      %v3939 = vshll.u32 %v3818, 16
      %v3941 = vor.u32 %v3938, %v3939
      %v3942 = vsel %vm543, %v3934, %v3941
      %v3944 = vshrl.u32 %v3819, 16
      %v3946 = vrot.slane %v3944, 7
      %v3947 = vshll.u32 %v3819, 16
      %v3949 = vor.u32 %v3946, %v3947
      %v3950 = vrot.slane %v3946, 4
      %v3952 = vshrl.u32 %v3820, 16
      %v3954 = vrot.slane %v3952, 7
      %v3955 = vshll.u32 %v3820, 16
      %v3957 = vor.u32 %v3954, %v3955
      %v3958 = vsel %vm543, %v3950, %v3957
      %v3960 = vshrl.u32 %v3821, 16
      %v3962 = vrot.slane %v3960, 7
      %v3963 = vshll.u32 %v3821, 16
      %v3965 = vor.u32 %v3962, %v3963
      %v3966 = vrot.slane %v3962, 4
      %v3968 = vshrl.u32 %v3822, 16
      %v3970 = vrot.slane %v3968, 7
      %v3971 = vshll.u32 %v3822, 16
      %v3973 = vor.u32 %v3970, %v3971
      %v3974 = vsel %vm543, %v3966, %v3973
      %v3976 = vshrl.u32 %v3823, 16
      %v3978 = vrot.slane %v3976, 7
      %v3979 = vshll.u32 %v3823, 16
      %v3981 = vor.u32 %v3978, %v3979
      %v3982 = vrot.slane %v3978, 4
      %v3984 = vshrl.u32 %v3824, 16
      %v3986 = vrot.slane %v3984, 7
      %v3987 = vshll.u32 %v3824, 16
      %v3989 = vor.u32 %v3986, %v3987
      %v3990 = vsel %vm543, %v3982, %v3989
      %v3992 = vshrl.u32 %v3825, 16
      %v3994 = vrot.slane %v3992, 7
      %v3995 = vshll.u32 %v3825, 16
      %v3997 = vor.u32 %v3994, %v3995
      %v3998 = vrot.slane %v3994, 4
      %v4000 = vshrl.u32 %v3826, 16
      %v4002 = vrot.slane %v4000, 7
      %v4003 = vshll.u32 %v3826, 16
      %v4005 = vor.u32 %v4002, %v4003
      %v4006 = vsel %vm543, %v3998, %v4005
      %v4008 = vshrl.u32 %v3827, 16
      %v4010 = vrot.slane %v4008, 7
      %v4011 = vshll.u32 %v3827, 16
      %v4013 = vor.u32 %v4010, %v4011
      %v4014 = vrot.slane %v4010, 4
      %v4016 = vshrl.u32 %v3828, 16
      %v4018 = vrot.slane %v4016, 7
      %v4019 = vshll.u32 %v3828, 16
      %v4021 = vor.u32 %v4018, %v4019
      %v4022 = vsel %vm543, %v4014, %v4021
      %v4024 = vshrl.u32 %v3829, 16
      %v4026 = vrot.slane %v4024, 7
      %v4027 = vshll.u32 %v3829, 16
      %v4029 = vor.u32 %v4026, %v4027
      %v4030 = vrot.slane %v4026, 4
      %v4032 = vshrl.u32 %v3830, 16
      %v4034 = vrot.slane %v4032, 7
      %v4035 = vshll.u32 %v3830, 16
      %v4037 = vor.u32 %v4034, %v4035
      %v4038 = vsel %vm543, %v4030, %v4037
      %v4040 = vshrl.u32 %v3831, 16
      %v4042 = vrot.slane %v4040, 7
      %v4043 = vshll.u32 %v3831, 16
      %v4045 = vor.u32 %v4042, %v4043
      %v4046 = vrot.slane %v4042, 4
      %v4048 = vshrl.u32 %v3832, 16
      %v4050 = vrot.slane %v4048, 7
      %v4051 = vshll.u32 %v3832, 16
      %v4053 = vor.u32 %v4050, %v4051
      %v4054 = vsel %vm543, %v4046, %v4053
      %v4056 = vshrl.u32 %v3833, 16
      %v4058 = vrot.slane %v4056, 7
      %v4059 = vshll.u32 %v3833, 16
      %v4061 = vor.u32 %v4058, %v4059
      %v4062 = vrot.slane %v4058, 4
      %v4064 = vshrl.u32 %v3834, 16
      %v4066 = vrot.slane %v4064, 7
      %v4067 = vshll.u32 %v3834, 16
      %v4069 = vor.u32 %v4066, %v4067
      %v4070 = vsel %vm543, %v4062, %v4069
      %v4072 = vshrl.u32 %v3835, 16
      %v4074 = vrot.slane %v4072, 7
      %v4075 = vshll.u32 %v3835, 16
      %v4077 = vor.u32 %v4074, %v4075
      %v4078 = vrot.slane %v4074, 4
      %v4080 = vshrl.u32 %v3836, 16
      %v4082 = vrot.slane %v4080, 7
      %v4083 = vshll.u32 %v3836, 16
      %v4085 = vor.u32 %v4082, %v4083
      %v4086 = vsel %vm543, %v4078, %v4085
      %v4088 = vshrl.u32 %v3837, 16
      %v4090 = vrot.slane %v4088, 7
      %v4091 = vshll.u32 %v3837, 16
      %v4093 = vor.u32 %v4090, %v4091
      %v4094 = vrot.slane %v4090, 4
      %v4096 = vshrl.u32 %v3838, 16
      %v4098 = vrot.slane %v4096, 7
      %v4099 = vshll.u32 %v3838, 16
      %v4101 = vor.u32 %v4098, %v4099
      %v4102 = vsel %vm543, %v4094, %v4101
      %v4104 = vshrl.u32 %v3839, 16
      %v4106 = vrot.slane %v4104, 7
      %v4107 = vshll.u32 %v3839, 16
      %v4109 = vor.u32 %v4106, %v4107
      %v4110 = vrot.slane %v4106, 4
      %v4112 = vshrl.u32 %v3840, 16
      %v4114 = vrot.slane %v4112, 7
      %v4115 = vshll.u32 %v3840, 16
      %v4117 = vor.u32 %v4114, %v4115
      %v4118 = vsel %vm543, %v4110, %v4117
      %v4120 = vshrl.u32 %v3841, 16
      %v4122 = vrot.slane %v4120, 7
      %v4123 = vshll.u32 %v3841, 16
      %v4125 = vor.u32 %v4122, %v4123
      %v4126 = vrot.slane %v4122, 4
      %v4128 = vshrl.u32 %v3842, 16
      %v4130 = vrot.slane %v4128, 7
      %v4131 = vshll.u32 %v3842, 16
      %v4133 = vor.u32 %v4130, %v4131
      %v4134 = vsel %vm543, %v4126, %v4133
      %v4136 = vshrl.u32 %v3843, 16
      %v4138 = vrot.slane %v4136, 7
      %v4139 = vshll.u32 %v3843, 16
      %v4141 = vor.u32 %v4138, %v4139
      %v4142 = vrot.slane %v4138, 4
      %v4144 = vshrl.u32 %v3844, 16
      %v4146 = vrot.slane %v4144, 7
      %v4147 = vshll.u32 %v3844, 16
      %v4149 = vor.u32 %v4146, %v4147
      %v4150 = vsel %vm543, %v4142, %v4149
      %v4152 = vshrl.u32 %v3845, 16
      %v4154 = vrot.slane %v4152, 7
      %v4155 = vshll.u32 %v3845, 16
      %v4157 = vor.u32 %v4154, %v4155
      %v4158 = vrot.slane %v4154, 4
      %v4160 = vshrl.u32 %v3846, 16
      %v4162 = vrot.slane %v4160, 7
      %v4163 = vshll.u32 %v3846, 16
      %v4165 = vor.u32 %v4162, %v4163
      %v4166 = vsel %vm543, %v4158, %v4165
      %v4199 = vld [vmem:[%s509] sm:$0xf]
      %v4200 = vsel %vm834, %v3917, %v4199
      %4201 = vst [vmem:[%s509] sm:$0xf] %v4200
      %4202 = vst [vmem:[%s509 + $0xc] sm:$0xf] %v3926
      %v4203 = vld [vmem:[%s509 + $0x18] sm:$0xf]
      %v4204 = vsel %vm834, %v3933, %v4203
      %4205 = vst [vmem:[%s509 + $0x18] sm:$0xf] %v4204
      %4206 = vst [vmem:[%s509 + $0x24] sm:$0xf] %v3942
      %v4207 = vld [vmem:[%s509 + $0x30] sm:$0xf]
      %v4208 = vsel %vm834, %v3949, %v4207
      %4209 = vst [vmem:[%s509 + $0x30] sm:$0xf] %v4208
      %4210 = vst [vmem:[%s509 + $0x3c] sm:$0xf] %v3958
      %v4211 = vld [vmem:[%s509 + $0x48] sm:$0xf]
      %v4212 = vsel %vm834, %v3965, %v4211
      %4213 = vst [vmem:[%s509 + $0x48] sm:$0xf] %v4212
      %4214 = vst [vmem:[%s509 + $0x54] sm:$0xf] %v3974
      %v4215 = vld [vmem:[%s509 + $0x60] sm:$0xf]
      %v4216 = vsel %vm834, %v3981, %v4215
      %4217 = vst [vmem:[%s509 + $0x60] sm:$0xf] %v4216
      %4218 = vst [vmem:[%s509 + $0x6c] sm:$0xf] %v3990
      %v4219 = vld [vmem:[%s509 + $0x78] sm:$0xf]
      %v4220 = vsel %vm834, %v3997, %v4219
      %4221 = vst [vmem:[%s509 + $0x78] sm:$0xf] %v4220
      %4222 = vst [vmem:[%s509 + $0x84] sm:$0xf] %v4006
      %v4223 = vld [vmem:[%s509 + $0x90] sm:$0xf]
      %v4224 = vsel %vm834, %v4013, %v4223
      %4225 = vst [vmem:[%s509 + $0x90] sm:$0xf] %v4224
      %4226 = vst [vmem:[%s509 + $0x9c] sm:$0xf] %v4022
      %v4227 = vld [vmem:[%s509 + $0xa8] sm:$0xf]
      %v4228 = vsel %vm834, %v4029, %v4227
      %4229 = vst [vmem:[%s509 + $0xa8] sm:$0xf] %v4228
      %4230 = vst [vmem:[%s509 + $0xb4] sm:$0xf] %v4038
      %v4231 = vld [vmem:[%s509 + $0xc0] sm:$0xf]
      %v4232 = vsel %vm834, %v4045, %v4231
      %4233 = vst [vmem:[%s509 + $0xc0] sm:$0xf] %v4232
      %4234 = vst [vmem:[%s509 + $0xcc] sm:$0xf] %v4054
      %v4235 = vld [vmem:[%s509 + $0xd8] sm:$0xf]
      %v4236 = vsel %vm834, %v4061, %v4235
      %4237 = vst [vmem:[%s509 + $0xd8] sm:$0xf] %v4236
      %4238 = vst [vmem:[%s509 + $0xe4] sm:$0xf] %v4070
      %v4239 = vld [vmem:[%s509 + $0xf0] sm:$0xf]
      %v4240 = vsel %vm834, %v4077, %v4239
      %4241 = vst [vmem:[%s509 + $0xf0] sm:$0xf] %v4240
      %4242 = vst [vmem:[%s509 + $0xfc] sm:$0xf] %v4086
      %v4243 = vld [vmem:[%s509 + $0x108] sm:$0xf]
      %v4244 = vsel %vm834, %v4093, %v4243
      %4245 = vst [vmem:[%s509 + $0x108] sm:$0xf] %v4244
      %4246 = vst [vmem:[%s509 + $0x114] sm:$0xf] %v4102
      %v4247 = vld [vmem:[%s509 + $0x120] sm:$0xf]
      %v4248 = vsel %vm834, %v4109, %v4247
      %4249 = vst [vmem:[%s509 + $0x120] sm:$0xf] %v4248
      %4250 = vst [vmem:[%s509 + $0x12c] sm:$0xf] %v4118
      %v4251 = vld [vmem:[%s509 + $0x138] sm:$0xf]
      %v4252 = vsel %vm834, %v4125, %v4251
      %4253 = vst [vmem:[%s509 + $0x138] sm:$0xf] %v4252
      %4254 = vst [vmem:[%s509 + $0x144] sm:$0xf] %v4134
      %v4255 = vld [vmem:[%s509 + $0x150] sm:$0xf]
      %v4256 = vsel %vm834, %v4141, %v4255
      %4257 = vst [vmem:[%s509 + $0x150] sm:$0xf] %v4256
      %4258 = vst [vmem:[%s509 + $0x15c] sm:$0xf] %v4150
      %v4259 = vld [vmem:[%s509 + $0x168] sm:$0xf]
      %v4260 = vsel %vm834, %v4157, %v4259
      %4261 = vst [vmem:[%s509 + $0x168] sm:$0xf] %v4260
      %4262 = vst [vmem:[%s509 + $0x174] sm:$0xf] %v4166
      %v4263 = vrot.slane %v3912, 4
      %v4264 = vrot.slane %v3915, 5
      %v4265 = vor.u32 %v4263, %v4264
      %v4266 = vrot.slane %v4265, 4
      %v4267 = vrot.slane %v3923, 5
      %v4268 = vsel %vm901, %v4266, %v4267
      %v4269 = vrot.slane %v3920, 4
      %v4270 = vor.u32 %v4269, %v4267
      %v4271 = vrot.slane %v4270, 4
      %v4272 = vrot.slane %v3928, 4
      %v4273 = vrot.slane %v3931, 5
      %v4274 = vor.u32 %v4272, %v4273
      %v4275 = vrot.slane %v4274, 4
      %v4276 = vrot.slane %v3939, 5
      %v4277 = vsel %vm901, %v4275, %v4276
      %v4278 = vrot.slane %v3936, 4
      %v4279 = vor.u32 %v4278, %v4276
      %v4280 = vrot.slane %v4279, 4
      %v4281 = vrot.slane %v3944, 4
      %v4282 = vrot.slane %v3947, 5
      %v4283 = vor.u32 %v4281, %v4282
      %v4284 = vrot.slane %v4283, 4
      %v4285 = vrot.slane %v3955, 5
      %v4286 = vsel %vm901, %v4284, %v4285
      %v4287 = vrot.slane %v3952, 4
      %v4288 = vor.u32 %v4287, %v4285
      %v4289 = vrot.slane %v4288, 4
      %v4290 = vrot.slane %v3960, 4
      %v4291 = vrot.slane %v3963, 5
      %v4292 = vor.u32 %v4290, %v4291
      %v4293 = vrot.slane %v4292, 4
      %v4294 = vrot.slane %v3971, 5
      %v4295 = vsel %vm901, %v4293, %v4294
      %v4296 = vrot.slane %v3968, 4
      %v4297 = vor.u32 %v4296, %v4294
      %v4298 = vrot.slane %v4297, 4
      %v4299 = vrot.slane %v3976, 4
      %v4300 = vrot.slane %v3979, 5
      %v4301 = vor.u32 %v4299, %v4300
      %v4302 = vrot.slane %v4301, 4
      %v4303 = vrot.slane %v3987, 5
      %v4304 = vsel %vm901, %v4302, %v4303
      %v4305 = vrot.slane %v3984, 4
      %v4306 = vor.u32 %v4305, %v4303
      %v4307 = vrot.slane %v4306, 4
      %v4308 = vrot.slane %v3992, 4
      %v4309 = vrot.slane %v3995, 5
      %v4310 = vor.u32 %v4308, %v4309
      %v4311 = vrot.slane %v4310, 4
      %v4312 = vrot.slane %v4003, 5
      %v4313 = vsel %vm901, %v4311, %v4312
      %v4314 = vrot.slane %v4000, 4
      %v4315 = vor.u32 %v4314, %v4312
      %v4316 = vrot.slane %v4315, 4
      %v4317 = vrot.slane %v4008, 4
      %v4318 = vrot.slane %v4011, 5
      %v4319 = vor.u32 %v4317, %v4318
      %v4320 = vrot.slane %v4319, 4
      %v4321 = vrot.slane %v4019, 5
      %v4322 = vsel %vm901, %v4320, %v4321
      %v4323 = vrot.slane %v4016, 4
      %v4324 = vor.u32 %v4323, %v4321
      %v4325 = vrot.slane %v4324, 4
      %v4326 = vrot.slane %v4024, 4
      %v4327 = vrot.slane %v4027, 5
      %v4328 = vor.u32 %v4326, %v4327
      %v4329 = vrot.slane %v4328, 4
      %v4330 = vrot.slane %v4035, 5
      %v4331 = vsel %vm901, %v4329, %v4330
      %v4332 = vrot.slane %v4032, 4
      %v4333 = vor.u32 %v4332, %v4330
      %v4334 = vrot.slane %v4333, 4
      %v4335 = vrot.slane %v4040, 4
      %v4336 = vrot.slane %v4043, 5
      %v4337 = vor.u32 %v4335, %v4336
      %v4338 = vrot.slane %v4337, 4
      %v4339 = vrot.slane %v4051, 5
      %v4340 = vsel %vm901, %v4338, %v4339
      %v4341 = vrot.slane %v4048, 4
      %v4342 = vor.u32 %v4341, %v4339
      %v4343 = vrot.slane %v4342, 4
      %v4344 = vrot.slane %v4056, 4
      %v4345 = vrot.slane %v4059, 5
      %v4346 = vor.u32 %v4344, %v4345
      %v4347 = vrot.slane %v4346, 4
      %v4348 = vrot.slane %v4067, 5
      %v4349 = vsel %vm901, %v4347, %v4348
      %v4350 = vrot.slane %v4064, 4
      %v4351 = vor.u32 %v4350, %v4348
      %v4352 = vrot.slane %v4351, 4
      %v4353 = vrot.slane %v4072, 4
      %v4354 = vrot.slane %v4075, 5
      %v4355 = vor.u32 %v4353, %v4354
      %v4356 = vrot.slane %v4355, 4
      %v4357 = vrot.slane %v4083, 5
      %v4358 = vsel %vm901, %v4356, %v4357
      %v4359 = vrot.slane %v4080, 4
      %v4360 = vor.u32 %v4359, %v4357
      %v4361 = vrot.slane %v4360, 4
      %v4362 = vrot.slane %v4088, 4
      %v4363 = vrot.slane %v4091, 5
      %v4364 = vor.u32 %v4362, %v4363
      %v4365 = vrot.slane %v4364, 4
      %v4366 = vrot.slane %v4099, 5
      %v4367 = vsel %vm901, %v4365, %v4366
      %v4368 = vrot.slane %v4096, 4
      %v4369 = vor.u32 %v4368, %v4366
      %v4370 = vrot.slane %v4369, 4
      %v4371 = vrot.slane %v4104, 4
      %v4372 = vrot.slane %v4107, 5
      %v4373 = vor.u32 %v4371, %v4372
      %v4374 = vrot.slane %v4373, 4
      %v4375 = vrot.slane %v4115, 5
      %v4376 = vsel %vm901, %v4374, %v4375
      %v4377 = vrot.slane %v4112, 4
      %v4378 = vor.u32 %v4377, %v4375
      %v4379 = vrot.slane %v4378, 4
      %v4380 = vrot.slane %v4120, 4
      %v4381 = vrot.slane %v4123, 5
      %v4382 = vor.u32 %v4380, %v4381
      %v4383 = vrot.slane %v4382, 4
      %v4384 = vrot.slane %v4131, 5
      %v4385 = vsel %vm901, %v4383, %v4384
      %v4386 = vrot.slane %v4128, 4
      %v4387 = vor.u32 %v4386, %v4384
      %v4388 = vrot.slane %v4387, 4
      %v4389 = vrot.slane %v4136, 4
      %v4390 = vrot.slane %v4139, 5
      %v4391 = vor.u32 %v4389, %v4390
      %v4392 = vrot.slane %v4391, 4
      %v4393 = vrot.slane %v4147, 5
      %v4394 = vsel %vm901, %v4392, %v4393
      %v4395 = vrot.slane %v4144, 4
      %v4396 = vor.u32 %v4395, %v4393
      %v4397 = vrot.slane %v4396, 4
      %v4398 = vrot.slane %v4152, 4
      %v4399 = vrot.slane %v4155, 5
      %v4400 = vor.u32 %v4398, %v4399
      %v4401 = vrot.slane %v4400, 4
      %v4402 = vrot.slane %v4163, 5
      %v4403 = vsel %vm901, %v4401, %v4402
      %v4404 = vrot.slane %v4160, 4
      %v4405 = vor.u32 %v4404, %v4402
      %v4406 = vrot.slane %v4405, 4
      %4439 = vst [vmem:[%s509 + $0x8] sm:$0xf] %v4268
      %v4440 = vld [vmem:[%s509 + $0x14] sm:$0xf]
      %v4441 = vsel %vm1079, %v4271, %v4440
      %4442 = vst [vmem:[%s509 + $0x14] sm:$0xf] %v4441
      %4443 = vst [vmem:[%s509 + $0x20] sm:$0xf] %v4277
      %v4444 = vld [vmem:[%s509 + $0x2c] sm:$0xf]
      %v4445 = vsel %vm1079, %v4280, %v4444
      %4446 = vst [vmem:[%s509 + $0x2c] sm:$0xf] %v4445
      %4447 = vst [vmem:[%s509 + $0x38] sm:$0xf] %v4286
      %v4448 = vld [vmem:[%s509 + $0x44] sm:$0xf]
      %v4449 = vsel %vm1079, %v4289, %v4448
      %4450 = vst [vmem:[%s509 + $0x44] sm:$0xf] %v4449
      %4451 = vst [vmem:[%s509 + $0x50] sm:$0xf] %v4295
      %v4452 = vld [vmem:[%s509 + $0x5c] sm:$0xf]
      %v4453 = vsel %vm1079, %v4298, %v4452
      %4454 = vst [vmem:[%s509 + $0x5c] sm:$0xf] %v4453
      %4455 = vst [vmem:[%s509 + $0x68] sm:$0xf] %v4304
      %v4456 = vld [vmem:[%s509 + $0x74] sm:$0xf]
      %v4457 = vsel %vm1079, %v4307, %v4456
      %4458 = vst [vmem:[%s509 + $0x74] sm:$0xf] %v4457
      %4459 = vst [vmem:[%s509 + $0x80] sm:$0xf] %v4313
      %v4460 = vld [vmem:[%s509 + $0x8c] sm:$0xf]
      %v4461 = vsel %vm1079, %v4316, %v4460
      %4462 = vst [vmem:[%s509 + $0x8c] sm:$0xf] %v4461
      %4463 = vst [vmem:[%s509 + $0x98] sm:$0xf] %v4322
      %v4464 = vld [vmem:[%s509 + $0xa4] sm:$0xf]
      %v4465 = vsel %vm1079, %v4325, %v4464
      %4466 = vst [vmem:[%s509 + $0xa4] sm:$0xf] %v4465
      %4467 = vst [vmem:[%s509 + $0xb0] sm:$0xf] %v4331
      %v4468 = vld [vmem:[%s509 + $0xbc] sm:$0xf]
      %v4469 = vsel %vm1079, %v4334, %v4468
      %4470 = vst [vmem:[%s509 + $0xbc] sm:$0xf] %v4469
      %4471 = vst [vmem:[%s509 + $0xc8] sm:$0xf] %v4340
      %v4472 = vld [vmem:[%s509 + $0xd4] sm:$0xf]
      %v4473 = vsel %vm1079, %v4343, %v4472
      %4474 = vst [vmem:[%s509 + $0xd4] sm:$0xf] %v4473
      %4475 = vst [vmem:[%s509 + $0xe0] sm:$0xf] %v4349
      %v4476 = vld [vmem:[%s509 + $0xec] sm:$0xf]
      %v4477 = vsel %vm1079, %v4352, %v4476
      %4478 = vst [vmem:[%s509 + $0xec] sm:$0xf] %v4477
      %4479 = vst [vmem:[%s509 + $0xf8] sm:$0xf] %v4358
      %v4480 = vld [vmem:[%s509 + $0x104] sm:$0xf]
      %v4481 = vsel %vm1079, %v4361, %v4480
      %4482 = vst [vmem:[%s509 + $0x104] sm:$0xf] %v4481
      %4483 = vst [vmem:[%s509 + $0x110] sm:$0xf] %v4367
      %v4484 = vld [vmem:[%s509 + $0x11c] sm:$0xf]
      %v4485 = vsel %vm1079, %v4370, %v4484
      %4486 = vst [vmem:[%s509 + $0x11c] sm:$0xf] %v4485
      %4487 = vst [vmem:[%s509 + $0x128] sm:$0xf] %v4376
      %v4488 = vld [vmem:[%s509 + $0x134] sm:$0xf]
      %v4489 = vsel %vm1079, %v4379, %v4488
      %4490 = vst [vmem:[%s509 + $0x134] sm:$0xf] %v4489
      %4491 = vst [vmem:[%s509 + $0x140] sm:$0xf] %v4385
      %v4492 = vld [vmem:[%s509 + $0x14c] sm:$0xf]
      %v4493 = vsel %vm1079, %v4388, %v4492
      %4494 = vst [vmem:[%s509 + $0x14c] sm:$0xf] %v4493
      %4495 = vst [vmem:[%s509 + $0x158] sm:$0xf] %v4394
      %v4496 = vld [vmem:[%s509 + $0x164] sm:$0xf]
      %v4497 = vsel %vm1079, %v4397, %v4496
      %4498 = vst [vmem:[%s509 + $0x164] sm:$0xf] %v4497
      %4499 = vst [vmem:[%s509 + $0x170] sm:$0xf] %v4403
      %v4500 = vld [vmem:[%s509 + $0x17c] sm:$0xf]
      %v4501 = vsel %vm1079, %v4406, %v4500
      %4502 = vst [vmem:[%s509 + $0x17c] sm:$0xf] %v4501
      %v4503 = vld [vmem:[#allocation2] sm:$0xff]
      %v4504 = vld [vmem:[#allocation2 + $0x8] sm:$0xf]
      %v4505 = vld [vmem:[#allocation2 + $0xc] sm:$0xff]
      %v4506 = vld [vmem:[#allocation2 + $0x14] sm:$0xf]
      %v4507 = vld [vmem:[#allocation2 + $0x18] sm:$0xff]
      %v4508 = vld [vmem:[#allocation2 + $0x20] sm:$0xf]
      %v4509 = vld [vmem:[#allocation2 + $0x24] sm:$0xff]
      %v4510 = vld [vmem:[#allocation2 + $0x2c] sm:$0xf]
      %v4511 = vld [vmem:[#allocation2 + $0x30] sm:$0xff]
      %v4512 = vld [vmem:[#allocation2 + $0x38] sm:$0xf]
      %v4513 = vld [vmem:[#allocation2 + $0x3c] sm:$0xff]
      %v4514 = vld [vmem:[#allocation2 + $0x44] sm:$0xf]
      %v4515 = vld [vmem:[#allocation2 + $0x48] sm:$0xff]
      %v4516 = vld [vmem:[#allocation2 + $0x50] sm:$0xf]
      %v4517 = vld [vmem:[#allocation2 + $0x54] sm:$0xff]
      %v4518 = vld [vmem:[#allocation2 + $0x5c] sm:$0xf]
      %v4519 = vld [vmem:[#allocation2 + $0x60] sm:$0xff]
      %v4520 = vld [vmem:[#allocation2 + $0x68] sm:$0xf]
      %v4521 = vld [vmem:[#allocation2 + $0x6c] sm:$0xff]
      %v4522 = vld [vmem:[#allocation2 + $0x74] sm:$0xf]
      %v4523 = vld [vmem:[#allocation2 + $0x78] sm:$0xff]
      %v4524 = vld [vmem:[#allocation2 + $0x80] sm:$0xf]
      %v4525 = vld [vmem:[#allocation2 + $0x84] sm:$0xff]
      %v4526 = vld [vmem:[#allocation2 + $0x8c] sm:$0xf]
      %v4527 = vld [vmem:[#allocation2 + $0x90] sm:$0xff]
      %v4528 = vld [vmem:[#allocation2 + $0x98] sm:$0xf]
      %v4529 = vld [vmem:[#allocation2 + $0x9c] sm:$0xff]
      %v4530 = vld [vmem:[#allocation2 + $0xa4] sm:$0xf]
      %v4531 = vld [vmem:[#allocation2 + $0xa8] sm:$0xff]
      %v4532 = vld [vmem:[#allocation2 + $0xb0] sm:$0xf]
      %v4533 = vld [vmem:[#allocation2 + $0xb4] sm:$0xff]
      %v4534 = vld [vmem:[#allocation2 + $0xbc] sm:$0xf]
      %v4535 = vld [vmem:[#allocation2 + $0xc0] sm:$0xff]
      %v4536 = vld [vmem:[#allocation2 + $0xc8] sm:$0xf]
      %v4537 = vld [vmem:[#allocation2 + $0xcc] sm:$0xff]
      %v4538 = vld [vmem:[#allocation2 + $0xd4] sm:$0xf]
      %v4539 = vld [vmem:[#allocation2 + $0xd8] sm:$0xff]
      %v4540 = vld [vmem:[#allocation2 + $0xe0] sm:$0xf]
      %v4541 = vld [vmem:[#allocation2 + $0xe4] sm:$0xff]
      %v4542 = vld [vmem:[#allocation2 + $0xec] sm:$0xf]
      %v4543 = vld [vmem:[#allocation2 + $0xf0] sm:$0xff]
      %v4544 = vld [vmem:[#allocation2 + $0xf8] sm:$0xf]
      %v4545 = vld [vmem:[#allocation2 + $0xfc] sm:$0xff]
      %v4546 = vld [vmem:[#allocation2 + $0x104] sm:$0xf]
      %v4547 = vld [vmem:[#allocation2 + $0x108] sm:$0xff]
      %v4548 = vld [vmem:[#allocation2 + $0x110] sm:$0xf]
      %v4549 = vld [vmem:[#allocation2 + $0x114] sm:$0xff]
      %v4550 = vld [vmem:[#allocation2 + $0x11c] sm:$0xf]
      %v4551 = vld [vmem:[#allocation2 + $0x120] sm:$0xff]
      %v4552 = vld [vmem:[#allocation2 + $0x128] sm:$0xf]
      %v4553 = vld [vmem:[#allocation2 + $0x12c] sm:$0xff]
      %v4554 = vld [vmem:[#allocation2 + $0x134] sm:$0xf]
      %v4555 = vld [vmem:[#allocation2 + $0x138] sm:$0xff]
      %v4556 = vld [vmem:[#allocation2 + $0x140] sm:$0xf]
      %v4557 = vld [vmem:[#allocation2 + $0x144] sm:$0xff]
      %v4558 = vld [vmem:[#allocation2 + $0x14c] sm:$0xf]
      %v4559 = vld [vmem:[#allocation2 + $0x150] sm:$0xff]
      %v4560 = vld [vmem:[#allocation2 + $0x158] sm:$0xf]
      %v4561 = vld [vmem:[#allocation2 + $0x15c] sm:$0xff]
      %v4562 = vld [vmem:[#allocation2 + $0x164] sm:$0xf]
      %v4563 = vld [vmem:[#allocation2 + $0x168] sm:$0xff]
      %v4564 = vld [vmem:[#allocation2 + $0x170] sm:$0xf]
      %v4565 = vld [vmem:[#allocation2 + $0x174] sm:$0xff]
      %v4566 = vld [vmem:[#allocation2 + $0x17c] sm:$0xf]
      %v4567 = vld [vmem:[%s3] sm:$0xf]
      %v4568 = vld [vmem:[%s3 + $0x4] sm:$0xf]
      %v4569 = vld [vmem:[%s3 + $0x8] sm:$0xf]
      %v4570 = vld [vmem:[%s3 + $0xc] sm:$0xf]
      %v4571 = vld [vmem:[%s3 + $0x10] sm:$0xf]
      %v4572 = vld [vmem:[%s3 + $0x14] sm:$0xf]
      %v4573 = vld [vmem:[%s3 + $0x18] sm:$0xf]
      %v4574 = vld [vmem:[%s3 + $0x1c] sm:$0xf]
      %v4575 = vld [vmem:[%s3 + $0x20] sm:$0xf]
      %v4576 = vld [vmem:[%s3 + $0x24] sm:$0xf]
      %v4577 = vld [vmem:[%s3 + $0x28] sm:$0xf]
      %v4578 = vld [vmem:[%s3 + $0x2c] sm:$0xf]
      %v4579 = vld [vmem:[%s3 + $0x30] sm:$0xf]
      %v4580 = vld [vmem:[%s3 + $0x34] sm:$0xf]
      %v4581 = vld [vmem:[%s3 + $0x38] sm:$0xf]
      %v4582 = vld [vmem:[%s3 + $0x3c] sm:$0xf]
      %v4583 = vld [vmem:[%s3 + $0x40] sm:$0xf]
      %v4584 = vld [vmem:[%s3 + $0x44] sm:$0xf]
      %v4585 = vld [vmem:[%s3 + $0x48] sm:$0xf]
      %v4586 = vld [vmem:[%s3 + $0x4c] sm:$0xf]
      %v4587 = vld [vmem:[%s3 + $0x50] sm:$0xf]
      %v4588 = vld [vmem:[%s3 + $0x54] sm:$0xf]
      %v4589 = vld [vmem:[%s3 + $0x58] sm:$0xf]
      %v4590 = vld [vmem:[%s3 + $0x5c] sm:$0xf]
      %v4591 = vld [vmem:[%s3 + $0x60] sm:$0xf]
      %v4592 = vld [vmem:[%s3 + $0x64] sm:$0xf]
      %v4593 = vld [vmem:[%s3 + $0x68] sm:$0xf]
      %v4594 = vld [vmem:[%s3 + $0x6c] sm:$0xf]
      %v4595 = vld [vmem:[%s3 + $0x70] sm:$0xf]
      %v4596 = vld [vmem:[%s3 + $0x74] sm:$0xf]
      %v4597 = vld [vmem:[%s3 + $0x78] sm:$0xf]
      %v4598 = vld [vmem:[%s3 + $0x7c] sm:$0xf]
      %v4599 = vld [vmem:[%s3 + $0x80] sm:$0xf]
      %v4600 = vld [vmem:[%s3 + $0x84] sm:$0xf]
      %v4601 = vld [vmem:[%s3 + $0x88] sm:$0xf]
      %v4602 = vld [vmem:[%s3 + $0x8c] sm:$0xf]
      %v4603 = vld [vmem:[%s3 + $0x90] sm:$0xf]
      %v4604 = vld [vmem:[%s3 + $0x94] sm:$0xf]
      %v4605 = vld [vmem:[%s3 + $0x98] sm:$0xf]
      %v4606 = vld [vmem:[%s3 + $0x9c] sm:$0xf]
      %v4607 = vld [vmem:[%s3 + $0xa0] sm:$0xf]
      %v4608 = vld [vmem:[%s3 + $0xa4] sm:$0xf]
      %v4609 = vld [vmem:[%s3 + $0xa8] sm:$0xf]
      %v4610 = vld [vmem:[%s3 + $0xac] sm:$0xf]
      %v4611 = vld [vmem:[%s3 + $0xb0] sm:$0xf]
      %v4612 = vld [vmem:[%s3 + $0xb4] sm:$0xf]
      %v4613 = vld [vmem:[%s3 + $0xb8] sm:$0xf]
      %v4614 = vld [vmem:[%s3 + $0xbc] sm:$0xf]
      %v4615 = vld [vmem:[%s509] sm:$0xff]
      %v4616 = vld [vmem:[%s509 + $0x8] sm:$0xf]
      %v4617 = vld [vmem:[%s509 + $0xc] sm:$0xff]
      %v4618 = vld [vmem:[%s509 + $0x14] sm:$0xf]
      %v4619 = vld [vmem:[%s509 + $0x18] sm:$0xff]
      %v4620 = vld [vmem:[%s509 + $0x20] sm:$0xf]
      %v4621 = vld [vmem:[%s509 + $0x24] sm:$0xff]
      %v4622 = vld [vmem:[%s509 + $0x2c] sm:$0xf]
      %v4623 = vld [vmem:[%s509 + $0x30] sm:$0xff]
      %v4624 = vld [vmem:[%s509 + $0x38] sm:$0xf]
      %v4625 = vld [vmem:[%s509 + $0x3c] sm:$0xff]
      %v4626 = vld [vmem:[%s509 + $0x44] sm:$0xf]
      %v4627 = vld [vmem:[%s509 + $0x48] sm:$0xff]
      %v4628 = vld [vmem:[%s509 + $0x50] sm:$0xf]
      %v4629 = vld [vmem:[%s509 + $0x54] sm:$0xff]
      %v4630 = vld [vmem:[%s509 + $0x5c] sm:$0xf]
      %v4631 = vld [vmem:[%s509 + $0x60] sm:$0xff]
      %v4632 = vld [vmem:[%s509 + $0x68] sm:$0xf]
      %v4633 = vld [vmem:[%s509 + $0x6c] sm:$0xff]
      %v4634 = vld [vmem:[%s509 + $0x74] sm:$0xf]
      %v4635 = vld [vmem:[%s509 + $0x78] sm:$0xff]
      %v4636 = vld [vmem:[%s509 + $0x80] sm:$0xf]
      %v4637 = vld [vmem:[%s509 + $0x84] sm:$0xff]
      %v4638 = vld [vmem:[%s509 + $0x8c] sm:$0xf]
      %v4639 = vld [vmem:[%s509 + $0x90] sm:$0xff]
      %v4640 = vld [vmem:[%s509 + $0x98] sm:$0xf]
      %v4641 = vld [vmem:[%s509 + $0x9c] sm:$0xff]
      %v4642 = vld [vmem:[%s509 + $0xa4] sm:$0xf]
      %v4643 = vld [vmem:[%s509 + $0xa8] sm:$0xff]
      %v4644 = vld [vmem:[%s509 + $0xb0] sm:$0xf]
      %v4645 = vld [vmem:[%s509 + $0xb4] sm:$0xff]
      %v4646 = vld [vmem:[%s509 + $0xbc] sm:$0xf]
      %v4647 = vld [vmem:[%s509 + $0xc0] sm:$0xff]
      %v4648 = vld [vmem:[%s509 + $0xc8] sm:$0xf]
      %v4649 = vld [vmem:[%s509 + $0xcc] sm:$0xff]
      %v4650 = vld [vmem:[%s509 + $0xd4] sm:$0xf]
      %v4651 = vld [vmem:[%s509 + $0xd8] sm:$0xff]
      %v4652 = vld [vmem:[%s509 + $0xe0] sm:$0xf]
      %v4653 = vld [vmem:[%s509 + $0xe4] sm:$0xff]
      %v4654 = vld [vmem:[%s509 + $0xec] sm:$0xf]
      %v4655 = vld [vmem:[%s509 + $0xf0] sm:$0xff]
      %v4656 = vld [vmem:[%s509 + $0xf8] sm:$0xf]
      %v4657 = vld [vmem:[%s509 + $0xfc] sm:$0xff]
      %v4658 = vld [vmem:[%s509 + $0x104] sm:$0xf]
      %v4659 = vld [vmem:[%s509 + $0x108] sm:$0xff]
      %v4660 = vld [vmem:[%s509 + $0x110] sm:$0xf]
      %v4661 = vld [vmem:[%s509 + $0x114] sm:$0xff]
      %v4662 = vld [vmem:[%s509 + $0x11c] sm:$0xf]
      %v4663 = vld [vmem:[%s509 + $0x120] sm:$0xff]
      %v4664 = vld [vmem:[%s509 + $0x128] sm:$0xf]
      %v4665 = vld [vmem:[%s509 + $0x12c] sm:$0xff]
      %v4666 = vld [vmem:[%s509 + $0x134] sm:$0xf]
      %v4667 = vld [vmem:[%s509 + $0x138] sm:$0xff]
      %v4668 = vld [vmem:[%s509 + $0x140] sm:$0xf]
      %v4669 = vld [vmem:[%s509 + $0x144] sm:$0xff]
      %v4670 = vld [vmem:[%s509 + $0x14c] sm:$0xf]
      %v4671 = vld [vmem:[%s509 + $0x150] sm:$0xff]
      %v4672 = vld [vmem:[%s509 + $0x158] sm:$0xf]
      %v4673 = vld [vmem:[%s509 + $0x15c] sm:$0xff]
      %v4674 = vld [vmem:[%s509 + $0x164] sm:$0xf]
      %v4675 = vld [vmem:[%s509 + $0x168] sm:$0xff]
      %v4676 = vld [vmem:[%s509 + $0x170] sm:$0xf]
      %v4677 = vld [vmem:[%s509 + $0x174] sm:$0xff]
      %v4678 = vld [vmem:[%s509 + $0x17c] sm:$0xf]
      %s4679 = scalar_lea.vmem %s3, 192
      %v4680 = vld [vmem:[%s4679] sm:$0xf]
      %v4681 = vld [vmem:[%s4679 + $0x4] sm:$0xf]
      %v4682 = vld [vmem:[%s4679 + $0x8] sm:$0xf]
      %v4683 = vld [vmem:[%s4679 + $0xc] sm:$0xf]
      %v4684 = vld [vmem:[%s4679 + $0x10] sm:$0xf]
      %v4685 = vld [vmem:[%s4679 + $0x14] sm:$0xf]
      %v4686 = vld [vmem:[%s4679 + $0x18] sm:$0xf]
      %v4687 = vld [vmem:[%s4679 + $0x1c] sm:$0xf]
      %v4688 = vld [vmem:[%s4679 + $0x20] sm:$0xf]
      %v4689 = vld [vmem:[%s4679 + $0x24] sm:$0xf]
      %v4690 = vld [vmem:[%s4679 + $0x28] sm:$0xf]
      %v4691 = vld [vmem:[%s4679 + $0x2c] sm:$0xf]
      %v4692 = vld [vmem:[%s4679 + $0x30] sm:$0xf]
      %v4693 = vld [vmem:[%s4679 + $0x34] sm:$0xf]
      %v4694 = vld [vmem:[%s4679 + $0x38] sm:$0xf]
      %v4695 = vld [vmem:[%s4679 + $0x3c] sm:$0xf]
      %v4696 = vld [vmem:[%s4679 + $0x40] sm:$0xf]
      %v4697 = vld [vmem:[%s4679 + $0x44] sm:$0xf]
      %v4698 = vld [vmem:[%s4679 + $0x48] sm:$0xf]
      %v4699 = vld [vmem:[%s4679 + $0x4c] sm:$0xf]
      %v4700 = vld [vmem:[%s4679 + $0x50] sm:$0xf]
      %v4701 = vld [vmem:[%s4679 + $0x54] sm:$0xf]
      %v4702 = vld [vmem:[%s4679 + $0x58] sm:$0xf]
      %v4703 = vld [vmem:[%s4679 + $0x5c] sm:$0xf]
      %v4704 = vld [vmem:[%s4679 + $0x60] sm:$0xf]
      %v4705 = vld [vmem:[%s4679 + $0x64] sm:$0xf]
      %v4706 = vld [vmem:[%s4679 + $0x68] sm:$0xf]
      %v4707 = vld [vmem:[%s4679 + $0x6c] sm:$0xf]
      %v4708 = vld [vmem:[%s4679 + $0x70] sm:$0xf]
      %v4709 = vld [vmem:[%s4679 + $0x74] sm:$0xf]
      %v4710 = vld [vmem:[%s4679 + $0x78] sm:$0xf]
      %v4711 = vld [vmem:[%s4679 + $0x7c] sm:$0xf]
      %v4712 = vld [vmem:[%s4679 + $0x80] sm:$0xf]
      %v4713 = vld [vmem:[%s4679 + $0x84] sm:$0xf]
      %v4714 = vld [vmem:[%s4679 + $0x88] sm:$0xf]
      %v4715 = vld [vmem:[%s4679 + $0x8c] sm:$0xf]
      %v4716 = vld [vmem:[%s4679 + $0x90] sm:$0xf]
      %v4717 = vld [vmem:[%s4679 + $0x94] sm:$0xf]
      %v4718 = vld [vmem:[%s4679 + $0x98] sm:$0xf]
      %v4719 = vld [vmem:[%s4679 + $0x9c] sm:$0xf]
      %v4720 = vld [vmem:[%s4679 + $0xa0] sm:$0xf]
      %v4721 = vld [vmem:[%s4679 + $0xa4] sm:$0xf]
      %v4722 = vld [vmem:[%s4679 + $0xa8] sm:$0xf]
      %v4723 = vld [vmem:[%s4679 + $0xac] sm:$0xf]
      %v4724 = vld [vmem:[%s4679 + $0xb0] sm:$0xf]
      %v4725 = vld [vmem:[%s4679 + $0xb4] sm:$0xf]
      %v4726 = vld [vmem:[%s4679 + $0xb8] sm:$0xf]
      %v4727 = vld [vmem:[%s4679 + $0xbc] sm:$0xf]
      %v4792 = vunpack.c.l.b16 %v4615
      %v4793 = vunpack.c.h.b16 %v4615
      %v4794 = vunpack.c.l.b16 %v4616
      %v4795 = vunpack.c.l.b16 %v4617
      %v4796 = vunpack.c.h.b16 %v4617
      %v4797 = vunpack.c.l.b16 %v4618
      %v4798 = vunpack.c.l.b16 %v4619
      %v4799 = vunpack.c.h.b16 %v4619
      %v4800 = vunpack.c.l.b16 %v4620
      %v4801 = vunpack.c.l.b16 %v4621
      %v4802 = vunpack.c.h.b16 %v4621
      %v4803 = vunpack.c.l.b16 %v4622
      %v4804 = vunpack.c.l.b16 %v4623
      %v4805 = vunpack.c.h.b16 %v4623
      %v4806 = vunpack.c.l.b16 %v4624
      %v4807 = vunpack.c.l.b16 %v4625
      %v4808 = vunpack.c.h.b16 %v4625
      %v4809 = vunpack.c.l.b16 %v4626
      %v4810 = vunpack.c.l.b16 %v4627
      %v4811 = vunpack.c.h.b16 %v4627
      %v4812 = vunpack.c.l.b16 %v4628
      %v4813 = vunpack.c.l.b16 %v4629
      %v4814 = vunpack.c.h.b16 %v4629
      %v4815 = vunpack.c.l.b16 %v4630
      %v4816 = vunpack.c.l.b16 %v4631
      %v4817 = vunpack.c.h.b16 %v4631
      %v4818 = vunpack.c.l.b16 %v4632
      %v4819 = vunpack.c.l.b16 %v4633
      %v4820 = vunpack.c.h.b16 %v4633
      %v4821 = vunpack.c.l.b16 %v4634
      %v4822 = vunpack.c.l.b16 %v4635
      %v4823 = vunpack.c.h.b16 %v4635
      %v4824 = vunpack.c.l.b16 %v4636
      %v4825 = vunpack.c.l.b16 %v4637
      %v4826 = vunpack.c.h.b16 %v4637
      %v4827 = vunpack.c.l.b16 %v4638
      %v4828 = vunpack.c.l.b16 %v4639
      %v4829 = vunpack.c.h.b16 %v4639
      %v4830 = vunpack.c.l.b16 %v4640
      %v4831 = vunpack.c.l.b16 %v4641
      %v4832 = vunpack.c.h.b16 %v4641
      %v4833 = vunpack.c.l.b16 %v4642
      %v4834 = vunpack.c.l.b16 %v4643
      %v4835 = vunpack.c.h.b16 %v4643
      %v4836 = vunpack.c.l.b16 %v4644
      %v4837 = vunpack.c.l.b16 %v4645
      %v4838 = vunpack.c.h.b16 %v4645
      %v4839 = vunpack.c.l.b16 %v4646
      %v4840 = vunpack.c.l.b16 %v4647
      %v4841 = vunpack.c.h.b16 %v4647
      %v4842 = vunpack.c.l.b16 %v4648
      %v4843 = vunpack.c.l.b16 %v4649
      %v4844 = vunpack.c.h.b16 %v4649
      %v4845 = vunpack.c.l.b16 %v4650
      %v4846 = vunpack.c.l.b16 %v4651
      %v4847 = vunpack.c.h.b16 %v4651
      %v4848 = vunpack.c.l.b16 %v4652
      %v4849 = vunpack.c.l.b16 %v4653
      %v4850 = vunpack.c.h.b16 %v4653
      %v4851 = vunpack.c.l.b16 %v4654
      %v4852 = vunpack.c.l.b16 %v4655
      %v4853 = vunpack.c.h.b16 %v4655
      %v4854 = vunpack.c.l.b16 %v4656
      %v4855 = vunpack.c.l.b16 %v4657
      %v4856 = vunpack.c.h.b16 %v4657
      %v4857 = vunpack.c.l.b16 %v4658
      %v4858 = vunpack.c.l.b16 %v4659
      %v4859 = vunpack.c.h.b16 %v4659
      %v4860 = vunpack.c.l.b16 %v4660
      %v4861 = vunpack.c.l.b16 %v4661
      %v4862 = vunpack.c.h.b16 %v4661
      %v4863 = vunpack.c.l.b16 %v4662
      %v4864 = vunpack.c.l.b16 %v4663
      %v4865 = vunpack.c.h.b16 %v4663
      %v4866 = vunpack.c.l.b16 %v4664
      %v4867 = vunpack.c.l.b16 %v4665
      %v4868 = vunpack.c.h.b16 %v4665
      %v4869 = vunpack.c.l.b16 %v4666
      %v4870 = vunpack.c.l.b16 %v4667
      %v4871 = vunpack.c.h.b16 %v4667
      %v4872 = vunpack.c.l.b16 %v4668
      %v4873 = vunpack.c.l.b16 %v4669
      %v4874 = vunpack.c.h.b16 %v4669
      %v4875 = vunpack.c.l.b16 %v4670
      %v4876 = vunpack.c.l.b16 %v4671
      %v4877 = vunpack.c.h.b16 %v4671
      %v4878 = vunpack.c.l.b16 %v4672
      %v4879 = vunpack.c.l.b16 %v4673
      %v4880 = vunpack.c.h.b16 %v4673
      %v4881 = vunpack.c.l.b16 %v4674
      %v4882 = vunpack.c.l.b16 %v4675
      %v4883 = vunpack.c.h.b16 %v4675
      %v4884 = vunpack.c.l.b16 %v4676
      %v4885 = vunpack.c.l.b16 %v4677
      %v4886 = vunpack.c.h.b16 %v4677
      %v4887 = vunpack.c.l.b16 %v4678
      %v4888 = vpack.c.b16 %v4795, %v4792
      %v4889 = vpack.c.b16 %v4796, %v4793
      %v4890 = vpack.c.b16 %v4797, %v4794
      %v4891 = vpack.c.b16 %v4801, %v4798
      %v4892 = vpack.c.b16 %v4802, %v4799
      %v4893 = vpack.c.b16 %v4803, %v4800
      %v4894 = vpack.c.b16 %v4807, %v4804
      %v4895 = vpack.c.b16 %v4808, %v4805
      %v4896 = vpack.c.b16 %v4809, %v4806
      %v4897 = vpack.c.b16 %v4813, %v4810
      %v4898 = vpack.c.b16 %v4814, %v4811
      %v4899 = vpack.c.b16 %v4815, %v4812
      %v4900 = vpack.c.b16 %v4819, %v4816
      %v4901 = vpack.c.b16 %v4820, %v4817
      %v4902 = vpack.c.b16 %v4821, %v4818
      %v4903 = vpack.c.b16 %v4825, %v4822
      %v4904 = vpack.c.b16 %v4826, %v4823
      %v4905 = vpack.c.b16 %v4827, %v4824
      %v4906 = vpack.c.b16 %v4831, %v4828
      %v4907 = vpack.c.b16 %v4832, %v4829
      %v4908 = vpack.c.b16 %v4833, %v4830
      %v4909 = vpack.c.b16 %v4837, %v4834
      %v4910 = vpack.c.b16 %v4838, %v4835
      %v4911 = vpack.c.b16 %v4839, %v4836
      %v4912 = vpack.c.b16 %v4843, %v4840
      %v4913 = vpack.c.b16 %v4844, %v4841
      %v4914 = vpack.c.b16 %v4845, %v4842
      %v4915 = vpack.c.b16 %v4849, %v4846
      %v4916 = vpack.c.b16 %v4850, %v4847
      %v4917 = vpack.c.b16 %v4851, %v4848
      %v4918 = vpack.c.b16 %v4855, %v4852
      %v4919 = vpack.c.b16 %v4856, %v4853
      %v4920 = vpack.c.b16 %v4857, %v4854
      %v4921 = vpack.c.b16 %v4861, %v4858
      %v4922 = vpack.c.b16 %v4862, %v4859
      %v4923 = vpack.c.b16 %v4863, %v4860
      %v4924 = vpack.c.b16 %v4867, %v4864
      %v4925 = vpack.c.b16 %v4868, %v4865
      %v4926 = vpack.c.b16 %v4869, %v4866
      %v4927 = vpack.c.b16 %v4873, %v4870
      %v4928 = vpack.c.b16 %v4874, %v4871
      %v4929 = vpack.c.b16 %v4875, %v4872
      %v4930 = vpack.c.b16 %v4879, %v4876
      %v4931 = vpack.c.b16 %v4880, %v4877
      %v4932 = vpack.c.b16 %v4881, %v4878
      %v4933 = vpack.c.b16 %v4885, %v4882
      %v4934 = vpack.c.b16 %v4886, %v4883
      %v4935 = vpack.c.b16 %v4887, %v4884
      %v5032 = vunpack.c.l.b16 %v4680
      %v5033 = vunpack.c.l.b16 %v4681
      %v5034 = vunpack.c.l.b16 %v4682
      %v5035 = vunpack.c.l.b16 %v4683
      %v5036 = vunpack.c.l.b16 %v4684
      %v5037 = vunpack.c.l.b16 %v4685
      %v5038 = vunpack.c.l.b16 %v4686
      %v5039 = vunpack.c.l.b16 %v4687
      %v5040 = vunpack.c.l.b16 %v4688
      %v5041 = vunpack.c.l.b16 %v4689
      %v5042 = vunpack.c.l.b16 %v4690
      %v5043 = vunpack.c.l.b16 %v4691
      %v5044 = vunpack.c.l.b16 %v4692
      %v5045 = vunpack.c.l.b16 %v4693
      %v5046 = vunpack.c.l.b16 %v4694
      %v5047 = vunpack.c.l.b16 %v4695
      %v5048 = vunpack.c.l.b16 %v4696
      %v5049 = vunpack.c.l.b16 %v4697
      %v5050 = vunpack.c.l.b16 %v4698
      %v5051 = vunpack.c.l.b16 %v4699
      %v5052 = vunpack.c.l.b16 %v4700
      %v5053 = vunpack.c.l.b16 %v4701
      %v5054 = vunpack.c.l.b16 %v4702
      %v5055 = vunpack.c.l.b16 %v4703
      %v5056 = vunpack.c.l.b16 %v4704
      %v5057 = vunpack.c.l.b16 %v4705
      %v5058 = vunpack.c.l.b16 %v4706
      %v5059 = vunpack.c.l.b16 %v4707
      %v5060 = vunpack.c.l.b16 %v4708
      %v5061 = vunpack.c.l.b16 %v4709
      %v5062 = vunpack.c.l.b16 %v4710
      %v5063 = vunpack.c.l.b16 %v4711
      %v5064 = vunpack.c.l.b16 %v4712
      %v5065 = vunpack.c.l.b16 %v4713
      %v5066 = vunpack.c.l.b16 %v4714
      %v5067 = vunpack.c.l.b16 %v4715
      %v5068 = vunpack.c.l.b16 %v4716
      %v5069 = vunpack.c.l.b16 %v4717
      %v5070 = vunpack.c.l.b16 %v4718
      %v5071 = vunpack.c.l.b16 %v4719
      %v5072 = vunpack.c.l.b16 %v4720
      %v5073 = vunpack.c.l.b16 %v4721
      %v5074 = vunpack.c.l.b16 %v4722
      %v5075 = vunpack.c.l.b16 %v4723
      %v5076 = vunpack.c.l.b16 %v4724
      %v5077 = vunpack.c.l.b16 %v4725
      %v5078 = vunpack.c.l.b16 %v4726
      %v5079 = vunpack.c.l.b16 %v4727
      %v5080 = vpack.c.b16 %v5033, %v5032
      %v5081 = vpack.c.b16 %v5035, %v5034
      %v5082 = vpack.c.b16 %v5037, %v5036
      %v5083 = vpack.c.b16 %v5039, %v5038
      %v5084 = vpack.c.b16 %v5041, %v5040
      %v5085 = vpack.c.b16 %v5043, %v5042
      %v5086 = vpack.c.b16 %v5045, %v5044
      %v5087 = vpack.c.b16 %v5047, %v5046
      %v5088 = vpack.c.b16 %v5049, %v5048
      %v5089 = vpack.c.b16 %v5051, %v5050
      %v5090 = vpack.c.b16 %v5053, %v5052
      %v5091 = vpack.c.b16 %v5055, %v5054
      %v5092 = vpack.c.b16 %v5057, %v5056
      %v5093 = vpack.c.b16 %v5059, %v5058
      %v5094 = vpack.c.b16 %v5061, %v5060
      %v5095 = vpack.c.b16 %v5063, %v5062
      %v5096 = vpack.c.b16 %v5065, %v5064
      %v5097 = vpack.c.b16 %v5067, %v5066
      %v5098 = vpack.c.b16 %v5069, %v5068
      %v5099 = vpack.c.b16 %v5071, %v5070
      %v5100 = vpack.c.b16 %v5073, %v5072
      %v5101 = vpack.c.b16 %v5075, %v5074
      %v5102 = vpack.c.b16 %v5077, %v5076
      %v5103 = vpack.c.b16 %v5079, %v5078
      %5128 = vmatprep.subr.bf16.mxu0 0
      %5129 = vmatpush1.bf16.msra.mxu0 %v5087
      %5130 = vmatprep.subr.bf16.mxu0 0
      %5131 = vmatpush1.bf16.msra.mxu0 %v5086
      %5132 = vmatprep.subr.bf16.mxu0 0
      %5133 = vmatpush1.bf16.msra.mxu0 %v5085
      %5134 = vmatprep.subr.bf16.mxu0 0
      %5135 = vmatpush1.bf16.msra.mxu0 %v5084
      %5136 = vmatprep.subr.bf16.mxu0 0
      %5137 = vmatpush1.bf16.msra.mxu0 %v5083
      %5138 = vmatprep.subr.bf16.mxu0 0
      %5139 = vmatpush1.bf16.msra.mxu0 %v5082
      %5140 = vmatprep.subr.bf16.mxu0 0
      %5141 = vmatpush1.bf16.msra.mxu0 %v5081
      %5142 = vmatprep.subr.bf16.mxu0 0
      %5143 = vmatpush1.bf16.msra.mxu0 %v5080
      %5144 = vmatprep.subr.bf16.mxu0 0
      %5145 = vmatpush2.bf16.msra.mxu0 %v5095
      %5146 = vmatprep.subr.bf16.mxu0 0
      %5147 = vmatpush2.bf16.msra.mxu0 %v5094
      %5148 = vmatprep.subr.bf16.mxu0 0
      %5149 = vmatpush2.bf16.msra.mxu0 %v5093
      %5150 = vmatprep.subr.bf16.mxu0 0
      %5151 = vmatpush2.bf16.msra.mxu0 %v5092
      %5152 = vmatprep.subr.bf16.mxu0 0
      %5153 = vmatpush2.bf16.msra.mxu0 %v5091
      %5154 = vmatprep.subr.bf16.mxu0 0
      %5155 = vmatpush2.bf16.msra.mxu0 %v5090
      %5156 = vmatprep.subr.bf16.mxu0 0
      %5157 = vmatpush2.bf16.msra.mxu0 %v5089
      %5158 = vmatprep.subr.bf16.mxu0 0
      %5159 = vmatpush2.bf16.msra.mxu0 %v5088
      %5160 = vmatprep.mubr.bf16.mxu0 %v4889
      %5161 = vmatmul.mubr.bf16.gmra.mxu0 %v4888
      %v5162 = vpop.f32.mrf.mxu0
      %v5163 = vadd.f32 0.0, %v5162
      %v5164 = vpop.f32.mrf.mxu0
      %v5165 = vpop.f32.mrf.mxu0
      %v5166 = vadd.f32 0.0, %v5165
      %v5167 = vpop.f32.mrf.mxu0
      %5168 = vmatprep.mubr.bf16.mxu0 %v4892
      %5169 = vmatmul.mubr.bf16.gmra.mxu0 %v4891
      %v5170 = vpop.f32.mrf.mxu0
      %v5171 = vadd.f32 0.0, %v5170
      %v5172 = vpop.f32.mrf.mxu0
      %v5173 = vpop.f32.mrf.mxu0
      %v5174 = vadd.f32 0.0, %v5173
      %v5175 = vpop.f32.mrf.mxu0
      %5176 = vmatprep.mubr.bf16.mxu0 %v4895
      %5177 = vmatmul.mubr.bf16.gmra.mxu0 %v4894
      %v5178 = vpop.f32.mrf.mxu0
      %v5179 = vadd.f32 0.0, %v5178
      %v5180 = vpop.f32.mrf.mxu0
      %v5181 = vpop.f32.mrf.mxu0
      %v5182 = vadd.f32 0.0, %v5181
      %v5183 = vpop.f32.mrf.mxu0
      %5184 = vmatprep.mubr.bf16.mxu0 %v4898
      %5185 = vmatmul.mubr.bf16.gmra.mxu0 %v4897
      %v5186 = vpop.f32.mrf.mxu0
      %v5187 = vadd.f32 0.0, %v5186
      %v5188 = vpop.f32.mrf.mxu0
      %v5189 = vpop.f32.mrf.mxu0
      %v5190 = vadd.f32 0.0, %v5189
      %v5191 = vpop.f32.mrf.mxu0
      %5192 = vmatprep.mubr.bf16.mxu0 %v4901
      %5193 = vmatmul.mubr.bf16.gmra.mxu0 %v4900
      %v5194 = vpop.f32.mrf.mxu0
      %v5195 = vadd.f32 0.0, %v5194
      %v5196 = vpop.f32.mrf.mxu0
      %v5197 = vpop.f32.mrf.mxu0
      %v5198 = vadd.f32 0.0, %v5197
      %v5199 = vpop.f32.mrf.mxu0
      %5200 = vmatprep.mubr.bf16.mxu0 %v4904
      %5201 = vmatmul.mubr.bf16.gmra.mxu0 %v4903
      %v5202 = vpop.f32.mrf.mxu0
      %v5203 = vadd.f32 0.0, %v5202
      %v5204 = vpop.f32.mrf.mxu0
      %v5205 = vpop.f32.mrf.mxu0
      %v5206 = vadd.f32 0.0, %v5205
      %v5207 = vpop.f32.mrf.mxu0
      %5208 = vmatprep.mubr.bf16.mxu0 %v4907
      %5209 = vmatmul.mubr.bf16.gmra.mxu0 %v4906
      %v5210 = vpop.f32.mrf.mxu0
      %v5211 = vadd.f32 0.0, %v5210
      %v5212 = vpop.f32.mrf.mxu0
      %v5213 = vpop.f32.mrf.mxu0
      %v5214 = vadd.f32 0.0, %v5213
      %v5215 = vpop.f32.mrf.mxu0
      %5216 = vmatprep.mubr.bf16.mxu0 %v4910
      %5217 = vmatmul.mubr.bf16.gmra.mxu0 %v4909
      %v5218 = vpop.f32.mrf.mxu0
      %v5219 = vadd.f32 0.0, %v5218
      %v5220 = vpop.f32.mrf.mxu0
      %v5221 = vpop.f32.mrf.mxu0
      %v5222 = vadd.f32 0.0, %v5221
      %v5223 = vpop.f32.mrf.mxu0
      %5224 = vmatprep.mubr.bf16.mxu0 %v4913
      %5225 = vmatmul.mubr.bf16.gmra.mxu0 %v4912
      %v5226 = vpop.f32.mrf.mxu0
      %v5227 = vadd.f32 0.0, %v5226
      %v5228 = vpop.f32.mrf.mxu0
      %v5229 = vpop.f32.mrf.mxu0
      %v5230 = vadd.f32 0.0, %v5229
      %v5231 = vpop.f32.mrf.mxu0
      %5232 = vmatprep.mubr.bf16.mxu0 %v4916
      %5233 = vmatmul.mubr.bf16.gmra.mxu0 %v4915
      %v5234 = vpop.f32.mrf.mxu0
      %v5235 = vadd.f32 0.0, %v5234
      %v5236 = vpop.f32.mrf.mxu0
      %v5237 = vpop.f32.mrf.mxu0
      %v5238 = vadd.f32 0.0, %v5237
      %v5239 = vpop.f32.mrf.mxu0
      %5240 = vmatprep.mubr.bf16.mxu0 %v4919
      %5241 = vmatmul.mubr.bf16.gmra.mxu0 %v4918
      %v5242 = vpop.f32.mrf.mxu0
      %v5243 = vadd.f32 0.0, %v5242
      %v5244 = vpop.f32.mrf.mxu0
      %v5245 = vpop.f32.mrf.mxu0
      %v5246 = vadd.f32 0.0, %v5245
      %v5247 = vpop.f32.mrf.mxu0
      %5248 = vmatprep.mubr.bf16.mxu0 %v4922
      %5249 = vmatmul.mubr.bf16.gmra.mxu0 %v4921
      %v5250 = vpop.f32.mrf.mxu0
      %v5251 = vadd.f32 0.0, %v5250
      %v5252 = vpop.f32.mrf.mxu0
      %v5253 = vpop.f32.mrf.mxu0
      %v5254 = vadd.f32 0.0, %v5253
      %v5255 = vpop.f32.mrf.mxu0
      %5256 = vmatprep.mubr.bf16.mxu0 %v4925
      %5257 = vmatmul.mubr.bf16.gmra.mxu0 %v4924
      %v5258 = vpop.f32.mrf.mxu0
      %v5259 = vadd.f32 0.0, %v5258
      %v5260 = vpop.f32.mrf.mxu0
      %v5261 = vpop.f32.mrf.mxu0
      %v5262 = vadd.f32 0.0, %v5261
      %v5263 = vpop.f32.mrf.mxu0
      %5264 = vmatprep.mubr.bf16.mxu0 %v4928
      %5265 = vmatmul.mubr.bf16.gmra.mxu0 %v4927
      %v5266 = vpop.f32.mrf.mxu0
      %v5267 = vadd.f32 0.0, %v5266
      %v5268 = vpop.f32.mrf.mxu0
      %v5269 = vpop.f32.mrf.mxu0
      %v5270 = vadd.f32 0.0, %v5269
      %v5271 = vpop.f32.mrf.mxu0
      %5272 = vmatprep.mubr.bf16.mxu0 %v4931
      %5273 = vmatmul.mubr.bf16.gmra.mxu0 %v4930
      %v5274 = vpop.f32.mrf.mxu0
      %v5275 = vadd.f32 0.0, %v5274
      %v5276 = vpop.f32.mrf.mxu0
      %v5277 = vpop.f32.mrf.mxu0
      %v5278 = vadd.f32 0.0, %v5277
      %v5279 = vpop.f32.mrf.mxu0
      %5280 = vmatprep.mubr.bf16.mxu0 %v4934
      %5281 = vmatmul.mubr.bf16.gmra.mxu0 %v4933
      %v5282 = vpop.f32.mrf.mxu0
      %v5283 = vadd.f32 0.0, %v5282
      %v5284 = vpop.f32.mrf.mxu0
      %v5285 = vpop.f32.mrf.mxu0
      %v5286 = vadd.f32 0.0, %v5285
      %v5287 = vpop.f32.mrf.mxu0
      %5288 = vdwg.mxu0
      %5289 = vmatprep.subr.bf16.mxu0 0
      %5290 = vmatpush1.bf16.msra.mxu0 %v5103
      %5291 = vmatprep.subr.bf16.mxu0 0
      %5292 = vmatpush1.bf16.msra.mxu0 %v5102
      %5293 = vmatprep.subr.bf16.mxu0 0
      %5294 = vmatpush1.bf16.msra.mxu0 %v5101
      %5295 = vmatprep.subr.bf16.mxu0 0
      %5296 = vmatpush1.bf16.msra.mxu0 %v5100
      %5297 = vmatprep.subr.bf16.mxu0 0
      %5298 = vmatpush1.bf16.msra.mxu0 %v5099
      %5299 = vmatprep.subr.bf16.mxu0 0
      %5300 = vmatpush1.bf16.msra.mxu0 %v5098
      %5301 = vmatprep.subr.bf16.mxu0 0
      %5302 = vmatpush1.bf16.msra.mxu0 %v5097
      %5303 = vmatprep.subr.bf16.mxu0 0
      %5304 = vmatpush1.bf16.msra.mxu0 %v5096
      %5305 = vmatprep.subr.bf16.mxu0 0
      %5306 = vmatpush2.bf16.msra.mxu0 0
      %5307 = vmatprep.subr.bf16.mxu0 0
      %5308 = vmatpush2.bf16.msra.mxu0 0
      %5309 = vmatprep.subr.bf16.mxu0 0
      %5310 = vmatpush2.bf16.msra.mxu0 0
      %5311 = vmatprep.subr.bf16.mxu0 0
      %5312 = vmatpush2.bf16.msra.mxu0 0
      %5313 = vmatprep.subr.bf16.mxu0 0
      %5314 = vmatpush2.bf16.msra.mxu0 0
      %5315 = vmatprep.subr.bf16.mxu0 0
      %5316 = vmatpush2.bf16.msra.mxu0 0
      %5317 = vmatprep.subr.bf16.mxu0 0
      %5318 = vmatpush2.bf16.msra.mxu0 0
      %5319 = vmatprep.subr.bf16.mxu0 0
      %5320 = vmatpush2.bf16.msra.mxu0 0
      %5321 = vmatprep.mubr.bf16.mxu0 0
      %5322 = vmatmul.mubr.bf16.gmra.mxu0 %v4890
      %v5323 = vpop.f32.mrf.mxu0
      %v5324 = vadd.f32 %v5163, %v5323
      %v5325 = vpop.f32.mrf.mxu0
      %v5326 = vpop.f32.mrf.mxu0
      %v5327 = vadd.f32 %v5166, %v5326
      %v5328 = vpop.f32.mrf.mxu0
      %5329 = vmatprep.mubr.bf16.mxu0 0
      %5330 = vmatmul.mubr.bf16.gmra.mxu0 %v4893
      %v5331 = vpop.f32.mrf.mxu0
      %v5332 = vadd.f32 %v5171, %v5331
      %v5333 = vpop.f32.mrf.mxu0
      %v5334 = vpop.f32.mrf.mxu0
      %v5335 = vadd.f32 %v5174, %v5334
      %v5336 = vpop.f32.mrf.mxu0
      %5337 = vmatprep.mubr.bf16.mxu0 0
      %5338 = vmatmul.mubr.bf16.gmra.mxu0 %v4896
      %v5339 = vpop.f32.mrf.mxu0
      %v5340 = vadd.f32 %v5179, %v5339
      %v5341 = vpop.f32.mrf.mxu0
      %v5342 = vpop.f32.mrf.mxu0
      %v5343 = vadd.f32 %v5182, %v5342
      %v5344 = vpop.f32.mrf.mxu0
      %5345 = vmatprep.mubr.bf16.mxu0 0
      %5346 = vmatmul.mubr.bf16.gmra.mxu0 %v4899
      %v5347 = vpop.f32.mrf.mxu0
      %v5348 = vadd.f32 %v5187, %v5347
      %v5349 = vpop.f32.mrf.mxu0
      %v5350 = vpop.f32.mrf.mxu0
      %v5351 = vadd.f32 %v5190, %v5350
      %v5352 = vpop.f32.mrf.mxu0
      %5353 = vmatprep.mubr.bf16.mxu0 0
      %5354 = vmatmul.mubr.bf16.gmra.mxu0 %v4902
      %v5355 = vpop.f32.mrf.mxu0
      %v5356 = vadd.f32 %v5195, %v5355
      %v5357 = vpop.f32.mrf.mxu0
      %v5358 = vpop.f32.mrf.mxu0
      %v5359 = vadd.f32 %v5198, %v5358
      %v5360 = vpop.f32.mrf.mxu0
      %5361 = vmatprep.mubr.bf16.mxu0 0
      %5362 = vmatmul.mubr.bf16.gmra.mxu0 %v4905
      %v5363 = vpop.f32.mrf.mxu0
      %v5364 = vadd.f32 %v5203, %v5363
      %v5365 = vpop.f32.mrf.mxu0
      %v5366 = vpop.f32.mrf.mxu0
      %v5367 = vadd.f32 %v5206, %v5366
      %v5368 = vpop.f32.mrf.mxu0
      %5369 = vmatprep.mubr.bf16.mxu0 0
      %5370 = vmatmul.mubr.bf16.gmra.mxu0 %v4908
      %v5371 = vpop.f32.mrf.mxu0
      %v5372 = vadd.f32 %v5211, %v5371
      %v5373 = vpop.f32.mrf.mxu0
      %v5374 = vpop.f32.mrf.mxu0
      %v5375 = vadd.f32 %v5214, %v5374
      %v5376 = vpop.f32.mrf.mxu0
      %5377 = vmatprep.mubr.bf16.mxu0 0
      %5378 = vmatmul.mubr.bf16.gmra.mxu0 %v4911
      %v5379 = vpop.f32.mrf.mxu0
      %v5380 = vadd.f32 %v5219, %v5379
      %v5381 = vpop.f32.mrf.mxu0
      %v5382 = vpop.f32.mrf.mxu0
      %v5383 = vadd.f32 %v5222, %v5382
      %v5384 = vpop.f32.mrf.mxu0
      %5385 = vmatprep.mubr.bf16.mxu0 0
      %5386 = vmatmul.mubr.bf16.gmra.mxu0 %v4914
      %v5387 = vpop.f32.mrf.mxu0
      %v5388 = vadd.f32 %v5227, %v5387
      %v5389 = vpop.f32.mrf.mxu0
      %v5390 = vpop.f32.mrf.mxu0
      %v5391 = vadd.f32 %v5230, %v5390
      %v5392 = vpop.f32.mrf.mxu0
      %5393 = vmatprep.mubr.bf16.mxu0 0
      %5394 = vmatmul.mubr.bf16.gmra.mxu0 %v4917
      %v5395 = vpop.f32.mrf.mxu0
      %v5396 = vadd.f32 %v5235, %v5395
      %v5397 = vpop.f32.mrf.mxu0
      %v5398 = vpop.f32.mrf.mxu0
      %v5399 = vadd.f32 %v5238, %v5398
      %v5400 = vpop.f32.mrf.mxu0
      %5401 = vmatprep.mubr.bf16.mxu0 0
      %5402 = vmatmul.mubr.bf16.gmra.mxu0 %v4920
      %v5403 = vpop.f32.mrf.mxu0
      %v5404 = vadd.f32 %v5243, %v5403
      %v5405 = vpop.f32.mrf.mxu0
      %v5406 = vpop.f32.mrf.mxu0
      %v5407 = vadd.f32 %v5246, %v5406
      %v5408 = vpop.f32.mrf.mxu0
      %5409 = vmatprep.mubr.bf16.mxu0 0
      %5410 = vmatmul.mubr.bf16.gmra.mxu0 %v4923
      %v5411 = vpop.f32.mrf.mxu0
      %v5412 = vadd.f32 %v5251, %v5411
      %v5413 = vpop.f32.mrf.mxu0
      %v5414 = vpop.f32.mrf.mxu0
      %v5415 = vadd.f32 %v5254, %v5414
      %v5416 = vpop.f32.mrf.mxu0
      %5417 = vmatprep.mubr.bf16.mxu0 0
      %5418 = vmatmul.mubr.bf16.gmra.mxu0 %v4926
      %v5419 = vpop.f32.mrf.mxu0
      %v5420 = vadd.f32 %v5259, %v5419
      %v5421 = vpop.f32.mrf.mxu0
      %v5422 = vpop.f32.mrf.mxu0
      %v5423 = vadd.f32 %v5262, %v5422
      %v5424 = vpop.f32.mrf.mxu0
      %5425 = vmatprep.mubr.bf16.mxu0 0
      %5426 = vmatmul.mubr.bf16.gmra.mxu0 %v4929
      %v5427 = vpop.f32.mrf.mxu0
      %v5428 = vadd.f32 %v5267, %v5427
      %v5429 = vpop.f32.mrf.mxu0
      %v5430 = vpop.f32.mrf.mxu0
      %v5431 = vadd.f32 %v5270, %v5430
      %v5432 = vpop.f32.mrf.mxu0
      %5433 = vmatprep.mubr.bf16.mxu0 0
      %5434 = vmatmul.mubr.bf16.gmra.mxu0 %v4932
      %v5435 = vpop.f32.mrf.mxu0
      %v5436 = vadd.f32 %v5275, %v5435
      %v5437 = vpop.f32.mrf.mxu0
      %v5438 = vpop.f32.mrf.mxu0
      %v5439 = vadd.f32 %v5278, %v5438
      %v5440 = vpop.f32.mrf.mxu0
      %5441 = vmatprep.mubr.bf16.mxu0 0
      %5442 = vmatmul.mubr.bf16.gmra.mxu0 %v4935
      %v5443 = vpop.f32.mrf.mxu0
      %v5444 = vadd.f32 %v5283, %v5443
      %v5445 = vpop.f32.mrf.mxu0
      %v5446 = vpop.f32.mrf.mxu0
      %v5447 = vadd.f32 %v5286, %v5446
      %v5448 = vpop.f32.mrf.mxu0
      %5449 = vdwg.mxu0
      %v5514 = vunpack.c.l.b16 %v4503
      %v5515 = vunpack.c.h.b16 %v4503
      %v5516 = vunpack.c.l.b16 %v4504
      %v5517 = vunpack.c.l.b16 %v4505
      %v5518 = vunpack.c.h.b16 %v4505
      %v5519 = vunpack.c.l.b16 %v4506
      %v5520 = vunpack.c.l.b16 %v4507
      %v5521 = vunpack.c.h.b16 %v4507
      %v5522 = vunpack.c.l.b16 %v4508
      %v5523 = vunpack.c.l.b16 %v4509
      %v5524 = vunpack.c.h.b16 %v4509
      %v5525 = vunpack.c.l.b16 %v4510
      %v5526 = vunpack.c.l.b16 %v4511
      %v5527 = vunpack.c.h.b16 %v4511
      %v5528 = vunpack.c.l.b16 %v4512
      %v5529 = vunpack.c.l.b16 %v4513
      %v5530 = vunpack.c.h.b16 %v4513
      %v5531 = vunpack.c.l.b16 %v4514
      %v5532 = vunpack.c.l.b16 %v4515
      %v5533 = vunpack.c.h.b16 %v4515
      %v5534 = vunpack.c.l.b16 %v4516
      %v5535 = vunpack.c.l.b16 %v4517
      %v5536 = vunpack.c.h.b16 %v4517
      %v5537 = vunpack.c.l.b16 %v4518
      %v5538 = vunpack.c.l.b16 %v4519
      %v5539 = vunpack.c.h.b16 %v4519
      %v5540 = vunpack.c.l.b16 %v4520
      %v5541 = vunpack.c.l.b16 %v4521
      %v5542 = vunpack.c.h.b16 %v4521
      %v5543 = vunpack.c.l.b16 %v4522
      %v5544 = vunpack.c.l.b16 %v4523
      %v5545 = vunpack.c.h.b16 %v4523
      %v5546 = vunpack.c.l.b16 %v4524
      %v5547 = vunpack.c.l.b16 %v4525
      %v5548 = vunpack.c.h.b16 %v4525
      %v5549 = vunpack.c.l.b16 %v4526
      %v5550 = vunpack.c.l.b16 %v4527
      %v5551 = vunpack.c.h.b16 %v4527
      %v5552 = vunpack.c.l.b16 %v4528
      %v5553 = vunpack.c.l.b16 %v4529
      %v5554 = vunpack.c.h.b16 %v4529
      %v5555 = vunpack.c.l.b16 %v4530
      %v5556 = vunpack.c.l.b16 %v4531
      %v5557 = vunpack.c.h.b16 %v4531
      %v5558 = vunpack.c.l.b16 %v4532
      %v5559 = vunpack.c.l.b16 %v4533
      %v5560 = vunpack.c.h.b16 %v4533
      %v5561 = vunpack.c.l.b16 %v4534
      %v5562 = vunpack.c.l.b16 %v4535
      %v5563 = vunpack.c.h.b16 %v4535
      %v5564 = vunpack.c.l.b16 %v4536
      %v5565 = vunpack.c.l.b16 %v4537
      %v5566 = vunpack.c.h.b16 %v4537
      %v5567 = vunpack.c.l.b16 %v4538
      %v5568 = vunpack.c.l.b16 %v4539
      %v5569 = vunpack.c.h.b16 %v4539
      %v5570 = vunpack.c.l.b16 %v4540
      %v5571 = vunpack.c.l.b16 %v4541
      %v5572 = vunpack.c.h.b16 %v4541
      %v5573 = vunpack.c.l.b16 %v4542
      %v5574 = vunpack.c.l.b16 %v4543
      %v5575 = vunpack.c.h.b16 %v4543
      %v5576 = vunpack.c.l.b16 %v4544
      %v5577 = vunpack.c.l.b16 %v4545
      %v5578 = vunpack.c.h.b16 %v4545
      %v5579 = vunpack.c.l.b16 %v4546
      %v5580 = vunpack.c.l.b16 %v4547
      %v5581 = vunpack.c.h.b16 %v4547
      %v5582 = vunpack.c.l.b16 %v4548
      %v5583 = vunpack.c.l.b16 %v4549
      %v5584 = vunpack.c.h.b16 %v4549
      %v5585 = vunpack.c.l.b16 %v4550
      %v5586 = vunpack.c.l.b16 %v4551
      %v5587 = vunpack.c.h.b16 %v4551
      %v5588 = vunpack.c.l.b16 %v4552
      %v5589 = vunpack.c.l.b16 %v4553
      %v5590 = vunpack.c.h.b16 %v4553
      %v5591 = vunpack.c.l.b16 %v4554
      %v5592 = vunpack.c.l.b16 %v4555
      %v5593 = vunpack.c.h.b16 %v4555
      %v5594 = vunpack.c.l.b16 %v4556
      %v5595 = vunpack.c.l.b16 %v4557
      %v5596 = vunpack.c.h.b16 %v4557
      %v5597 = vunpack.c.l.b16 %v4558
      %v5598 = vunpack.c.l.b16 %v4559
      %v5599 = vunpack.c.h.b16 %v4559
      %v5600 = vunpack.c.l.b16 %v4560
      %v5601 = vunpack.c.l.b16 %v4561
      %v5602 = vunpack.c.h.b16 %v4561
      %v5603 = vunpack.c.l.b16 %v4562
      %v5604 = vunpack.c.l.b16 %v4563
      %v5605 = vunpack.c.h.b16 %v4563
      %v5606 = vunpack.c.l.b16 %v4564
      %v5607 = vunpack.c.l.b16 %v4565
      %v5608 = vunpack.c.h.b16 %v4565
      %v5609 = vunpack.c.l.b16 %v4566
      %v5610 = vpack.c.b16 %v5517, %v5514
      %v5611 = vpack.c.b16 %v5518, %v5515
      %v5612 = vpack.c.b16 %v5519, %v5516
      %v5613 = vpack.c.b16 %v5523, %v5520
      %v5614 = vpack.c.b16 %v5524, %v5521
      %v5615 = vpack.c.b16 %v5525, %v5522
      %v5616 = vpack.c.b16 %v5529, %v5526
      %v5617 = vpack.c.b16 %v5530, %v5527
      %v5618 = vpack.c.b16 %v5531, %v5528
      %v5619 = vpack.c.b16 %v5535, %v5532
      %v5620 = vpack.c.b16 %v5536, %v5533
      %v5621 = vpack.c.b16 %v5537, %v5534
      %v5622 = vpack.c.b16 %v5541, %v5538
      %v5623 = vpack.c.b16 %v5542, %v5539
      %v5624 = vpack.c.b16 %v5543, %v5540
      %v5625 = vpack.c.b16 %v5547, %v5544
      %v5626 = vpack.c.b16 %v5548, %v5545
      %v5627 = vpack.c.b16 %v5549, %v5546
      %v5628 = vpack.c.b16 %v5553, %v5550
      %v5629 = vpack.c.b16 %v5554, %v5551
      %v5630 = vpack.c.b16 %v5555, %v5552
      %v5631 = vpack.c.b16 %v5559, %v5556
      %v5632 = vpack.c.b16 %v5560, %v5557
      %v5633 = vpack.c.b16 %v5561, %v5558
      %v5634 = vpack.c.b16 %v5565, %v5562
      %v5635 = vpack.c.b16 %v5566, %v5563
      %v5636 = vpack.c.b16 %v5567, %v5564
      %v5637 = vpack.c.b16 %v5571, %v5568
      %v5638 = vpack.c.b16 %v5572, %v5569
      %v5639 = vpack.c.b16 %v5573, %v5570
      %v5640 = vpack.c.b16 %v5577, %v5574
      %v5641 = vpack.c.b16 %v5578, %v5575
      %v5642 = vpack.c.b16 %v5579, %v5576
      %v5643 = vpack.c.b16 %v5583, %v5580
      %v5644 = vpack.c.b16 %v5584, %v5581
      %v5645 = vpack.c.b16 %v5585, %v5582
      %v5646 = vpack.c.b16 %v5589, %v5586
      %v5647 = vpack.c.b16 %v5590, %v5587
      %v5648 = vpack.c.b16 %v5591, %v5588
      %v5649 = vpack.c.b16 %v5595, %v5592
      %v5650 = vpack.c.b16 %v5596, %v5593
      %v5651 = vpack.c.b16 %v5597, %v5594
      %v5652 = vpack.c.b16 %v5601, %v5598
      %v5653 = vpack.c.b16 %v5602, %v5599
      %v5654 = vpack.c.b16 %v5603, %v5600
      %v5655 = vpack.c.b16 %v5607, %v5604
      %v5656 = vpack.c.b16 %v5608, %v5605
      %v5657 = vpack.c.b16 %v5609, %v5606
      %v5754 = vunpack.c.l.b16 %v4567
      %v5755 = vunpack.c.l.b16 %v4568
      %v5756 = vunpack.c.l.b16 %v4569
      %v5757 = vunpack.c.l.b16 %v4570
      %v5758 = vunpack.c.l.b16 %v4571
      %v5759 = vunpack.c.l.b16 %v4572
      %v5760 = vunpack.c.l.b16 %v4573
      %v5761 = vunpack.c.l.b16 %v4574
      %v5762 = vunpack.c.l.b16 %v4575
      %v5763 = vunpack.c.l.b16 %v4576
      %v5764 = vunpack.c.l.b16 %v4577
      %v5765 = vunpack.c.l.b16 %v4578
      %v5766 = vunpack.c.l.b16 %v4579
      %v5767 = vunpack.c.l.b16 %v4580
      %v5768 = vunpack.c.l.b16 %v4581
      %v5769 = vunpack.c.l.b16 %v4582
      %v5770 = vunpack.c.l.b16 %v4583
      %v5771 = vunpack.c.l.b16 %v4584
      %v5772 = vunpack.c.l.b16 %v4585
      %v5773 = vunpack.c.l.b16 %v4586
      %v5774 = vunpack.c.l.b16 %v4587
      %v5775 = vunpack.c.l.b16 %v4588
      %v5776 = vunpack.c.l.b16 %v4589
      %v5777 = vunpack.c.l.b16 %v4590
      %v5778 = vunpack.c.l.b16 %v4591
      %v5779 = vunpack.c.l.b16 %v4592
      %v5780 = vunpack.c.l.b16 %v4593
      %v5781 = vunpack.c.l.b16 %v4594
      %v5782 = vunpack.c.l.b16 %v4595
      %v5783 = vunpack.c.l.b16 %v4596
      %v5784 = vunpack.c.l.b16 %v4597
      %v5785 = vunpack.c.l.b16 %v4598
      %v5786 = vunpack.c.l.b16 %v4599
      %v5787 = vunpack.c.l.b16 %v4600
      %v5788 = vunpack.c.l.b16 %v4601
      %v5789 = vunpack.c.l.b16 %v4602
      %v5790 = vunpack.c.l.b16 %v4603
      %v5791 = vunpack.c.l.b16 %v4604
      %v5792 = vunpack.c.l.b16 %v4605
      %v5793 = vunpack.c.l.b16 %v4606
      %v5794 = vunpack.c.l.b16 %v4607
      %v5795 = vunpack.c.l.b16 %v4608
      %v5796 = vunpack.c.l.b16 %v4609
      %v5797 = vunpack.c.l.b16 %v4610
      %v5798 = vunpack.c.l.b16 %v4611
      %v5799 = vunpack.c.l.b16 %v4612
      %v5800 = vunpack.c.l.b16 %v4613
      %v5801 = vunpack.c.l.b16 %v4614
      %v5802 = vpack.c.b16 %v5755, %v5754
      %v5803 = vpack.c.b16 %v5757, %v5756
      %v5804 = vpack.c.b16 %v5759, %v5758
      %v5805 = vpack.c.b16 %v5761, %v5760
      %v5806 = vpack.c.b16 %v5763, %v5762
      %v5807 = vpack.c.b16 %v5765, %v5764
      %v5808 = vpack.c.b16 %v5767, %v5766
      %v5809 = vpack.c.b16 %v5769, %v5768
      %v5810 = vpack.c.b16 %v5771, %v5770
      %v5811 = vpack.c.b16 %v5773, %v5772
      %v5812 = vpack.c.b16 %v5775, %v5774
      %v5813 = vpack.c.b16 %v5777, %v5776
      %v5814 = vpack.c.b16 %v5779, %v5778
      %v5815 = vpack.c.b16 %v5781, %v5780
      %v5816 = vpack.c.b16 %v5783, %v5782
      %v5817 = vpack.c.b16 %v5785, %v5784
      %v5818 = vpack.c.b16 %v5787, %v5786
      %v5819 = vpack.c.b16 %v5789, %v5788
      %v5820 = vpack.c.b16 %v5791, %v5790
      %v5821 = vpack.c.b16 %v5793, %v5792
      %v5822 = vpack.c.b16 %v5795, %v5794
      %v5823 = vpack.c.b16 %v5797, %v5796
      %v5824 = vpack.c.b16 %v5799, %v5798
      %v5825 = vpack.c.b16 %v5801, %v5800
      %5850 = vmatprep.subr.bf16.mxu0 0
      %5851 = vmatpush1.bf16.msra.mxu0 %v5809
      %5852 = vmatprep.subr.bf16.mxu0 0
      %5853 = vmatpush1.bf16.msra.mxu0 %v5808
      %5854 = vmatprep.subr.bf16.mxu0 0
      %5855 = vmatpush1.bf16.msra.mxu0 %v5807
      %5856 = vmatprep.subr.bf16.mxu0 0
      %5857 = vmatpush1.bf16.msra.mxu0 %v5806
      %5858 = vmatprep.subr.bf16.mxu0 0
      %5859 = vmatpush1.bf16.msra.mxu0 %v5805
      %5860 = vmatprep.subr.bf16.mxu0 0
      %5861 = vmatpush1.bf16.msra.mxu0 %v5804
      %5862 = vmatprep.subr.bf16.mxu0 0
      %5863 = vmatpush1.bf16.msra.mxu0 %v5803
      %5864 = vmatprep.subr.bf16.mxu0 0
      %5865 = vmatpush1.bf16.msra.mxu0 %v5802
      %5866 = vmatprep.subr.bf16.mxu0 0
      %5867 = vmatpush2.bf16.msra.mxu0 %v5817
      %5868 = vmatprep.subr.bf16.mxu0 0
      %5869 = vmatpush2.bf16.msra.mxu0 %v5816
      %5870 = vmatprep.subr.bf16.mxu0 0
      %5871 = vmatpush2.bf16.msra.mxu0 %v5815
      %5872 = vmatprep.subr.bf16.mxu0 0
      %5873 = vmatpush2.bf16.msra.mxu0 %v5814
      %5874 = vmatprep.subr.bf16.mxu0 0
      %5875 = vmatpush2.bf16.msra.mxu0 %v5813
      %5876 = vmatprep.subr.bf16.mxu0 0
      %5877 = vmatpush2.bf16.msra.mxu0 %v5812
      %5878 = vmatprep.subr.bf16.mxu0 0
      %5879 = vmatpush2.bf16.msra.mxu0 %v5811
      %5880 = vmatprep.subr.bf16.mxu0 0
      %5881 = vmatpush2.bf16.msra.mxu0 %v5810
      %5882 = vmatprep.mubr.bf16.mxu0 %v5611
      %5883 = vmatmul.mubr.bf16.gmra.mxu0 %v5610
      %v5884 = vpop.f32.mrf.mxu0
      %v5885 = vadd.f32 %v5324, %v5884
      %v5886 = vpop.f32.mrf.mxu0
      %v5887 = vpop.f32.mrf.mxu0
      %v5888 = vadd.f32 %v5327, %v5887
      %v5889 = vpop.f32.mrf.mxu0
      %5890 = vmatprep.mubr.bf16.mxu0 %v5614
      %5891 = vmatmul.mubr.bf16.gmra.mxu0 %v5613
      %v5892 = vpop.f32.mrf.mxu0
      %v5893 = vadd.f32 %v5332, %v5892
      %v5894 = vpop.f32.mrf.mxu0
      %v5895 = vpop.f32.mrf.mxu0
      %v5896 = vadd.f32 %v5335, %v5895
      %v5897 = vpop.f32.mrf.mxu0
      %5898 = vmatprep.mubr.bf16.mxu0 %v5617
      %5899 = vmatmul.mubr.bf16.gmra.mxu0 %v5616
      %v5900 = vpop.f32.mrf.mxu0
      %v5901 = vadd.f32 %v5340, %v5900
      %v5902 = vpop.f32.mrf.mxu0
      %v5903 = vpop.f32.mrf.mxu0
      %v5904 = vadd.f32 %v5343, %v5903
      %v5905 = vpop.f32.mrf.mxu0
      %5906 = vmatprep.mubr.bf16.mxu0 %v5620
      %5907 = vmatmul.mubr.bf16.gmra.mxu0 %v5619
      %v5908 = vpop.f32.mrf.mxu0
      %v5909 = vadd.f32 %v5348, %v5908
      %v5910 = vpop.f32.mrf.mxu0
      %v5911 = vpop.f32.mrf.mxu0
      %v5912 = vadd.f32 %v5351, %v5911
      %v5913 = vpop.f32.mrf.mxu0
      %5914 = vmatprep.mubr.bf16.mxu0 %v5623
      %5915 = vmatmul.mubr.bf16.gmra.mxu0 %v5622
      %v5916 = vpop.f32.mrf.mxu0
      %v5917 = vadd.f32 %v5356, %v5916
      %v5918 = vpop.f32.mrf.mxu0
      %v5919 = vpop.f32.mrf.mxu0
      %v5920 = vadd.f32 %v5359, %v5919
      %v5921 = vpop.f32.mrf.mxu0
      %5922 = vmatprep.mubr.bf16.mxu0 %v5626
      %5923 = vmatmul.mubr.bf16.gmra.mxu0 %v5625
      %v5924 = vpop.f32.mrf.mxu0
      %v5925 = vadd.f32 %v5364, %v5924
      %v5926 = vpop.f32.mrf.mxu0
      %v5927 = vpop.f32.mrf.mxu0
      %v5928 = vadd.f32 %v5367, %v5927
      %v5929 = vpop.f32.mrf.mxu0
      %5930 = vmatprep.mubr.bf16.mxu0 %v5629
      %5931 = vmatmul.mubr.bf16.gmra.mxu0 %v5628
      %v5932 = vpop.f32.mrf.mxu0
      %v5933 = vadd.f32 %v5372, %v5932
      %v5934 = vpop.f32.mrf.mxu0
      %v5935 = vpop.f32.mrf.mxu0
      %v5936 = vadd.f32 %v5375, %v5935
      %v5937 = vpop.f32.mrf.mxu0
      %5938 = vmatprep.mubr.bf16.mxu0 %v5632
      %5939 = vmatmul.mubr.bf16.gmra.mxu0 %v5631
      %v5940 = vpop.f32.mrf.mxu0
      %v5941 = vadd.f32 %v5380, %v5940
      %v5942 = vpop.f32.mrf.mxu0
      %v5943 = vpop.f32.mrf.mxu0
      %v5944 = vadd.f32 %v5383, %v5943
      %v5945 = vpop.f32.mrf.mxu0
      %5946 = vmatprep.mubr.bf16.mxu0 %v5635
      %5947 = vmatmul.mubr.bf16.gmra.mxu0 %v5634
      %v5948 = vpop.f32.mrf.mxu0
      %v5949 = vadd.f32 %v5388, %v5948
      %v5950 = vpop.f32.mrf.mxu0
      %v5951 = vpop.f32.mrf.mxu0
      %v5952 = vadd.f32 %v5391, %v5951
      %v5953 = vpop.f32.mrf.mxu0
      %5954 = vmatprep.mubr.bf16.mxu0 %v5638
      %5955 = vmatmul.mubr.bf16.gmra.mxu0 %v5637
      %v5956 = vpop.f32.mrf.mxu0
      %v5957 = vadd.f32 %v5396, %v5956
      %v5958 = vpop.f32.mrf.mxu0
      %v5959 = vpop.f32.mrf.mxu0
      %v5960 = vadd.f32 %v5399, %v5959
      %v5961 = vpop.f32.mrf.mxu0
      %5962 = vmatprep.mubr.bf16.mxu0 %v5641
      %5963 = vmatmul.mubr.bf16.gmra.mxu0 %v5640
      %v5964 = vpop.f32.mrf.mxu0
      %v5965 = vadd.f32 %v5404, %v5964
      %v5966 = vpop.f32.mrf.mxu0
      %v5967 = vpop.f32.mrf.mxu0
      %v5968 = vadd.f32 %v5407, %v5967
      %v5969 = vpop.f32.mrf.mxu0
      %5970 = vmatprep.mubr.bf16.mxu0 %v5644
      %5971 = vmatmul.mubr.bf16.gmra.mxu0 %v5643
      %v5972 = vpop.f32.mrf.mxu0
      %v5973 = vadd.f32 %v5412, %v5972
      %v5974 = vpop.f32.mrf.mxu0
      %v5975 = vpop.f32.mrf.mxu0
      %v5976 = vadd.f32 %v5415, %v5975
      %v5977 = vpop.f32.mrf.mxu0
      %5978 = vmatprep.mubr.bf16.mxu0 %v5647
      %5979 = vmatmul.mubr.bf16.gmra.mxu0 %v5646
      %v5980 = vpop.f32.mrf.mxu0
      %v5981 = vadd.f32 %v5420, %v5980
      %v5982 = vpop.f32.mrf.mxu0
      %v5983 = vpop.f32.mrf.mxu0
      %v5984 = vadd.f32 %v5423, %v5983
      %v5985 = vpop.f32.mrf.mxu0
      %5986 = vmatprep.mubr.bf16.mxu0 %v5650
      %5987 = vmatmul.mubr.bf16.gmra.mxu0 %v5649
      %v5988 = vpop.f32.mrf.mxu0
      %v5989 = vadd.f32 %v5428, %v5988
      %v5990 = vpop.f32.mrf.mxu0
      %v5991 = vpop.f32.mrf.mxu0
      %v5992 = vadd.f32 %v5431, %v5991
      %v5993 = vpop.f32.mrf.mxu0
      %5994 = vmatprep.mubr.bf16.mxu0 %v5653
      %5995 = vmatmul.mubr.bf16.gmra.mxu0 %v5652
      %v5996 = vpop.f32.mrf.mxu0
      %v5997 = vadd.f32 %v5436, %v5996
      %v5998 = vpop.f32.mrf.mxu0
      %v5999 = vpop.f32.mrf.mxu0
      %v6000 = vadd.f32 %v5439, %v5999
      %v6001 = vpop.f32.mrf.mxu0
      %6002 = vmatprep.mubr.bf16.mxu0 %v5656
      %6003 = vmatmul.mubr.bf16.gmra.mxu0 %v5655
      %v6004 = vpop.f32.mrf.mxu0
      %v6005 = vadd.f32 %v5444, %v6004
      %v6006 = vpop.f32.mrf.mxu0
      %v6007 = vpop.f32.mrf.mxu0
      %v6008 = vadd.f32 %v5447, %v6007
      %v6009 = vpop.f32.mrf.mxu0
      %6010 = vdwg.mxu0
      %6011 = vmatprep.subr.bf16.mxu0 0
      %6012 = vmatpush1.bf16.msra.mxu0 %v5825
      %6013 = vmatprep.subr.bf16.mxu0 0
      %6014 = vmatpush1.bf16.msra.mxu0 %v5824
      %6015 = vmatprep.subr.bf16.mxu0 0
      %6016 = vmatpush1.bf16.msra.mxu0 %v5823
      %6017 = vmatprep.subr.bf16.mxu0 0
      %6018 = vmatpush1.bf16.msra.mxu0 %v5822
      %6019 = vmatprep.subr.bf16.mxu0 0
      %6020 = vmatpush1.bf16.msra.mxu0 %v5821
      %6021 = vmatprep.subr.bf16.mxu0 0
      %6022 = vmatpush1.bf16.msra.mxu0 %v5820
      %6023 = vmatprep.subr.bf16.mxu0 0
      %6024 = vmatpush1.bf16.msra.mxu0 %v5819
      %6025 = vmatprep.subr.bf16.mxu0 0
      %6026 = vmatpush1.bf16.msra.mxu0 %v5818
      %6027 = vmatprep.subr.bf16.mxu0 0
      %6028 = vmatpush2.bf16.msra.mxu0 0
      %6029 = vmatprep.subr.bf16.mxu0 0
      %6030 = vmatpush2.bf16.msra.mxu0 0
      %6031 = vmatprep.subr.bf16.mxu0 0
      %6032 = vmatpush2.bf16.msra.mxu0 0
      %6033 = vmatprep.subr.bf16.mxu0 0
      %6034 = vmatpush2.bf16.msra.mxu0 0
      %6035 = vmatprep.subr.bf16.mxu0 0
      %6036 = vmatpush2.bf16.msra.mxu0 0
      %6037 = vmatprep.subr.bf16.mxu0 0
      %6038 = vmatpush2.bf16.msra.mxu0 0
      %6039 = vmatprep.subr.bf16.mxu0 0
      %6040 = vmatpush2.bf16.msra.mxu0 0
      %6041 = vmatprep.subr.bf16.mxu0 0
      %6042 = vmatpush2.bf16.msra.mxu0 0
      %6043 = vmatprep.mubr.bf16.mxu0 0
      %6044 = vmatmul.mubr.bf16.gmra.mxu0 %v5612
      %v6045 = vpop.f32.mrf.mxu0
      %v6046 = vadd.f32 %v5885, %v6045
      %v6047 = vpop.f32.mrf.mxu0
      %v6048 = vpop.f32.mrf.mxu0
      %v6049 = vadd.f32 %v5888, %v6048
      %v6050 = vpop.f32.mrf.mxu0
      %6051 = vmatprep.mubr.bf16.mxu0 0
      %6052 = vmatmul.mubr.bf16.gmra.mxu0 %v5615
      %v6053 = vpop.f32.mrf.mxu0
      %v6054 = vadd.f32 %v5893, %v6053
      %v6055 = vpop.f32.mrf.mxu0
      %v6056 = vpop.f32.mrf.mxu0
      %v6057 = vadd.f32 %v5896, %v6056
      %v6058 = vpop.f32.mrf.mxu0
      %6059 = vmatprep.mubr.bf16.mxu0 0
      %6060 = vmatmul.mubr.bf16.gmra.mxu0 %v5618
      %v6061 = vpop.f32.mrf.mxu0
      %v6062 = vadd.f32 %v5901, %v6061
      %v6063 = vpop.f32.mrf.mxu0
      %v6064 = vpop.f32.mrf.mxu0
      %v6065 = vadd.f32 %v5904, %v6064
      %v6066 = vpop.f32.mrf.mxu0
      %6067 = vmatprep.mubr.bf16.mxu0 0
      %6068 = vmatmul.mubr.bf16.gmra.mxu0 %v5621
      %v6069 = vpop.f32.mrf.mxu0
      %v6070 = vadd.f32 %v5909, %v6069
      %v6071 = vpop.f32.mrf.mxu0
      %v6072 = vpop.f32.mrf.mxu0
      %v6073 = vadd.f32 %v5912, %v6072
      %v6074 = vpop.f32.mrf.mxu0
      %6075 = vmatprep.mubr.bf16.mxu0 0
      %6076 = vmatmul.mubr.bf16.gmra.mxu0 %v5624
      %v6077 = vpop.f32.mrf.mxu0
      %v6078 = vadd.f32 %v5917, %v6077
      %v6079 = vpop.f32.mrf.mxu0
      %v6080 = vpop.f32.mrf.mxu0
      %v6081 = vadd.f32 %v5920, %v6080
      %v6082 = vpop.f32.mrf.mxu0
      %6083 = vmatprep.mubr.bf16.mxu0 0
      %6084 = vmatmul.mubr.bf16.gmra.mxu0 %v5627
      %v6085 = vpop.f32.mrf.mxu0
      %v6086 = vadd.f32 %v5925, %v6085
      %v6087 = vpop.f32.mrf.mxu0
      %v6088 = vpop.f32.mrf.mxu0
      %v6089 = vadd.f32 %v5928, %v6088
      %v6090 = vpop.f32.mrf.mxu0
      %6091 = vmatprep.mubr.bf16.mxu0 0
      %6092 = vmatmul.mubr.bf16.gmra.mxu0 %v5630
      %v6093 = vpop.f32.mrf.mxu0
      %v6094 = vadd.f32 %v5933, %v6093
      %v6095 = vpop.f32.mrf.mxu0
      %v6096 = vpop.f32.mrf.mxu0
      %v6097 = vadd.f32 %v5936, %v6096
      %v6098 = vpop.f32.mrf.mxu0
      %6099 = vmatprep.mubr.bf16.mxu0 0
      %6100 = vmatmul.mubr.bf16.gmra.mxu0 %v5633
      %v6101 = vpop.f32.mrf.mxu0
      %v6102 = vadd.f32 %v5941, %v6101
      %v6103 = vpop.f32.mrf.mxu0
      %v6104 = vpop.f32.mrf.mxu0
      %v6105 = vadd.f32 %v5944, %v6104
      %v6106 = vpop.f32.mrf.mxu0
      %6107 = vmatprep.mubr.bf16.mxu0 0
      %6108 = vmatmul.mubr.bf16.gmra.mxu0 %v5636
      %v6109 = vpop.f32.mrf.mxu0
      %v6110 = vadd.f32 %v5949, %v6109
      %v6111 = vpop.f32.mrf.mxu0
      %v6112 = vpop.f32.mrf.mxu0
      %v6113 = vadd.f32 %v5952, %v6112
      %v6114 = vpop.f32.mrf.mxu0
      %6115 = vmatprep.mubr.bf16.mxu0 0
      %6116 = vmatmul.mubr.bf16.gmra.mxu0 %v5639
      %v6117 = vpop.f32.mrf.mxu0
      %v6118 = vadd.f32 %v5957, %v6117
      %v6119 = vpop.f32.mrf.mxu0
      %v6120 = vpop.f32.mrf.mxu0
      %v6121 = vadd.f32 %v5960, %v6120
      %v6122 = vpop.f32.mrf.mxu0
      %6123 = vmatprep.mubr.bf16.mxu0 0
      %6124 = vmatmul.mubr.bf16.gmra.mxu0 %v5642
      %v6125 = vpop.f32.mrf.mxu0
      %v6126 = vadd.f32 %v5965, %v6125
      %v6127 = vpop.f32.mrf.mxu0
      %v6128 = vpop.f32.mrf.mxu0
      %v6129 = vadd.f32 %v5968, %v6128
      %v6130 = vpop.f32.mrf.mxu0
      %6131 = vmatprep.mubr.bf16.mxu0 0
      %6132 = vmatmul.mubr.bf16.gmra.mxu0 %v5645
      %v6133 = vpop.f32.mrf.mxu0
      %v6134 = vadd.f32 %v5973, %v6133
      %v6135 = vpop.f32.mrf.mxu0
      %v6136 = vpop.f32.mrf.mxu0
      %v6137 = vadd.f32 %v5976, %v6136
      %v6138 = vpop.f32.mrf.mxu0
      %6139 = vmatprep.mubr.bf16.mxu0 0
      %6140 = vmatmul.mubr.bf16.gmra.mxu0 %v5648
      %v6141 = vpop.f32.mrf.mxu0
      %v6142 = vadd.f32 %v5981, %v6141
      %v6143 = vpop.f32.mrf.mxu0
      %v6144 = vpop.f32.mrf.mxu0
      %v6145 = vadd.f32 %v5984, %v6144
      %v6146 = vpop.f32.mrf.mxu0
      %6147 = vmatprep.mubr.bf16.mxu0 0
      %6148 = vmatmul.mubr.bf16.gmra.mxu0 %v5651
      %v6149 = vpop.f32.mrf.mxu0
      %v6150 = vadd.f32 %v5989, %v6149
      %v6151 = vpop.f32.mrf.mxu0
      %v6152 = vpop.f32.mrf.mxu0
      %v6153 = vadd.f32 %v5992, %v6152
      %v6154 = vpop.f32.mrf.mxu0
      %6155 = vmatprep.mubr.bf16.mxu0 0
      %6156 = vmatmul.mubr.bf16.gmra.mxu0 %v5654
      %v6157 = vpop.f32.mrf.mxu0
      %v6158 = vadd.f32 %v5997, %v6157
      %v6159 = vpop.f32.mrf.mxu0
      %v6160 = vpop.f32.mrf.mxu0
      %v6161 = vadd.f32 %v6000, %v6160
      %v6162 = vpop.f32.mrf.mxu0
      %6163 = vmatprep.mubr.bf16.mxu0 0
      %6164 = vmatmul.mubr.bf16.gmra.mxu0 %v5657
      %v6165 = vpop.f32.mrf.mxu0
      %v6166 = vadd.f32 %v6005, %v6165
      %v6167 = vpop.f32.mrf.mxu0
      %v6168 = vpop.f32.mrf.mxu0
      %v6169 = vadd.f32 %v6008, %v6168
      %v6170 = vpop.f32.mrf.mxu0
      %6171 = vdwg.mxu0
      %v6172 = vld [vmem:[%s2812] sm:$0xff]
      %v6173 = vld [vmem:[%s2812 + $0x8] sm:$0xf]
      %v6174 = vld [vmem:[%s2812 + $0xc] sm:$0xff]
      %v6175 = vld [vmem:[%s2812 + $0x14] sm:$0xf]
      %v6176 = vld [vmem:[%s2812 + $0x18] sm:$0xff]
      %v6177 = vld [vmem:[%s2812 + $0x20] sm:$0xf]
      %v6178 = vld [vmem:[%s2812 + $0x24] sm:$0xff]
      %v6179 = vld [vmem:[%s2812 + $0x2c] sm:$0xf]
      %v6180 = vld [vmem:[%s2812 + $0x30] sm:$0xff]
      %v6181 = vld [vmem:[%s2812 + $0x38] sm:$0xf]
      %v6182 = vld [vmem:[%s2812 + $0x3c] sm:$0xff]
      %v6183 = vld [vmem:[%s2812 + $0x44] sm:$0xf]
      %v6184 = vld [vmem:[%s2812 + $0x48] sm:$0xff]
      %v6185 = vld [vmem:[%s2812 + $0x50] sm:$0xf]
      %v6186 = vld [vmem:[%s2812 + $0x54] sm:$0xff]
      %v6187 = vld [vmem:[%s2812 + $0x5c] sm:$0xf]
      %v6188 = vld [vmem:[%s2812 + $0x60] sm:$0xff]
      %v6189 = vld [vmem:[%s2812 + $0x68] sm:$0xf]
      %v6190 = vld [vmem:[%s2812 + $0x6c] sm:$0xff]
      %v6191 = vld [vmem:[%s2812 + $0x74] sm:$0xf]
      %v6192 = vld [vmem:[%s2812 + $0x78] sm:$0xff]
      %v6193 = vld [vmem:[%s2812 + $0x80] sm:$0xf]
      %v6194 = vld [vmem:[%s2812 + $0x84] sm:$0xff]
      %v6195 = vld [vmem:[%s2812 + $0x8c] sm:$0xf]
      %v6196 = vld [vmem:[%s2812 + $0x90] sm:$0xff]
      %v6197 = vld [vmem:[%s2812 + $0x98] sm:$0xf]
      %v6198 = vld [vmem:[%s2812 + $0x9c] sm:$0xff]
      %v6199 = vld [vmem:[%s2812 + $0xa4] sm:$0xf]
      %v6200 = vld [vmem:[%s2812 + $0xa8] sm:$0xff]
      %v6201 = vld [vmem:[%s2812 + $0xb0] sm:$0xf]
      %v6202 = vld [vmem:[%s2812 + $0xb4] sm:$0xff]
      %v6203 = vld [vmem:[%s2812 + $0xbc] sm:$0xf]
      %v6204 = vld [vmem:[%s2812 + $0xc0] sm:$0xff]
      %v6205 = vld [vmem:[%s2812 + $0xc8] sm:$0xf]
      %v6206 = vld [vmem:[%s2812 + $0xcc] sm:$0xff]
      %v6207 = vld [vmem:[%s2812 + $0xd4] sm:$0xf]
      %v6208 = vld [vmem:[%s2812 + $0xd8] sm:$0xff]
      %v6209 = vld [vmem:[%s2812 + $0xe0] sm:$0xf]
      %v6210 = vld [vmem:[%s2812 + $0xe4] sm:$0xff]
      %v6211 = vld [vmem:[%s2812 + $0xec] sm:$0xf]
      %v6212 = vld [vmem:[%s2812 + $0xf0] sm:$0xff]
      %v6213 = vld [vmem:[%s2812 + $0xf8] sm:$0xf]
      %v6214 = vld [vmem:[%s2812 + $0xfc] sm:$0xff]
      %v6215 = vld [vmem:[%s2812 + $0x104] sm:$0xf]
      %v6216 = vld [vmem:[%s2812 + $0x108] sm:$0xff]
      %v6217 = vld [vmem:[%s2812 + $0x110] sm:$0xf]
      %v6218 = vld [vmem:[%s2812 + $0x114] sm:$0xff]
      %v6219 = vld [vmem:[%s2812 + $0x11c] sm:$0xf]
      %v6220 = vld [vmem:[%s2812 + $0x120] sm:$0xff]
      %v6221 = vld [vmem:[%s2812 + $0x128] sm:$0xf]
      %v6222 = vld [vmem:[%s2812 + $0x12c] sm:$0xff]
      %v6223 = vld [vmem:[%s2812 + $0x134] sm:$0xf]
      %v6224 = vld [vmem:[%s2812 + $0x138] sm:$0xff]
      %v6225 = vld [vmem:[%s2812 + $0x140] sm:$0xf]
      %v6226 = vld [vmem:[%s2812 + $0x144] sm:$0xff]
      %v6227 = vld [vmem:[%s2812 + $0x14c] sm:$0xf]
      %v6228 = vld [vmem:[%s2812 + $0x150] sm:$0xff]
      %v6229 = vld [vmem:[%s2812 + $0x158] sm:$0xf]
      %v6230 = vld [vmem:[%s2812 + $0x15c] sm:$0xff]
      %v6231 = vld [vmem:[%s2812 + $0x164] sm:$0xf]
      %v6232 = vld [vmem:[%s2812 + $0x168] sm:$0xff]
      %v6233 = vld [vmem:[%s2812 + $0x170] sm:$0xf]
      %v6234 = vld [vmem:[%s2812 + $0x174] sm:$0xff]
      %v6235 = vld [vmem:[%s2812 + $0x17c] sm:$0xf]
      %s6236 = scalar_lea.vmem %s3, 384
      %v6237 = vld [vmem:[%s6236] sm:$0xf]
      %v6238 = vld [vmem:[%s6236 + $0x4] sm:$0xf]
      %v6239 = vld [vmem:[%s6236 + $0x8] sm:$0xf]
      %v6240 = vld [vmem:[%s6236 + $0xc] sm:$0xf]
      %v6241 = vld [vmem:[%s6236 + $0x10] sm:$0xf]
      %v6242 = vld [vmem:[%s6236 + $0x14] sm:$0xf]
      %v6243 = vld [vmem:[%s6236 + $0x18] sm:$0xf]
      %v6244 = vld [vmem:[%s6236 + $0x1c] sm:$0xf]
      %v6245 = vld [vmem:[%s6236 + $0x20] sm:$0xf]
      %v6246 = vld [vmem:[%s6236 + $0x24] sm:$0xf]
      %v6247 = vld [vmem:[%s6236 + $0x28] sm:$0xf]
      %v6248 = vld [vmem:[%s6236 + $0x2c] sm:$0xf]
      %v6249 = vld [vmem:[%s6236 + $0x30] sm:$0xf]
      %v6250 = vld [vmem:[%s6236 + $0x34] sm:$0xf]
      %v6251 = vld [vmem:[%s6236 + $0x38] sm:$0xf]
      %v6252 = vld [vmem:[%s6236 + $0x3c] sm:$0xf]
      %v6253 = vld [vmem:[%s6236 + $0x40] sm:$0xf]
      %v6254 = vld [vmem:[%s6236 + $0x44] sm:$0xf]
      %v6255 = vld [vmem:[%s6236 + $0x48] sm:$0xf]
      %v6256 = vld [vmem:[%s6236 + $0x4c] sm:$0xf]
      %v6257 = vld [vmem:[%s6236 + $0x50] sm:$0xf]
      %v6258 = vld [vmem:[%s6236 + $0x54] sm:$0xf]
      %v6259 = vld [vmem:[%s6236 + $0x58] sm:$0xf]
      %v6260 = vld [vmem:[%s6236 + $0x5c] sm:$0xf]
      %v6261 = vld [vmem:[%s6236 + $0x60] sm:$0xf]
      %v6262 = vld [vmem:[%s6236 + $0x64] sm:$0xf]
      %v6263 = vld [vmem:[%s6236 + $0x68] sm:$0xf]
      %v6264 = vld [vmem:[%s6236 + $0x6c] sm:$0xf]
      %v6265 = vld [vmem:[%s6236 + $0x70] sm:$0xf]
      %v6266 = vld [vmem:[%s6236 + $0x74] sm:$0xf]
      %v6267 = vld [vmem:[%s6236 + $0x78] sm:$0xf]
      %v6268 = vld [vmem:[%s6236 + $0x7c] sm:$0xf]
      %v6269 = vld [vmem:[%s6236 + $0x80] sm:$0xf]
      %v6270 = vld [vmem:[%s6236 + $0x84] sm:$0xf]
      %v6271 = vld [vmem:[%s6236 + $0x88] sm:$0xf]
      %v6272 = vld [vmem:[%s6236 + $0x8c] sm:$0xf]
      %v6273 = vld [vmem:[%s6236 + $0x90] sm:$0xf]
      %v6274 = vld [vmem:[%s6236 + $0x94] sm:$0xf]
      %v6275 = vld [vmem:[%s6236 + $0x98] sm:$0xf]
      %v6276 = vld [vmem:[%s6236 + $0x9c] sm:$0xf]
      %v6277 = vld [vmem:[%s6236 + $0xa0] sm:$0xf]
      %v6278 = vld [vmem:[%s6236 + $0xa4] sm:$0xf]
      %v6279 = vld [vmem:[%s6236 + $0xa8] sm:$0xf]
      %v6280 = vld [vmem:[%s6236 + $0xac] sm:$0xf]
      %v6281 = vld [vmem:[%s6236 + $0xb0] sm:$0xf]
      %v6282 = vld [vmem:[%s6236 + $0xb4] sm:$0xf]
      %v6283 = vld [vmem:[%s6236 + $0xb8] sm:$0xf]
      %v6284 = vld [vmem:[%s6236 + $0xbc] sm:$0xf]
      %v6349 = vunpack.c.l.b16 %v6172
      %v6350 = vunpack.c.h.b16 %v6172
      %v6351 = vunpack.c.l.b16 %v6173
      %v6352 = vunpack.c.l.b16 %v6174
      %v6353 = vunpack.c.h.b16 %v6174
      %v6354 = vunpack.c.l.b16 %v6175
      %v6355 = vunpack.c.l.b16 %v6176
      %v6356 = vunpack.c.h.b16 %v6176
      %v6357 = vunpack.c.l.b16 %v6177
      %v6358 = vunpack.c.l.b16 %v6178
      %v6359 = vunpack.c.h.b16 %v6178
      %v6360 = vunpack.c.l.b16 %v6179
      %v6361 = vunpack.c.l.b16 %v6180
      %v6362 = vunpack.c.h.b16 %v6180
      %v6363 = vunpack.c.l.b16 %v6181
      %v6364 = vunpack.c.l.b16 %v6182
      %v6365 = vunpack.c.h.b16 %v6182
      %v6366 = vunpack.c.l.b16 %v6183
      %v6367 = vunpack.c.l.b16 %v6184
      %v6368 = vunpack.c.h.b16 %v6184
      %v6369 = vunpack.c.l.b16 %v6185
      %v6370 = vunpack.c.l.b16 %v6186
      %v6371 = vunpack.c.h.b16 %v6186
      %v6372 = vunpack.c.l.b16 %v6187
      %v6373 = vunpack.c.l.b16 %v6188
      %v6374 = vunpack.c.h.b16 %v6188
      %v6375 = vunpack.c.l.b16 %v6189
      %v6376 = vunpack.c.l.b16 %v6190
      %v6377 = vunpack.c.h.b16 %v6190
      %v6378 = vunpack.c.l.b16 %v6191
      %v6379 = vunpack.c.l.b16 %v6192
      %v6380 = vunpack.c.h.b16 %v6192
      %v6381 = vunpack.c.l.b16 %v6193
      %v6382 = vunpack.c.l.b16 %v6194
      %v6383 = vunpack.c.h.b16 %v6194
      %v6384 = vunpack.c.l.b16 %v6195
      %v6385 = vunpack.c.l.b16 %v6196
      %v6386 = vunpack.c.h.b16 %v6196
      %v6387 = vunpack.c.l.b16 %v6197
      %v6388 = vunpack.c.l.b16 %v6198
      %v6389 = vunpack.c.h.b16 %v6198
      %v6390 = vunpack.c.l.b16 %v6199
      %v6391 = vunpack.c.l.b16 %v6200
      %v6392 = vunpack.c.h.b16 %v6200
      %v6393 = vunpack.c.l.b16 %v6201
      %v6394 = vunpack.c.l.b16 %v6202
      %v6395 = vunpack.c.h.b16 %v6202
      %v6396 = vunpack.c.l.b16 %v6203
      %v6397 = vunpack.c.l.b16 %v6204
      %v6398 = vunpack.c.h.b16 %v6204
      %v6399 = vunpack.c.l.b16 %v6205
      %v6400 = vunpack.c.l.b16 %v6206
      %v6401 = vunpack.c.h.b16 %v6206
      %v6402 = vunpack.c.l.b16 %v6207
      %v6403 = vunpack.c.l.b16 %v6208
      %v6404 = vunpack.c.h.b16 %v6208
      %v6405 = vunpack.c.l.b16 %v6209
      %v6406 = vunpack.c.l.b16 %v6210
      %v6407 = vunpack.c.h.b16 %v6210
      %v6408 = vunpack.c.l.b16 %v6211
      %v6409 = vunpack.c.l.b16 %v6212
      %v6410 = vunpack.c.h.b16 %v6212
      %v6411 = vunpack.c.l.b16 %v6213
      %v6412 = vunpack.c.l.b16 %v6214
      %v6413 = vunpack.c.h.b16 %v6214
      %v6414 = vunpack.c.l.b16 %v6215
      %v6415 = vunpack.c.l.b16 %v6216
      %v6416 = vunpack.c.h.b16 %v6216
      %v6417 = vunpack.c.l.b16 %v6217
      %v6418 = vunpack.c.l.b16 %v6218
      %v6419 = vunpack.c.h.b16 %v6218
      %v6420 = vunpack.c.l.b16 %v6219
      %v6421 = vunpack.c.l.b16 %v6220
      %v6422 = vunpack.c.h.b16 %v6220
      %v6423 = vunpack.c.l.b16 %v6221
      %v6424 = vunpack.c.l.b16 %v6222
      %v6425 = vunpack.c.h.b16 %v6222
      %v6426 = vunpack.c.l.b16 %v6223
      %v6427 = vunpack.c.l.b16 %v6224
      %v6428 = vunpack.c.h.b16 %v6224
      %v6429 = vunpack.c.l.b16 %v6225
      %v6430 = vunpack.c.l.b16 %v6226
      %v6431 = vunpack.c.h.b16 %v6226
      %v6432 = vunpack.c.l.b16 %v6227
      %v6433 = vunpack.c.l.b16 %v6228
      %v6434 = vunpack.c.h.b16 %v6228
      %v6435 = vunpack.c.l.b16 %v6229
      %v6436 = vunpack.c.l.b16 %v6230
      %v6437 = vunpack.c.h.b16 %v6230
      %v6438 = vunpack.c.l.b16 %v6231
      %v6439 = vunpack.c.l.b16 %v6232
      %v6440 = vunpack.c.h.b16 %v6232
      %v6441 = vunpack.c.l.b16 %v6233
      %v6442 = vunpack.c.l.b16 %v6234
      %v6443 = vunpack.c.h.b16 %v6234
      %v6444 = vunpack.c.l.b16 %v6235
      %v6445 = vpack.c.b16 %v6352, %v6349
      %v6446 = vpack.c.b16 %v6353, %v6350
      %v6447 = vpack.c.b16 %v6354, %v6351
      %v6448 = vpack.c.b16 %v6358, %v6355
      %v6449 = vpack.c.b16 %v6359, %v6356
      %v6450 = vpack.c.b16 %v6360, %v6357
      %v6451 = vpack.c.b16 %v6364, %v6361
      %v6452 = vpack.c.b16 %v6365, %v6362
      %v6453 = vpack.c.b16 %v6366, %v6363
      %v6454 = vpack.c.b16 %v6370, %v6367
      %v6455 = vpack.c.b16 %v6371, %v6368
      %v6456 = vpack.c.b16 %v6372, %v6369
      %v6457 = vpack.c.b16 %v6376, %v6373
      %v6458 = vpack.c.b16 %v6377, %v6374
      %v6459 = vpack.c.b16 %v6378, %v6375
      %v6460 = vpack.c.b16 %v6382, %v6379
      %v6461 = vpack.c.b16 %v6383, %v6380
      %v6462 = vpack.c.b16 %v6384, %v6381
      %v6463 = vpack.c.b16 %v6388, %v6385
      %v6464 = vpack.c.b16 %v6389, %v6386
      %v6465 = vpack.c.b16 %v6390, %v6387
      %v6466 = vpack.c.b16 %v6394, %v6391
      %v6467 = vpack.c.b16 %v6395, %v6392
      %v6468 = vpack.c.b16 %v6396, %v6393
      %v6469 = vpack.c.b16 %v6400, %v6397
      %v6470 = vpack.c.b16 %v6401, %v6398
      %v6471 = vpack.c.b16 %v6402, %v6399
      %v6472 = vpack.c.b16 %v6406, %v6403
      %v6473 = vpack.c.b16 %v6407, %v6404
      %v6474 = vpack.c.b16 %v6408, %v6405
      %v6475 = vpack.c.b16 %v6412, %v6409
      %v6476 = vpack.c.b16 %v6413, %v6410
      %v6477 = vpack.c.b16 %v6414, %v6411
      %v6478 = vpack.c.b16 %v6418, %v6415
      %v6479 = vpack.c.b16 %v6419, %v6416
      %v6480 = vpack.c.b16 %v6420, %v6417
      %v6481 = vpack.c.b16 %v6424, %v6421
      %v6482 = vpack.c.b16 %v6425, %v6422
      %v6483 = vpack.c.b16 %v6426, %v6423
      %v6484 = vpack.c.b16 %v6430, %v6427
      %v6485 = vpack.c.b16 %v6431, %v6428
      %v6486 = vpack.c.b16 %v6432, %v6429
      %v6487 = vpack.c.b16 %v6436, %v6433
      %v6488 = vpack.c.b16 %v6437, %v6434
      %v6489 = vpack.c.b16 %v6438, %v6435
      %v6490 = vpack.c.b16 %v6442, %v6439
      %v6491 = vpack.c.b16 %v6443, %v6440
      %v6492 = vpack.c.b16 %v6444, %v6441
      %v6589 = vunpack.c.l.b16 %v6237
      %v6590 = vunpack.c.l.b16 %v6238
      %v6591 = vunpack.c.l.b16 %v6239
      %v6592 = vunpack.c.l.b16 %v6240
      %v6593 = vunpack.c.l.b16 %v6241
      %v6594 = vunpack.c.l.b16 %v6242
      %v6595 = vunpack.c.l.b16 %v6243
      %v6596 = vunpack.c.l.b16 %v6244
      %v6597 = vunpack.c.l.b16 %v6245
      %v6598 = vunpack.c.l.b16 %v6246
      %v6599 = vunpack.c.l.b16 %v6247
      %v6600 = vunpack.c.l.b16 %v6248
      %v6601 = vunpack.c.l.b16 %v6249
      %v6602 = vunpack.c.l.b16 %v6250
      %v6603 = vunpack.c.l.b16 %v6251
      %v6604 = vunpack.c.l.b16 %v6252
      %v6605 = vunpack.c.l.b16 %v6253
      %v6606 = vunpack.c.l.b16 %v6254
      %v6607 = vunpack.c.l.b16 %v6255
      %v6608 = vunpack.c.l.b16 %v6256
      %v6609 = vunpack.c.l.b16 %v6257
      %v6610 = vunpack.c.l.b16 %v6258
      %v6611 = vunpack.c.l.b16 %v6259
      %v6612 = vunpack.c.l.b16 %v6260
      %v6613 = vunpack.c.l.b16 %v6261
      %v6614 = vunpack.c.l.b16 %v6262
      %v6615 = vunpack.c.l.b16 %v6263
      %v6616 = vunpack.c.l.b16 %v6264
      %v6617 = vunpack.c.l.b16 %v6265
      %v6618 = vunpack.c.l.b16 %v6266
      %v6619 = vunpack.c.l.b16 %v6267
      %v6620 = vunpack.c.l.b16 %v6268
      %v6621 = vunpack.c.l.b16 %v6269
      %v6622 = vunpack.c.l.b16 %v6270
      %v6623 = vunpack.c.l.b16 %v6271
      %v6624 = vunpack.c.l.b16 %v6272
      %v6625 = vunpack.c.l.b16 %v6273
      %v6626 = vunpack.c.l.b16 %v6274
      %v6627 = vunpack.c.l.b16 %v6275
      %v6628 = vunpack.c.l.b16 %v6276
      %v6629 = vunpack.c.l.b16 %v6277
      %v6630 = vunpack.c.l.b16 %v6278
      %v6631 = vunpack.c.l.b16 %v6279
      %v6632 = vunpack.c.l.b16 %v6280
      %v6633 = vunpack.c.l.b16 %v6281
      %v6634 = vunpack.c.l.b16 %v6282
      %v6635 = vunpack.c.l.b16 %v6283
      %v6636 = vunpack.c.l.b16 %v6284
      %v6637 = vpack.c.b16 %v6590, %v6589
      %v6638 = vpack.c.b16 %v6592, %v6591
      %v6639 = vpack.c.b16 %v6594, %v6593
      %v6640 = vpack.c.b16 %v6596, %v6595
      %v6641 = vpack.c.b16 %v6598, %v6597
      %v6642 = vpack.c.b16 %v6600, %v6599
      %v6643 = vpack.c.b16 %v6602, %v6601
      %v6644 = vpack.c.b16 %v6604, %v6603
      %v6645 = vpack.c.b16 %v6606, %v6605
      %v6646 = vpack.c.b16 %v6608, %v6607
      %v6647 = vpack.c.b16 %v6610, %v6609
      %v6648 = vpack.c.b16 %v6612, %v6611
      %v6649 = vpack.c.b16 %v6614, %v6613
      %v6650 = vpack.c.b16 %v6616, %v6615
      %v6651 = vpack.c.b16 %v6618, %v6617
      %v6652 = vpack.c.b16 %v6620, %v6619
      %v6653 = vpack.c.b16 %v6622, %v6621
      %v6654 = vpack.c.b16 %v6624, %v6623
      %v6655 = vpack.c.b16 %v6626, %v6625
      %v6656 = vpack.c.b16 %v6628, %v6627
      %v6657 = vpack.c.b16 %v6630, %v6629
      %v6658 = vpack.c.b16 %v6632, %v6631
      %v6659 = vpack.c.b16 %v6634, %v6633
      %v6660 = vpack.c.b16 %v6636, %v6635
      %6685 = vmatprep.subr.bf16.mxu0 0
      %6686 = vmatpush1.bf16.msra.mxu0 %v6644
      %6687 = vmatprep.subr.bf16.mxu0 0
      %6688 = vmatpush1.bf16.msra.mxu0 %v6643
      %6689 = vmatprep.subr.bf16.mxu0 0
      %6690 = vmatpush1.bf16.msra.mxu0 %v6642
      %6691 = vmatprep.subr.bf16.mxu0 0
      %6692 = vmatpush1.bf16.msra.mxu0 %v6641
      %6693 = vmatprep.subr.bf16.mxu0 0
      %6694 = vmatpush1.bf16.msra.mxu0 %v6640
      %6695 = vmatprep.subr.bf16.mxu0 0
      %6696 = vmatpush1.bf16.msra.mxu0 %v6639
      %6697 = vmatprep.subr.bf16.mxu0 0
      %6698 = vmatpush1.bf16.msra.mxu0 %v6638
      %6699 = vmatprep.subr.bf16.mxu0 0
      %6700 = vmatpush1.bf16.msra.mxu0 %v6637
      %6701 = vmatprep.subr.bf16.mxu0 0
      %6702 = vmatpush2.bf16.msra.mxu0 %v6652
      %6703 = vmatprep.subr.bf16.mxu0 0
      %6704 = vmatpush2.bf16.msra.mxu0 %v6651
      %6705 = vmatprep.subr.bf16.mxu0 0
      %6706 = vmatpush2.bf16.msra.mxu0 %v6650
      %6707 = vmatprep.subr.bf16.mxu0 0
      %6708 = vmatpush2.bf16.msra.mxu0 %v6649
      %6709 = vmatprep.subr.bf16.mxu0 0
      %6710 = vmatpush2.bf16.msra.mxu0 %v6648
      %6711 = vmatprep.subr.bf16.mxu0 0
      %6712 = vmatpush2.bf16.msra.mxu0 %v6647
      %6713 = vmatprep.subr.bf16.mxu0 0
      %6714 = vmatpush2.bf16.msra.mxu0 %v6646
      %6715 = vmatprep.subr.bf16.mxu0 0
      %6716 = vmatpush2.bf16.msra.mxu0 %v6645
      %6717 = vmatprep.mubr.bf16.mxu0 %v6446
      %6718 = vmatmul.mubr.bf16.gmra.mxu0 %v6445
      %v6719 = vpop.f32.mrf.mxu0
      %v6720 = vadd.f32 0.0, %v6719
      %v6721 = vpop.f32.mrf.mxu0
      %v6722 = vpop.f32.mrf.mxu0
      %v6723 = vadd.f32 0.0, %v6722
      %v6724 = vpop.f32.mrf.mxu0
      %6725 = vmatprep.mubr.bf16.mxu0 %v6449
      %6726 = vmatmul.mubr.bf16.gmra.mxu0 %v6448
      %v6727 = vpop.f32.mrf.mxu0
      %v6728 = vadd.f32 0.0, %v6727
      %v6729 = vpop.f32.mrf.mxu0
      %v6730 = vpop.f32.mrf.mxu0
      %v6731 = vadd.f32 0.0, %v6730
      %v6732 = vpop.f32.mrf.mxu0
      %6733 = vmatprep.mubr.bf16.mxu0 %v6452
      %6734 = vmatmul.mubr.bf16.gmra.mxu0 %v6451
      %v6735 = vpop.f32.mrf.mxu0
      %v6736 = vadd.f32 0.0, %v6735
      %v6737 = vpop.f32.mrf.mxu0
      %v6738 = vpop.f32.mrf.mxu0
      %v6739 = vadd.f32 0.0, %v6738
      %v6740 = vpop.f32.mrf.mxu0
      %6741 = vmatprep.mubr.bf16.mxu0 %v6455
      %6742 = vmatmul.mubr.bf16.gmra.mxu0 %v6454
      %v6743 = vpop.f32.mrf.mxu0
      %v6744 = vadd.f32 0.0, %v6743
      %v6745 = vpop.f32.mrf.mxu0
      %v6746 = vpop.f32.mrf.mxu0
      %v6747 = vadd.f32 0.0, %v6746
      %v6748 = vpop.f32.mrf.mxu0
      %6749 = vmatprep.mubr.bf16.mxu0 %v6458
      %6750 = vmatmul.mubr.bf16.gmra.mxu0 %v6457
      %v6751 = vpop.f32.mrf.mxu0
      %v6752 = vadd.f32 0.0, %v6751
      %v6753 = vpop.f32.mrf.mxu0
      %v6754 = vpop.f32.mrf.mxu0
      %v6755 = vadd.f32 0.0, %v6754
      %v6756 = vpop.f32.mrf.mxu0
      %6757 = vmatprep.mubr.bf16.mxu0 %v6461
      %6758 = vmatmul.mubr.bf16.gmra.mxu0 %v6460
      %v6759 = vpop.f32.mrf.mxu0
      %v6760 = vadd.f32 0.0, %v6759
      %v6761 = vpop.f32.mrf.mxu0
      %v6762 = vpop.f32.mrf.mxu0
      %v6763 = vadd.f32 0.0, %v6762
      %v6764 = vpop.f32.mrf.mxu0
      %6765 = vmatprep.mubr.bf16.mxu0 %v6464
      %6766 = vmatmul.mubr.bf16.gmra.mxu0 %v6463
      %v6767 = vpop.f32.mrf.mxu0
      %v6768 = vadd.f32 0.0, %v6767
      %v6769 = vpop.f32.mrf.mxu0
      %v6770 = vpop.f32.mrf.mxu0
      %v6771 = vadd.f32 0.0, %v6770
      %v6772 = vpop.f32.mrf.mxu0
      %6773 = vmatprep.mubr.bf16.mxu0 %v6467
      %6774 = vmatmul.mubr.bf16.gmra.mxu0 %v6466
      %v6775 = vpop.f32.mrf.mxu0
      %v6776 = vadd.f32 0.0, %v6775
      %v6777 = vpop.f32.mrf.mxu0
      %v6778 = vpop.f32.mrf.mxu0
      %v6779 = vadd.f32 0.0, %v6778
      %v6780 = vpop.f32.mrf.mxu0
      %6781 = vmatprep.mubr.bf16.mxu0 %v6470
      %6782 = vmatmul.mubr.bf16.gmra.mxu0 %v6469
      %v6783 = vpop.f32.mrf.mxu0
      %v6784 = vadd.f32 0.0, %v6783
      %v6785 = vpop.f32.mrf.mxu0
      %v6786 = vpop.f32.mrf.mxu0
      %v6787 = vadd.f32 0.0, %v6786
      %v6788 = vpop.f32.mrf.mxu0
      %6789 = vmatprep.mubr.bf16.mxu0 %v6473
      %6790 = vmatmul.mubr.bf16.gmra.mxu0 %v6472
      %v6791 = vpop.f32.mrf.mxu0
      %v6792 = vadd.f32 0.0, %v6791
      %v6793 = vpop.f32.mrf.mxu0
      %v6794 = vpop.f32.mrf.mxu0
      %v6795 = vadd.f32 0.0, %v6794
      %v6796 = vpop.f32.mrf.mxu0
      %6797 = vmatprep.mubr.bf16.mxu0 %v6476
      %6798 = vmatmul.mubr.bf16.gmra.mxu0 %v6475
      %v6799 = vpop.f32.mrf.mxu0
      %v6800 = vadd.f32 0.0, %v6799
      %v6801 = vpop.f32.mrf.mxu0
      %v6802 = vpop.f32.mrf.mxu0
      %v6803 = vadd.f32 0.0, %v6802
      %v6804 = vpop.f32.mrf.mxu0
      %6805 = vmatprep.mubr.bf16.mxu0 %v6479
      %6806 = vmatmul.mubr.bf16.gmra.mxu0 %v6478
      %v6807 = vpop.f32.mrf.mxu0
      %v6808 = vadd.f32 0.0, %v6807
      %v6809 = vpop.f32.mrf.mxu0
      %v6810 = vpop.f32.mrf.mxu0
      %v6811 = vadd.f32 0.0, %v6810
      %v6812 = vpop.f32.mrf.mxu0
      %6813 = vmatprep.mubr.bf16.mxu0 %v6482
      %6814 = vmatmul.mubr.bf16.gmra.mxu0 %v6481
      %v6815 = vpop.f32.mrf.mxu0
      %v6816 = vadd.f32 0.0, %v6815
      %v6817 = vpop.f32.mrf.mxu0
      %v6818 = vpop.f32.mrf.mxu0
      %v6819 = vadd.f32 0.0, %v6818
      %v6820 = vpop.f32.mrf.mxu0
      %6821 = vmatprep.mubr.bf16.mxu0 %v6485
      %6822 = vmatmul.mubr.bf16.gmra.mxu0 %v6484
      %v6823 = vpop.f32.mrf.mxu0
      %v6824 = vadd.f32 0.0, %v6823
      %v6825 = vpop.f32.mrf.mxu0
      %v6826 = vpop.f32.mrf.mxu0
      %v6827 = vadd.f32 0.0, %v6826
      %v6828 = vpop.f32.mrf.mxu0
      %6829 = vmatprep.mubr.bf16.mxu0 %v6488
      %6830 = vmatmul.mubr.bf16.gmra.mxu0 %v6487
      %v6831 = vpop.f32.mrf.mxu0
      %v6832 = vadd.f32 0.0, %v6831
      %v6833 = vpop.f32.mrf.mxu0
      %v6834 = vpop.f32.mrf.mxu0
      %v6835 = vadd.f32 0.0, %v6834
      %v6836 = vpop.f32.mrf.mxu0
      %6837 = vmatprep.mubr.bf16.mxu0 %v6491
      %6838 = vmatmul.mubr.bf16.gmra.mxu0 %v6490
      %v6839 = vpop.f32.mrf.mxu0
      %v6840 = vadd.f32 0.0, %v6839
      %v6841 = vpop.f32.mrf.mxu0
      %v6842 = vpop.f32.mrf.mxu0
      %v6843 = vadd.f32 0.0, %v6842
      %v6844 = vpop.f32.mrf.mxu0
      %6845 = vdwg.mxu0
      %6846 = vmatprep.subr.bf16.mxu0 0
      %6847 = vmatpush1.bf16.msra.mxu0 %v6660
      %6848 = vmatprep.subr.bf16.mxu0 0
      %6849 = vmatpush1.bf16.msra.mxu0 %v6659
      %6850 = vmatprep.subr.bf16.mxu0 0
      %6851 = vmatpush1.bf16.msra.mxu0 %v6658
      %6852 = vmatprep.subr.bf16.mxu0 0
      %6853 = vmatpush1.bf16.msra.mxu0 %v6657
      %6854 = vmatprep.subr.bf16.mxu0 0
      %6855 = vmatpush1.bf16.msra.mxu0 %v6656
      %6856 = vmatprep.subr.bf16.mxu0 0
      %6857 = vmatpush1.bf16.msra.mxu0 %v6655
      %6858 = vmatprep.subr.bf16.mxu0 0
      %6859 = vmatpush1.bf16.msra.mxu0 %v6654
      %6860 = vmatprep.subr.bf16.mxu0 0
      %6861 = vmatpush1.bf16.msra.mxu0 %v6653
      %6862 = vmatprep.subr.bf16.mxu0 0
      %6863 = vmatpush2.bf16.msra.mxu0 0
      %6864 = vmatprep.subr.bf16.mxu0 0
      %6865 = vmatpush2.bf16.msra.mxu0 0
      %6866 = vmatprep.subr.bf16.mxu0 0
      %6867 = vmatpush2.bf16.msra.mxu0 0
      %6868 = vmatprep.subr.bf16.mxu0 0
      %6869 = vmatpush2.bf16.msra.mxu0 0
      %6870 = vmatprep.subr.bf16.mxu0 0
      %6871 = vmatpush2.bf16.msra.mxu0 0
      %6872 = vmatprep.subr.bf16.mxu0 0
      %6873 = vmatpush2.bf16.msra.mxu0 0
      %6874 = vmatprep.subr.bf16.mxu0 0
      %6875 = vmatpush2.bf16.msra.mxu0 0
      %6876 = vmatprep.subr.bf16.mxu0 0
      %6877 = vmatpush2.bf16.msra.mxu0 0
      %6878 = vmatprep.mubr.bf16.mxu0 0
      %6879 = vmatmul.mubr.bf16.gmra.mxu0 %v6447
      %v6880 = vpop.f32.mrf.mxu0
      %v6881 = vadd.f32 %v6720, %v6880
      %v6882 = vpop.f32.mrf.mxu0
      %v6883 = vpop.f32.mrf.mxu0
      %v6884 = vadd.f32 %v6723, %v6883
      %v6885 = vpop.f32.mrf.mxu0
      %6886 = vmatprep.mubr.bf16.mxu0 0
      %6887 = vmatmul.mubr.bf16.gmra.mxu0 %v6450
      %v6888 = vpop.f32.mrf.mxu0
      %v6889 = vadd.f32 %v6728, %v6888
      %v6890 = vpop.f32.mrf.mxu0
      %v6891 = vpop.f32.mrf.mxu0
      %v6892 = vadd.f32 %v6731, %v6891
      %v6893 = vpop.f32.mrf.mxu0
      %6894 = vmatprep.mubr.bf16.mxu0 0
      %6895 = vmatmul.mubr.bf16.gmra.mxu0 %v6453
      %v6896 = vpop.f32.mrf.mxu0
      %v6897 = vadd.f32 %v6736, %v6896
      %v6898 = vpop.f32.mrf.mxu0
      %v6899 = vpop.f32.mrf.mxu0
      %v6900 = vadd.f32 %v6739, %v6899
      %v6901 = vpop.f32.mrf.mxu0
      %6902 = vmatprep.mubr.bf16.mxu0 0
      %6903 = vmatmul.mubr.bf16.gmra.mxu0 %v6456
      %v6904 = vpop.f32.mrf.mxu0
      %v6905 = vadd.f32 %v6744, %v6904
      %v6906 = vpop.f32.mrf.mxu0
      %v6907 = vpop.f32.mrf.mxu0
      %v6908 = vadd.f32 %v6747, %v6907
      %v6909 = vpop.f32.mrf.mxu0
      %6910 = vmatprep.mubr.bf16.mxu0 0
      %6911 = vmatmul.mubr.bf16.gmra.mxu0 %v6459
      %v6912 = vpop.f32.mrf.mxu0
      %v6913 = vadd.f32 %v6752, %v6912
      %v6914 = vpop.f32.mrf.mxu0
      %v6915 = vpop.f32.mrf.mxu0
      %v6916 = vadd.f32 %v6755, %v6915
      %v6917 = vpop.f32.mrf.mxu0
      %6918 = vmatprep.mubr.bf16.mxu0 0
      %6919 = vmatmul.mubr.bf16.gmra.mxu0 %v6462
      %v6920 = vpop.f32.mrf.mxu0
      %v6921 = vadd.f32 %v6760, %v6920
      %v6922 = vpop.f32.mrf.mxu0
      %v6923 = vpop.f32.mrf.mxu0
      %v6924 = vadd.f32 %v6763, %v6923
      %v6925 = vpop.f32.mrf.mxu0
      %6926 = vmatprep.mubr.bf16.mxu0 0
      %6927 = vmatmul.mubr.bf16.gmra.mxu0 %v6465
      %v6928 = vpop.f32.mrf.mxu0
      %v6929 = vadd.f32 %v6768, %v6928
      %v6930 = vpop.f32.mrf.mxu0
      %v6931 = vpop.f32.mrf.mxu0
      %v6932 = vadd.f32 %v6771, %v6931
      %v6933 = vpop.f32.mrf.mxu0
      %6934 = vmatprep.mubr.bf16.mxu0 0
      %6935 = vmatmul.mubr.bf16.gmra.mxu0 %v6468
      %v6936 = vpop.f32.mrf.mxu0
      %v6937 = vadd.f32 %v6776, %v6936
      %v6938 = vpop.f32.mrf.mxu0
      %v6939 = vpop.f32.mrf.mxu0
      %v6940 = vadd.f32 %v6779, %v6939
      %v6941 = vpop.f32.mrf.mxu0
      %6942 = vmatprep.mubr.bf16.mxu0 0
      %6943 = vmatmul.mubr.bf16.gmra.mxu0 %v6471
      %v6944 = vpop.f32.mrf.mxu0
      %v6945 = vadd.f32 %v6784, %v6944
      %v6946 = vpop.f32.mrf.mxu0
      %v6947 = vpop.f32.mrf.mxu0
      %v6948 = vadd.f32 %v6787, %v6947
      %v6949 = vpop.f32.mrf.mxu0
      %6950 = vmatprep.mubr.bf16.mxu0 0
      %6951 = vmatmul.mubr.bf16.gmra.mxu0 %v6474
      %v6952 = vpop.f32.mrf.mxu0
      %v6953 = vadd.f32 %v6792, %v6952
      %v6954 = vpop.f32.mrf.mxu0
      %v6955 = vpop.f32.mrf.mxu0
      %v6956 = vadd.f32 %v6795, %v6955
      %v6957 = vpop.f32.mrf.mxu0
      %6958 = vmatprep.mubr.bf16.mxu0 0
      %6959 = vmatmul.mubr.bf16.gmra.mxu0 %v6477
      %v6960 = vpop.f32.mrf.mxu0
      %v6961 = vadd.f32 %v6800, %v6960
      %v6962 = vpop.f32.mrf.mxu0
      %v6963 = vpop.f32.mrf.mxu0
      %v6964 = vadd.f32 %v6803, %v6963
      %v6965 = vpop.f32.mrf.mxu0
      %6966 = vmatprep.mubr.bf16.mxu0 0
      %6967 = vmatmul.mubr.bf16.gmra.mxu0 %v6480
      %v6968 = vpop.f32.mrf.mxu0
      %v6969 = vadd.f32 %v6808, %v6968
      %v6970 = vpop.f32.mrf.mxu0
      %v6971 = vpop.f32.mrf.mxu0
      %v6972 = vadd.f32 %v6811, %v6971
      %v6973 = vpop.f32.mrf.mxu0
      %6974 = vmatprep.mubr.bf16.mxu0 0
      %6975 = vmatmul.mubr.bf16.gmra.mxu0 %v6483
      %v6976 = vpop.f32.mrf.mxu0
      %v6977 = vadd.f32 %v6816, %v6976
      %v6978 = vpop.f32.mrf.mxu0
      %v6979 = vpop.f32.mrf.mxu0
      %v6980 = vadd.f32 %v6819, %v6979
      %v6981 = vpop.f32.mrf.mxu0
      %6982 = vmatprep.mubr.bf16.mxu0 0
      %6983 = vmatmul.mubr.bf16.gmra.mxu0 %v6486
      %v6984 = vpop.f32.mrf.mxu0
      %v6985 = vadd.f32 %v6824, %v6984
      %v6986 = vpop.f32.mrf.mxu0
      %v6987 = vpop.f32.mrf.mxu0
      %v6988 = vadd.f32 %v6827, %v6987
      %v6989 = vpop.f32.mrf.mxu0
      %6990 = vmatprep.mubr.bf16.mxu0 0
      %6991 = vmatmul.mubr.bf16.gmra.mxu0 %v6489
      %v6992 = vpop.f32.mrf.mxu0
      %v6993 = vadd.f32 %v6832, %v6992
      %v6994 = vpop.f32.mrf.mxu0
      %v6995 = vpop.f32.mrf.mxu0
      %v6996 = vadd.f32 %v6835, %v6995
      %v6997 = vpop.f32.mrf.mxu0
      %6998 = vmatprep.mubr.bf16.mxu0 0
      %6999 = vmatmul.mubr.bf16.gmra.mxu0 %v6492
      %v7000 = vpop.f32.mrf.mxu0
      %v7001 = vadd.f32 %v6840, %v7000
      %v7002 = vpop.f32.mrf.mxu0
      %v7003 = vpop.f32.mrf.mxu0
      %v7004 = vadd.f32 %v6843, %v7003
      %v7005 = vpop.f32.mrf.mxu0
      %7006 = vdwg.mxu0
      %v7007 = vadd.f32 %v6046, %v6881
      %v7008 = vadd.f32 %v6049, %v6884
      %v7009 = vadd.f32 %v6054, %v6889
      %v7010 = vadd.f32 %v6057, %v6892
      %v7011 = vadd.f32 %v6062, %v6897
      %v7012 = vadd.f32 %v6065, %v6900
      %v7013 = vadd.f32 %v6070, %v6905
      %v7014 = vadd.f32 %v6073, %v6908
      %v7015 = vadd.f32 %v6078, %v6913
      %v7016 = vadd.f32 %v6081, %v6916
      %v7017 = vadd.f32 %v6086, %v6921
      %v7018 = vadd.f32 %v6089, %v6924
      %v7019 = vadd.f32 %v6094, %v6929
      %v7020 = vadd.f32 %v6097, %v6932
      %v7021 = vadd.f32 %v6102, %v6937
      %v7022 = vadd.f32 %v6105, %v6940
      %v7023 = vadd.f32 %v6110, %v6945
      %v7024 = vadd.f32 %v6113, %v6948
      %v7025 = vadd.f32 %v6118, %v6953
      %v7026 = vadd.f32 %v6121, %v6956
      %v7027 = vadd.f32 %v6126, %v6961
      %v7028 = vadd.f32 %v6129, %v6964
      %v7029 = vadd.f32 %v6134, %v6969
      %v7030 = vadd.f32 %v6137, %v6972
      %v7031 = vadd.f32 %v6142, %v6977
      %v7032 = vadd.f32 %v6145, %v6980
      %v7033 = vadd.f32 %v6150, %v6985
      %v7034 = vadd.f32 %v6153, %v6988
      %v7035 = vadd.f32 %v6158, %v6993
      %v7036 = vadd.f32 %v6161, %v6996
      %v7037 = vadd.f32 %v6166, %v7001
      %v7038 = vadd.f32 %v6169, %v7004
      %v7039 = vld [vmem:[%s4] sm:$0x1]
      %v7041 = vlaneseq
      %v7042 = vshrl.u32 %v7041, 7
      %v7043 = vsub.s32 0, %v7042
      %v7044 = vrot.slane %v7039, %v7043
      %v7046 = vadd.f32 %v7007, %v7044
      %v7047 = vadd.f32 %v7008, %v7044
      %v7048 = vadd.f32 %v7009, %v7044
      %v7049 = vadd.f32 %v7010, %v7044
      %v7050 = vadd.f32 %v7011, %v7044
      %v7051 = vadd.f32 %v7012, %v7044
      %v7052 = vadd.f32 %v7013, %v7044
      %v7053 = vadd.f32 %v7014, %v7044
      %v7054 = vadd.f32 %v7015, %v7044
      %v7055 = vadd.f32 %v7016, %v7044
      %v7056 = vadd.f32 %v7017, %v7044
      %v7057 = vadd.f32 %v7018, %v7044
      %v7058 = vadd.f32 %v7019, %v7044
      %v7059 = vadd.f32 %v7020, %v7044
      %v7060 = vadd.f32 %v7021, %v7044
      %v7061 = vadd.f32 %v7022, %v7044
      %v7062 = vadd.f32 %v7023, %v7044
      %v7063 = vadd.f32 %v7024, %v7044
      %v7064 = vadd.f32 %v7025, %v7044
      %v7065 = vadd.f32 %v7026, %v7044
      %v7066 = vadd.f32 %v7027, %v7044
      %v7067 = vadd.f32 %v7028, %v7044
      %v7068 = vadd.f32 %v7029, %v7044
      %v7069 = vadd.f32 %v7030, %v7044
      %v7070 = vadd.f32 %v7031, %v7044
      %v7071 = vadd.f32 %v7032, %v7044
      %v7072 = vadd.f32 %v7033, %v7044
      %v7073 = vadd.f32 %v7034, %v7044
      %v7074 = vadd.f32 %v7035, %v7044
      %v7075 = vadd.f32 %v7036, %v7044
      %v7076 = vadd.f32 %v7037, %v7044
      %v7077 = vadd.f32 %v7038, %v7044
      %v7078 = vadd.f32 %v7046, %v349
      %v7079 = vadd.f32 %v7047, %v350
      %v7080 = vadd.f32 %v7048, %v351
      %v7081 = vadd.f32 %v7049, %v352
      %v7082 = vadd.f32 %v7050, %v353
      %v7083 = vadd.f32 %v7051, %v354
      %v7084 = vadd.f32 %v7052, %v355
      %v7085 = vadd.f32 %v7053, %v356
      %v7086 = vadd.f32 %v7054, %v357
      %v7087 = vadd.f32 %v7055, %v358
      %v7088 = vadd.f32 %v7056, %v359
      %v7089 = vadd.f32 %v7057, %v360
      %v7090 = vadd.f32 %v7058, %v361
      %v7091 = vadd.f32 %v7059, %v362
      %v7092 = vadd.f32 %v7060, %v363
      %v7093 = vadd.f32 %v7061, %v364
      %v7094 = vadd.f32 %v7062, %v365
      %v7095 = vadd.f32 %v7063, %v366
      %v7096 = vadd.f32 %v7064, %v367
      %v7097 = vadd.f32 %v7065, %v368
      %v7098 = vadd.f32 %v7066, %v369
      %v7099 = vadd.f32 %v7067, %v370
      %v7100 = vadd.f32 %v7068, %v371
      %v7101 = vadd.f32 %v7069, %v372
      %v7102 = vadd.f32 %v7070, %v373
      %v7103 = vadd.f32 %v7071, %v374
      %v7104 = vadd.f32 %v7072, %v375
      %v7105 = vadd.f32 %v7073, %v376
      %v7106 = vadd.f32 %v7074, %v377
      %v7107 = vadd.f32 %v7075, %v378
      %v7108 = vadd.f32 %v7076, %v379
      %v7109 = vadd.f32 %v7077, %v380
      %v7110 = vmax.f32 %v7078, 0.0
      %v7111 = vmax.f32 %v7079, 0.0
      %v7112 = vmax.f32 %v7080, 0.0
      %v7113 = vmax.f32 %v7081, 0.0
      %v7114 = vmax.f32 %v7082, 0.0
      %v7115 = vmax.f32 %v7083, 0.0
      %v7116 = vmax.f32 %v7084, 0.0
      %v7117 = vmax.f32 %v7085, 0.0
      %v7118 = vmax.f32 %v7086, 0.0
      %v7119 = vmax.f32 %v7087, 0.0
      %v7120 = vmax.f32 %v7088, 0.0
      %v7121 = vmax.f32 %v7089, 0.0
      %v7122 = vmax.f32 %v7090, 0.0
      %v7123 = vmax.f32 %v7091, 0.0
      %v7124 = vmax.f32 %v7092, 0.0
      %v7125 = vmax.f32 %v7093, 0.0
      %v7126 = vmax.f32 %v7094, 0.0
      %v7127 = vmax.f32 %v7095, 0.0
      %v7128 = vmax.f32 %v7096, 0.0
      %v7129 = vmax.f32 %v7097, 0.0
      %v7130 = vmax.f32 %v7098, 0.0
      %v7131 = vmax.f32 %v7099, 0.0
      %v7132 = vmax.f32 %v7100, 0.0
      %v7133 = vmax.f32 %v7101, 0.0
      %v7134 = vmax.f32 %v7102, 0.0
      %v7135 = vmax.f32 %v7103, 0.0
      %v7136 = vmax.f32 %v7104, 0.0
      %v7137 = vmax.f32 %v7105, 0.0
      %v7138 = vmax.f32 %v7106, 0.0
      %v7139 = vmax.f32 %v7107, 0.0
      %v7140 = vmax.f32 %v7108, 0.0
      %v7141 = vmax.f32 %v7109, 0.0
      %7142 = vst [vmem:[%s224] sm:$0xff] %v7110
      %7143 = vst [vmem:[%s224 + $0x8] sm:$0xff] %v7111
      %7144 = vst [vmem:[%s224 + $0x10] sm:$0xff] %v7112
      %7145 = vst [vmem:[%s224 + $0x18] sm:$0xff] %v7113
      %7146 = vst [vmem:[%s224 + $0x20] sm:$0xff] %v7114
      %7147 = vst [vmem:[%s224 + $0x28] sm:$0xff] %v7115
      %7148 = vst [vmem:[%s224 + $0x30] sm:$0xff] %v7116
      %7149 = vst [vmem:[%s224 + $0x38] sm:$0xff] %v7117
      %7150 = vst [vmem:[%s224 + $0x40] sm:$0xff] %v7118
      %7151 = vst [vmem:[%s224 + $0x48] sm:$0xff] %v7119
      %7152 = vst [vmem:[%s224 + $0x50] sm:$0xff] %v7120
      %7153 = vst [vmem:[%s224 + $0x58] sm:$0xff] %v7121
      %7154 = vst [vmem:[%s224 + $0x60] sm:$0xff] %v7122
      %7155 = vst [vmem:[%s224 + $0x68] sm:$0xff] %v7123
      %7156 = vst [vmem:[%s224 + $0x70] sm:$0xff] %v7124
      %7157 = vst [vmem:[%s224 + $0x78] sm:$0xff] %v7125
      %7158 = vst [vmem:[%s224 + $0x80] sm:$0xff] %v7126
      %7159 = vst [vmem:[%s224 + $0x88] sm:$0xff] %v7127
      %7160 = vst [vmem:[%s224 + $0x90] sm:$0xff] %v7128
      %7161 = vst [vmem:[%s224 + $0x98] sm:$0xff] %v7129
      %7162 = vst [vmem:[%s224 + $0xa0] sm:$0xff] %v7130
      %7163 = vst [vmem:[%s224 + $0xa8] sm:$0xff] %v7131
      %7164 = vst [vmem:[%s224 + $0xb0] sm:$0xff] %v7132
      %7165 = vst [vmem:[%s224 + $0xb8] sm:$0xff] %v7133
      %7166 = vst [vmem:[%s224 + $0xc0] sm:$0xff] %v7134
      %7167 = vst [vmem:[%s224 + $0xc8] sm:$0xff] %v7135
      %7168 = vst [vmem:[%s224 + $0xd0] sm:$0xff] %v7136
      %7169 = vst [vmem:[%s224 + $0xd8] sm:$0xff] %v7137
      %7170 = vst [vmem:[%s224 + $0xe0] sm:$0xff] %v7138
      %7171 = vst [vmem:[%s224 + $0xe8] sm:$0xff] %v7139
      %7172 = vst [vmem:[%s224 + $0xf0] sm:$0xff] %v7140
      %7173 = vst [vmem:[%s224 + $0xf8] sm:$0xff] %v7141
      %p7174 = scmp.lt.s32.totalorder %s16, 1
      %s7175 = scalar_select %p7174, %s16, 1
      %s7176 = smul.addr %s7175, 32
      %s7177 = smul.addr %s7176, 8
      %s7178 = scalar_lea.vmem %s5, %s7177
      // Predicated region
      $region41: #{basic_block_forward.1} parent=39 // pred_check
        %p7179 = pneg %p144
      $region42: #{basic_block_forward.1} parent=39 // pred_check_branch
        %7181 = sbr.rel (%p7179) target = $region44
      $region43: #{basic_block_forward.1} parent=39 // pred_region
        _
      $region44: #{basic_block_forward.1} parent=39 // pred_fallthru
        _
    $region40: #{basic_block_forward.1} parent=5 // pred_fallthru
      _
    %p7182 = scmp.le.s32.totalorder 2, %s11
    // Predicated region
    $region45: #{basic_block_forward.1} parent=5 // pred_check
      %p7183 = pneg %p7182
    $region46: #{basic_block_forward.1} parent=5 // pred_check_branch
      %7185 = sbr.rel (%p7183) target = $region48
    $region47: #{basic_block_forward.1} parent=5 // pred_region
      %s7186 = ssub.s32 %s11, 2
      // Predicated region
      $region49: #{basic_block_forward.1} parent=47 // pred_check
        %p7187 = pneg %p150
      $region50: #{basic_block_forward.1} parent=47 // pred_check_branch
        %7189 = sbr.rel (%p7187) target = $region52
      $region51: #{basic_block_forward.1} parent=47 // pred_region
        %p7190 = scmp.lt.s32.totalorder %s17, 1
        %s7191 = scalar_select %p7190, %s17, 1
        %s7192 = smul.addr %s7191, 32
        %s7193 = smul.addr %s7192, 8
        %s7194 = scalar_lea.vmem %s5, %s7193
      $region52: #{basic_block_forward.1} parent=47 // pred_fallthru
        _
    $region48: #{basic_block_forward.1} parent=5 // pred_fallthru
      _
  $region6: #{basic_block_forward.1} parent=0 // loop_footer
    %s15 = sadd.s32 1, %s11
  $region7: #{basic_block_forward.1} parent=0 // loop_footer_branch
    %10 = sbr.rel target = $region3
  $region8: #{basic_block_forward.1} parent=0 // loop_exit
    _

</llo_original>
